<compile_context>
chip_gen: v7x
topology: tpu7x:2x2x1
jax: 0.10.0
libtpu: 0.0.40
codegen_flags: <defaults>
</compile_context>

<pallas_src>
import functools

import jax
import jax.numpy as jnp
from jax.experimental import pallas as pl
from jax.experimental.pallas import tpu as pltpu


def _round_up(n, m):
    return ((n + m - 1) // m) * m


def _tensorcores_per_device():
    """2 when one JAX device spans two TensorCores (v7x); 1 on v5e/v6e."""
    try:
        kind = jax.devices()[0].device_kind.lower().replace(" ", "")
    except Exception:
        return 1
    if "v7" in kind or "tpu7" in kind:
        return 2
    return 1


def _supports_single_buffer():
    """Probe whether this JAX version accepts pipeline_mode=pl.Buffered(1)."""
    try:
        pl.BlockSpec((8, 128), lambda i: (0, 0), pipeline_mode=pl.Buffered(1))
        return True
    except Exception:
        return False


def _mlp_kernel(x_ref,
                w1_ref, b1_ref,
                w2_ref, b2_ref,
                w3_ref, b3_ref,
                w4_ref, b4_ref,
                wc_ref, bc_ref,
                o_ref):
    # All five matmuls + ReLUs fused into a single VMEM-resident kernel.
    # Dot inputs are bf16 (MXU-native); accumulation + bias + ReLU in f32.
    # Bias-add / ReLU / casts ride the VPU slots under MXU slack (free filler).
    h = jnp.dot(x_ref[...], w1_ref[...],
                preferred_element_type=jnp.float32) + b1_ref[...]
    h = jnp.maximum(h, 0.0)

    h = jnp.dot(h.astype(jnp.bfloat16), w2_ref[...],
                preferred_element_type=jnp.float32) + b2_ref[...]
    h = jnp.maximum(h, 0.0)

    h = jnp.dot(h.astype(jnp.bfloat16), w3_ref[...],
                preferred_element_type=jnp.float32) + b3_ref[...]
    h = jnp.maximum(h, 0.0)
    # dropout3: identity (eval mode)

    h = jnp.dot(h.astype(jnp.bfloat16), w4_ref[...],
                preferred_element_type=jnp.float32) + b4_ref[...]
    h = jnp.maximum(h, 0.0)
    # dropout4: identity (eval mode)

    out = jnp.dot(h.astype(jnp.bfloat16), wc_ref[...],
                  preferred_element_type=jnp.float32) + bc_ref[...]
    o_ref[...] = out.astype(o_ref.dtype)


@functools.partial(jax.jit, static_argnames=("block_b",))
def classifier_forward(x, params, *, block_b=512):
    """x: [B, n_features] float32/bf16. params: dict of bf16 weights / f32 biases."""
    assert block_b % 8 == 0 and block_b >= 8, "block_b must be a multiple of 8"
    B, nf = x.shape
    n_labels = params["wc"].shape[1]
    n_out = _round_up(n_labels, 128)          # lane-dense output width

    # --- batch tiling: fewest balanced tiles ---------------------------------
    n_cores = _tensorcores_per_device()
    B8 = _round_up(max(B, 1), 8)
    n_tiles = pl.cdiv(B8, block_b)
    if n_cores > 1 and B8 >= 16 * n_cores:
        # v7x: split into an even number of equal tiles so both TCs get work.
        n_tiles = _round_up(n_tiles, n_cores)
    bb = _round_up(pl.cdiv(B8, n_tiles), 8)   # balanced tile, minimal padding
    B_pad = bb * n_tiles

    # Stream x as bf16: halves the only per-grid-step DMA and its double buffer.
    x_bf = x.astype(jnp.bfloat16)
    x_p = x_bf if B_pad == B else jnp.pad(x_bf, ((0, B_pad - B), (0, 0)))

    # Zero-pad the classifier head to a full 128-lane output tile.
    wc, bc = params["wc"], params["bc"]
    if n_out != n_labels:
        wc = jnp.pad(wc, ((0, 0), (0, n_out - n_labels)))
        bc = jnp.pad(bc, ((0, 0), (0, n_out - n_labels)))

    operands = (
        x_p,
        params["w1"], params["b1"],
        params["w2"], params["b2"],
        params["w3"], params["b3"],
        params["w4"], params["b4"],
        wc, bc,
    )

    single_buffer = _supports_single_buffer()

    def full_spec(a):
        # Whole weight/bias resident in VMEM; block index constant over grid,
        # so a single buffer is enough (no re-DMA between grid steps).
        if single_buffer:
            return pl.BlockSpec(a.shape, lambda i: (0, 0),
                                pipeline_mode=pl.Buffered(1))
        return pl.BlockSpec(a.shape, lambda i: (0, 0))

    in_specs = [pl.BlockSpec((bb, nf), lambda i: (i, 0))] + \
               [full_spec(a) for a in operands[1:]]
    out_spec = pl.BlockSpec((bb, n_out), lambda i: (i, 0))

    if n_tiles == 1:
        sem = ("arbitrary",)
    elif n_cores > 1 and n_tiles % n_cores == 0:
        sem = (pltpu.CORE_PARALLEL,)          # shard batch tiles across v7x TCs
    else:
        sem = ("parallel",)

    # --- VMEM budget (single-buffered weights, double-buffered x/out tiles) --
    weight_bytes = sum(int(a.size) * a.dtype.itemsize for a in operands[1:])
    wfactor = 1 if single_buffer else 2
    io_bytes = (wfactor * weight_bytes
                + 2 * bb * nf * x_p.dtype.itemsize
                + 2 * bb * n_out * 4)
    act_bytes = bb * (1024 + 512 + 256 + 128 + n_out) * 4 \
        + bb * (1024 + 512 + 256 + 128) * 2
    vmem_limit = max(16 << 20, io_bytes + act_bytes + (8 << 20))
    try:
        vmem_cap = int(pltpu.get_tpu_info().vmem_capacity_bytes)
    except Exception:
        vmem_cap = 128 << 20
    vmem_limit = min(int(vmem_limit), vmem_cap)
    # TODO(synk): very large n_features on v7x (64 MiB VMEM) should K-tile
    # layer 1 over an extra innermost "arbitrary" grid axis with an f32
    # [bb,1024] accumulator scratch; not needed at these shapes.

    flops = 2 * B_pad * (nf * 1024 + 1024 * 512 + 512 * 256 + 256 * 128
                         + 128 * n_out)
    bytes_accessed = int(x_p.size) * x_p.dtype.itemsize + weight_bytes \
        + B_pad * n_out * 4
    cost = pl.CostEstimate(flops=int(flops), transcendentals=0,
                           bytes_accessed=int(bytes_accessed))

    out = pl.pallas_call(
        _mlp_kernel,
        out_shape=jax.ShapeDtypeStruct((B_pad, n_out), jnp.float32),
        grid_spec=pltpu.PrefetchScalarGridSpec(
            num_scalar_prefetch=0,
            grid=(n_tiles,),
            in_specs=in_specs,
            out_specs=out_spec,
        ),
        compiler_params=pltpu.CompilerParams(
            dimension_semantics=sem,
            vmem_limit_bytes=vmem_limit,
        ),
        cost_estimate=cost,
    )(*operands)

    # Slice away batch padding and the zero-padded label columns.
    return out[:B, :n_labels]


def init_params(key, n_features, n_labels):
    """Deterministic synthetic init (PyTorch-Linear-style uniform fan-in).

    Weights are stored bf16 (MXU-native); biases stay f32 as [1, out] tiles.
    """
    dims = [(n_features, 1024), (1024, 512), (512, 256), (256, 128),
            (128, n_labels)]
    names = ["1", "2", "3", "4", "c"]
    params = {}
    for (din, dout), name in zip(dims, names):
        key, kw, kb = jax.random.split(key, 3)
        bound = 1.0 / (din ** 0.5)
        w = jax.random.uniform(kw, (din, dout), jnp.float32, -bound, bound)
        b = jax.random.uniform(kb, (1, dout), jnp.float32, -bound, bound)
        params[f"w{name}"] = w.astype(jnp.bfloat16)
        params[f"b{name}"] = b
    return params


def reference_forward(x, params):
    """Plain-JAX reference (same bf16-weight / f32-accumulate numerics)."""
    def dense(h, w, b):
        return jnp.dot(h.astype(jnp.bfloat16), w,
                       preferred_element_type=jnp.float32) + b

    h = jnp.maximum(dense(x, params["w1"], params["b1"]), 0.0)
    h = jnp.maximum(dense(h, params["w2"], params["b2"]), 0.0)
    h = jnp.maximum(dense(h, params["w3"], params["b3"]), 0.0)
    h = jnp.maximum(dense(h, params["w4"], params["b4"]), 0.0)
    return dense(h, params["wc"], params["bc"])


if __name__ == "__main__":
    n_features = 256
    n_labels = 16

    key = jax.random.PRNGKey(0)
    key, kp = jax.random.split(key)
    params = init_params(kp, n_features, n_labels)

    # Small smoke test: single 8-row tile, exercises output-lane padding.
    key, kx = jax.random.split(key)
    x_small = jax.random.normal(kx, (8, n_features), jnp.float32)
    out_small = jax.block_until_ready(classifier_forward(x_small, params))
    ref_small = reference_forward(x_small, params)
    assert out_small.shape == (8, n_labels)
    assert jnp.allclose(out_small, ref_small, atol=5e-3, rtol=5e-3), \
        "small-batch mismatch vs reference"

    # Larger batch: one 512-row tile on single-TC chips, 2x256 on v7x.
    key, kx2 = jax.random.split(key)
    x_big = jax.random.normal(kx2, (512, n_features), jnp.float32)
    out_big = jax.block_until_ready(classifier_forward(x_big, params))
    ref_big = reference_forward(x_big, params)
    assert out_big.shape == (512, n_labels)
    assert jnp.allclose(out_big, ref_big, atol=5e-3, rtol=5e-3), \
        "large-batch mismatch vs reference"

    # Awkward batch: balanced tiling (bb=264), minimal zero-row padding.
    key, kx3 = jax.random.split(key)
    x_odd = jax.random.normal(kx3, (260, n_features), jnp.float32)
    out_odd = jax.block_until_ready(classifier_forward(x_odd, params))
    ref_odd = reference_forward(x_odd, params)
    assert out_odd.shape == (260, n_labels)
    assert jnp.allclose(out_odd, ref_odd, atol=5e-3, rtol=5e-3), \
        "odd-batch mismatch vs reference"

    print("KERNEL_OK")
</pallas_src>

<mosaic_0001>
module attributes {stable_mosaic.version = 11 : i64} {
  func.func @_mlp_kernel(%arg0: i32, %arg1: memref<8x256xbf16, #tpu.memory_space<vmem>>, %arg2: memref<256x1024xbf16, #tpu.memory_space<vmem>>, %arg3: memref<1x1024xf32, #tpu.memory_space<vmem>>, %arg4: memref<1024x512xbf16, #tpu.memory_space<vmem>>, %arg5: memref<1x512xf32, #tpu.memory_space<vmem>>, %arg6: memref<512x256xbf16, #tpu.memory_space<vmem>>, %arg7: memref<1x256xf32, #tpu.memory_space<vmem>>, %arg8: memref<256x128xbf16, #tpu.memory_space<vmem>>, %arg9: memref<1x128xf32, #tpu.memory_space<vmem>>, %arg10: memref<128x128xbf16, #tpu.memory_space<vmem>>, %arg11: memref<1x128xf32, #tpu.memory_space<vmem>>, %arg12: memref<8x128xf32, #tpu.memory_space<vmem>>) attributes {dimension_semantics = [#tpu.dimension_semantics<arbitrary>], iteration_bounds = array<i64: 1>, scalar_prefetch = 0 : i64, scratch_operands = 0 : i64, tpu.core_type = #tpu.core_type<tc>, window_params = [{transform_indices = @transform_0, window_bounds = array<i64: 8, 256>}, {pipeline_mode = #tpu.pipeline_mode<synchronous>, transform_indices = @transform_1, window_bounds = array<i64: 256, 1024>}, {pipeline_mode = #tpu.pipeline_mode<synchronous>, transform_indices = @transform_2, window_bounds = array<i64: 1, 1024>}, {pipeline_mode = #tpu.pipeline_mode<synchronous>, transform_indices = @transform_3, window_bounds = array<i64: 1024, 512>}, {pipeline_mode = #tpu.pipeline_mode<synchronous>, transform_indices = @transform_4, window_bounds = array<i64: 1, 512>}, {pipeline_mode = #tpu.pipeline_mode<synchronous>, transform_indices = @transform_5, window_bounds = array<i64: 512, 256>}, {pipeline_mode = #tpu.pipeline_mode<synchronous>, transform_indices = @transform_6, window_bounds = array<i64: 1, 256>}, {pipeline_mode = #tpu.pipeline_mode<synchronous>, transform_indices = @transform_7, window_bounds = array<i64: 256, 128>}, {pipeline_mode = #tpu.pipeline_mode<synchronous>, transform_indices = @transform_8, window_bounds = array<i64: 1, 128>}, {pipeline_mode = #tpu.pipeline_mode<synchronous>, transform_indices = @transform_9, window_bounds = array<i64: 128, 128>}, {pipeline_mode = #tpu.pipeline_mode<synchronous>, transform_indices = @transform_10, window_bounds = array<i64: 1, 128>}, {transform_indices = @transform_11, window_bounds = array<i64: 8, 128>}]} {
    %c0 = arith.constant 0 : index
    %c0_0 = arith.constant 0 : index
    %0 = vector.load %arg1[%c0, %c0_0] : memref<8x256xbf16, #tpu.memory_space<vmem>>, vector<8x256xbf16>
    %c0_1 = arith.constant 0 : index
    %c0_2 = arith.constant 0 : index
    %1 = vector.load %arg2[%c0_1, %c0_2] : memref<256x1024xbf16, #tpu.memory_space<vmem>>, vector<256x1024xbf16>
    %cst = arith.constant dense<0.000000e+00> : vector<8x1024xf32>
    %2 = tpu.matmul %0, %1, %cst {dimension_numbers = #tpu.dot_dimension_numbers<[1], [0], [0], [1], [0, 0, 1, 1], [], []>} : vector<8x256xbf16>, vector<256x1024xbf16>, vector<8x1024xf32> -> vector<8x1024xf32>
    %c0_3 = arith.constant 0 : index
    %c0_4 = arith.constant 0 : index
    %3 = vector.load %arg3[%c0_3, %c0_4] : memref<1x1024xf32, #tpu.memory_space<vmem>>, vector<1x1024xf32>
    %4 = vector.broadcast %3 : vector<1x1024xf32> to vector<8x1024xf32>
    %5 = arith.addf %2, %4 : vector<8x1024xf32>
    %cst_5 = arith.constant 0.000000e+00 : f32
    %6 = vector.broadcast %cst_5 : f32 to vector<8x1024xf32>
    %7 = arith.maximumf %5, %6 : vector<8x1024xf32>
    %8 = arith.truncf %7 : vector<8x1024xf32> to vector<8x1024xbf16>
    %c0_6 = arith.constant 0 : index
    %c0_7 = arith.constant 0 : index
    %9 = vector.load %arg4[%c0_6, %c0_7] : memref<1024x512xbf16, #tpu.memory_space<vmem>>, vector<1024x512xbf16>
    %cst_8 = arith.constant dense<0.000000e+00> : vector<8x512xf32>
    %10 = tpu.matmul %8, %9, %cst_8 {dimension_numbers = #tpu.dot_dimension_numbers<[1], [0], [0], [1], [0, 0, 1, 1], [], []>} : vector<8x1024xbf16>, vector<1024x512xbf16>, vector<8x512xf32> -> vector<8x512xf32>
    %c0_9 = arith.constant 0 : index
    %c0_10 = arith.constant 0 : index
    %11 = vector.load %arg5[%c0_9, %c0_10] : memref<1x512xf32, #tpu.memory_space<vmem>>, vector<1x512xf32>
    %12 = vector.broadcast %11 : vector<1x512xf32> to vector<8x512xf32>
    %13 = arith.addf %10, %12 : vector<8x512xf32>
    %cst_11 = arith.constant 0.000000e+00 : f32
    %14 = vector.broadcast %cst_11 : f32 to vector<8x512xf32>
    %15 = arith.maximumf %13, %14 : vector<8x512xf32>
    %16 = arith.truncf %15 : vector<8x512xf32> to vector<8x512xbf16>
    %c0_12 = arith.constant 0 : index
    %c0_13 = arith.constant 0 : index
    %17 = vector.load %arg6[%c0_12, %c0_13] : memref<512x256xbf16, #tpu.memory_space<vmem>>, vector<512x256xbf16>
    %cst_14 = arith.constant dense<0.000000e+00> : vector<8x256xf32>
    %18 = tpu.matmul %16, %17, %cst_14 {dimension_numbers = #tpu.dot_dimension_numbers<[1], [0], [0], [1], [0, 0, 1, 1], [], []>} : vector<8x512xbf16>, vector<512x256xbf16>, vector<8x256xf32> -> vector<8x256xf32>
    %c0_15 = arith.constant 0 : index
    %c0_16 = arith.constant 0 : index
    %19 = vector.load %arg7[%c0_15, %c0_16] : memref<1x256xf32, #tpu.memory_space<vmem>>, vector<1x256xf32>
    %20 = vector.broadcast %19 : vector<1x256xf32> to vector<8x256xf32>
    %21 = arith.addf %18, %20 : vector<8x256xf32>
    %cst_17 = arith.constant 0.000000e+00 : f32
    %22 = vector.broadcast %cst_17 : f32 to vector<8x256xf32>
    %23 = arith.maximumf %21, %22 : vector<8x256xf32>
    %24 = arith.truncf %23 : vector<8x256xf32> to vector<8x256xbf16>
    %c0_18 = arith.constant 0 : index
    %c0_19 = arith.constant 0 : index
    %25 = vector.load %arg8[%c0_18, %c0_19] : memref<256x128xbf16, #tpu.memory_space<vmem>>, vector<256x128xbf16>
    %cst_20 = arith.constant dense<0.000000e+00> : vector<8x128xf32>
    %26 = tpu.matmul %24, %25, %cst_20 {dimension_numbers = #tpu.dot_dimension_numbers<[1], [0], [0], [1], [0, 0, 1, 1], [], []>} : vector<8x256xbf16>, vector<256x128xbf16>, vector<8x128xf32> -> vector<8x128xf32>
    %c0_21 = arith.constant 0 : index
    %c0_22 = arith.constant 0 : index
    %27 = vector.load %arg9[%c0_21, %c0_22] : memref<1x128xf32, #tpu.memory_space<vmem>>, vector<1x128xf32>
    %28 = vector.broadcast %27 : vector<1x128xf32> to vector<8x128xf32>
    %29 = arith.addf %26, %28 : vector<8x128xf32>
    %cst_23 = arith.constant 0.000000e+00 : f32
    %30 = vector.broadcast %cst_23 : f32 to vector<8x128xf32>
    %31 = arith.maximumf %29, %30 : vector<8x128xf32>
    %32 = arith.truncf %31 : vector<8x128xf32> to vector<8x128xbf16>
    %c0_24 = arith.constant 0 : index
    %c0_25 = arith.constant 0 : index
    %33 = vector.load %arg10[%c0_24, %c0_25] : memref<128x128xbf16, #tpu.memory_space<vmem>>, vector<128x128xbf16>
    %cst_26 = arith.constant dense<0.000000e+00> : vector<8x128xf32>
    %34 = tpu.matmul %32, %33, %cst_26 {dimension_numbers = #tpu.dot_dimension_numbers<[1], [0], [0], [1], [0, 0, 1, 1], [], []>} : vector<8x128xbf16>, vector<128x128xbf16>, vector<8x128xf32> -> vector<8x128xf32>
    %c0_27 = arith.constant 0 : index
    %c0_28 = arith.constant 0 : index
    %35 = vector.load %arg11[%c0_27, %c0_28] : memref<1x128xf32, #tpu.memory_space<vmem>>, vector<1x128xf32>
    %36 = vector.broadcast %35 : vector<1x128xf32> to vector<8x128xf32>
    %37 = arith.addf %34, %36 : vector<8x128xf32>
    %c0_29 = arith.constant 0 : index
    %c0_30 = arith.constant 0 : index
    %38 = vector.load %arg12[%c0_29, %c0_30] : memref<8x128xf32, #tpu.memory_space<vmem>>, vector<8x128xf32>
    tpu.vector_store %arg12[%c0_29, %c0_30], %37 {strides = array<i32>} : memref<8x128xf32, #tpu.memory_space<vmem>>, vector<8x128xf32>,
    return
  }
  func.func @transform_0(%arg0: i32) -> (i32, i32) {
    %c0_i32 = arith.constant 0 : i32
    %c0_i32_0 = arith.constant 0 : i32
    return %arg0, %c0_i32 : i32, i32
  }
  func.func @transform_1(%arg0: i32) -> (i32, i32) {
    %c0_i32 = arith.constant 0 : i32
    %c0_i32_0 = arith.constant 0 : i32
    %c0_i32_1 = arith.constant 0 : i32
    return %c0_i32, %c0_i32_0 : i32, i32
  }
  func.func @transform_2(%arg0: i32) -> (i32, i32) {
    %c0_i32 = arith.constant 0 : i32
    %c0_i32_0 = arith.constant 0 : i32
    %c0_i32_1 = arith.constant 0 : i32
    return %c0_i32, %c0_i32_0 : i32, i32
  }
  func.func @transform_3(%arg0: i32) -> (i32, i32) {
    %c0_i32 = arith.constant 0 : i32
    %c0_i32_0 = arith.constant 0 : i32
    %c0_i32_1 = arith.constant 0 : i32
    return %c0_i32, %c0_i32_0 : i32, i32
  }
  func.func @transform_4(%arg0: i32) -> (i32, i32) {
    %c0_i32 = arith.constant 0 : i32
    %c0_i32_0 = arith.constant 0 : i32
    %c0_i32_1 = arith.constant 0 : i32
    return %c0_i32, %c0_i32_0 : i32, i32
  }
  func.func @transform_5(%arg0: i32) -> (i32, i32) {
    %c0_i32 = arith.constant 0 : i32
    %c0_i32_0 = arith.constant 0 : i32
    %c0_i32_1 = arith.constant 0 : i32
    return %c0_i32, %c0_i32_0 : i32, i32
  }
  func.func @transform_6(%arg0: i32) -> (i32, i32) {
    %c0_i32 = arith.constant 0 : i32
    %c0_i32_0 = arith.constant 0 : i32
    %c0_i32_1 = arith.constant 0 : i32
    return %c0_i32, %c0_i32_0 : i32, i32
  }
  func.func @transform_7(%arg0: i32) -> (i32, i32) {
    %c0_i32 = arith.constant 0 : i32
    %c0_i32_0 = arith.constant 0 : i32
    %c0_i32_1 = arith.constant 0 : i32
    return %c0_i32, %c0_i32_0 : i32, i32
  }
  func.func @transform_8(%arg0: i32) -> (i32, i32) {
    %c0_i32 = arith.constant 0 : i32
    %c0_i32_0 = arith.constant 0 : i32
    %c0_i32_1 = arith.constant 0 : i32
    return %c0_i32, %c0_i32_0 : i32, i32
  }
  func.func @transform_9(%arg0: i32) -> (i32, i32) {
    %c0_i32 = arith.constant 0 : i32
    %c0_i32_0 = arith.constant 0 : i32
    %c0_i32_1 = arith.constant 0 : i32
    return %c0_i32, %c0_i32_0 : i32, i32
  }
  func.func @transform_10(%arg0: i32) -> (i32, i32) {
    %c0_i32 = arith.constant 0 : i32
    %c0_i32_0 = arith.constant 0 : i32
    %c0_i32_1 = arith.constant 0 : i32
    return %c0_i32, %c0_i32_0 : i32, i32
  }
  func.func @transform_11(%arg0: i32) -> (i32, i32) {
    %c0_i32 = arith.constant 0 : i32
    %c0_i32_0 = arith.constant 0 : i32
    return %arg0, %c0_i32 : i32, i32
  }
}

</mosaic_0001>

<llo_original>
// kernel: classifier_forward.1
$region0: #{classifier_forward.1}
  #allocation0 [shape = 'u32[]', space=smem, size = 0x4, offset = 0x4, fixed_abs, tag = 'smem constant byte address 0x4 - core index']
  #allocation1 [shape = 'u32[144,128]{1,0:T(1,128)}', space=vmem, size = 0x12000, scoped, tag = 'internal scratch']
  %s0 = inlined_call_operand.vmem [shape: bf16[8,256], index: 0, kind: input, shape index: {}]
  %s1 = inlined_call_operand.hbm [shape: bf16[256,1024], index: 1, kind: input, shape index: {}]
  %s2 = inlined_call_operand.vmem [shape: f32[1,1024], index: 2, kind: input, shape index: {}]
  %s3 = inlined_call_operand.hbm [shape: bf16[1024,512], index: 3, kind: input, shape index: {}]
  %s4 = inlined_call_operand.vmem [shape: f32[1,512], index: 4, kind: input, shape index: {}]
  %s5 = inlined_call_operand.hbm [shape: bf16[512,256], index: 5, kind: input, shape index: {}]
  %s6 = inlined_call_operand.vmem [shape: f32[1,256], index: 6, kind: input, shape index: {}]
  %s7 = inlined_call_operand.vmem [shape: bf16[256,128], index: 7, kind: input, shape index: {}]
  %s8 = inlined_call_operand.vmem [shape: f32[1,128], index: 8, kind: input, shape index: {}]
  %s9 = inlined_call_operand.vmem [shape: bf16[128,128], index: 9, kind: input, shape index: {}]
  %s10 = inlined_call_operand.vmem [shape: f32[1,128], index: 10, kind: input, shape index: {}]
  %s11 = inlined_call_operand.hbm [shape: f32[8,128], index: 11, kind: output, shape index: {}]
  %s12 = sld [smem:[#allocation0]]
  $region66: #{classifier_forward.1} parent=0
    _
  %s14 = ssub.s32 1, %s12
  %s15 = scalar_select 0, %s14, %s12
  $region1: #{classifier_forward.1} parent=0
    #allocation2 [shape = 'u8[524288]{0}', space=vmem, size = 0x80000, scoped, tag = 'input window, operand 1, single buffered']
    #allocation3 [shape = 's32[1]{0}', space=sflag, size = 0x4, scoped, tag = 'scoped memory for classifier_forward.1']
    #allocation4 [shape = 's32[1]{0}', space=sflag, size = 0x4, scoped, tag = 'scoped memory for classifier_forward.1']
    #allocation5 [shape = 'u8[1048576]{0}', space=vmem, size = 0x100000, scoped, tag = 'input window, operand 3, single buffered']
    #allocation6 [shape = 's32[1]{0}', space=sflag, size = 0x4, scoped, tag = 'scoped memory for classifier_forward.1']
    #allocation7 [shape = 'u8[262144]{0}', space=vmem, size = 0x40000, scoped, tag = 'input window, operand 5, single buffered']
    #allocation8 [shape = 'u8[4096]{0}', space=vmem, size = 0x1000, scoped, tag = 'output window, operand 0, single buffered']
    %16 = vsyncpa [#allocation3], 0
    %17 = vsyncpa [#allocation6], 0
    %18 = vsyncpa [#allocation4], 0
    // Predicated region
    $region2: #{classifier_forward.1} parent=1 // pred_check
      _
    $region3: #{classifier_forward.1} parent=1 // pred_check_branch
      %20 = sbr.rel (0) target = $region5
    $region4: #{classifier_forward.1} parent=1 // pred_region
      _
    $region5: #{classifier_forward.1} parent=1 // pred_fallthru
      _
    // Predicated region
    $region6: #{classifier_forward.1} parent=1 // pred_check
      _
    $region7: #{classifier_forward.1} parent=1 // pred_check_branch
      %22 = sbr.rel (0) target = $region9
    $region8: #{classifier_forward.1} parent=1 // pred_region
      %s24 = ssub.s32 16384, 16384
      %25 = vsyncadd [#allocation3], %s24
      %s26 = sshll.u32 [#allocation2], 4
      %s27 = int_to_ptr.vmem [resolvable:$true] %s26
      %32 = dma.hbm_to_vmem [thread:$0]  %s1, 16384, %s27, [#allocation3], 512, 512, 32
    $region9: #{classifier_forward.1} parent=1 // pred_fallthru
      _
    // Predicated region
    $region10: #{classifier_forward.1} parent=1 // pred_check
      _
    $region11: #{classifier_forward.1} parent=1 // pred_check_branch
      %34 = sbr.rel (0) target = $region13
    $region12: #{classifier_forward.1} parent=1 // pred_region
      _
    $region13: #{classifier_forward.1} parent=1 // pred_fallthru
      _
    // Predicated region
    $region14: #{classifier_forward.1} parent=1 // pred_check
      _
    $region15: #{classifier_forward.1} parent=1 // pred_check_branch
      %36 = sbr.rel (0) target = $region17
    $region16: #{classifier_forward.1} parent=1 // pred_region
      %s38 = ssub.s32 32768, 32768
      %39 = vsyncadd [#allocation6], %s38
      %s40 = sshll.u32 [#allocation5], 4
      %s41 = int_to_ptr.vmem [resolvable:$true] %s40
      %46 = dma.hbm_to_vmem [thread:$0]  %s3, 32768, %s41, [#allocation6], 256, 256, 16
    $region17: #{classifier_forward.1} parent=1 // pred_fallthru
      _
    // Predicated region
    $region18: #{classifier_forward.1} parent=1 // pred_check
      _
    $region19: #{classifier_forward.1} parent=1 // pred_check_branch
      %48 = sbr.rel (0) target = $region21
    $region20: #{classifier_forward.1} parent=1 // pred_region
      _
    $region21: #{classifier_forward.1} parent=1 // pred_fallthru
      _
    // Predicated region
    $region22: #{classifier_forward.1} parent=1 // pred_check
      _
    $region23: #{classifier_forward.1} parent=1 // pred_check_branch
      %50 = sbr.rel (0) target = $region25
    $region24: #{classifier_forward.1} parent=1 // pred_region
      %s52 = ssub.s32 8192, 8192
      %53 = vsyncadd [#allocation6], %s52
      %s54 = sshll.u32 [#allocation7], 4
      %s55 = int_to_ptr.vmem [resolvable:$true] %s54
      %60 = dma.hbm_to_vmem [thread:$0]  %s5, 8192, %s55, [#allocation6], 128, 128, 8
    $region25: #{classifier_forward.1} parent=1 // pred_fallthru
      _
    // Predicated region
    $region26: #{classifier_forward.1} parent=1 // pred_check
      _
    $region27: #{classifier_forward.1} parent=1 // pred_check_branch
      %62 = sbr.rel (0) target = $region29
    $region28: #{classifier_forward.1} parent=1 // pred_region
      _
    $region29: #{classifier_forward.1} parent=1 // pred_fallthru
      _
    // Predicated region
    $region30: #{classifier_forward.1} parent=1 // pred_check
      _
    $region31: #{classifier_forward.1} parent=1 // pred_check_branch
      %64 = sbr.rel (0) target = $region33
    $region32: #{classifier_forward.1} parent=1 // pred_region
      _
    $region33: #{classifier_forward.1} parent=1 // pred_fallthru
      _
    // Predicated region
    $region34: #{classifier_forward.1} parent=1 // pred_check
      _
    $region35: #{classifier_forward.1} parent=1 // pred_check_branch
      %66 = sbr.rel (0) target = $region37
    $region36: #{classifier_forward.1} parent=1 // pred_region
      _
    $region37: #{classifier_forward.1} parent=1 // pred_fallthru
      _
    // Predicated region
    $region38: #{classifier_forward.1} parent=1 // pred_check
      _
    $region39: #{classifier_forward.1} parent=1 // pred_check_branch
      %68 = sbr.rel (0) target = $region41
    $region40: #{classifier_forward.1} parent=1 // pred_region
      _
    $region41: #{classifier_forward.1} parent=1 // pred_fallthru
      _
    // Predicated region
    $region42: #{classifier_forward.1} parent=1 // pred_check
      _
    $region43: #{classifier_forward.1} parent=1 // pred_check_branch
      %70 = sbr.rel (0) target = $region45
    $region44: #{classifier_forward.1} parent=1 // pred_region
      _
    $region45: #{classifier_forward.1} parent=1 // pred_fallthru
      _
    // Predicated region
    $region46: #{classifier_forward.1} parent=1 // pred_check
      _
    $region47: #{classifier_forward.1} parent=1 // pred_check_branch
      %72 = sbr.rel (0) target = $region49
    $region48: #{classifier_forward.1} parent=1 // pred_region
      %73 = dma.done [#allocation3], 16384
    $region49: #{classifier_forward.1} parent=1 // pred_fallthru
      _
    // Predicated region
    $region50: #{classifier_forward.1} parent=1 // pred_check
      _
    $region51: #{classifier_forward.1} parent=1 // pred_check_branch
      %75 = sbr.rel (0) target = $region53
    $region52: #{classifier_forward.1} parent=1 // pred_region
      %76 = dma.done [#allocation6], 32768
    $region53: #{classifier_forward.1} parent=1 // pred_fallthru
      _
    // Predicated region
    $region54: #{classifier_forward.1} parent=1 // pred_check
      _
    $region55: #{classifier_forward.1} parent=1 // pred_check_branch
      %78 = sbr.rel (0) target = $region57
    $region56: #{classifier_forward.1} parent=1 // pred_region
      %79 = dma.done [#allocation6], 8192
    $region57: #{classifier_forward.1} parent=1 // pred_fallthru
      _
    %v81 = vld [vmem:[%s0] sm:$0xff]
    %v82 = vld [vmem:[#allocation2] sm:$0xff]
    %v83 = vld [vmem:[#allocation2 + $0x8] sm:$0xff]
    %v84 = vld [vmem:[#allocation2 + $0x10] sm:$0xff]
    %v85 = vld [vmem:[#allocation2 + $0x18] sm:$0xff]
    %v86 = vld [vmem:[#allocation2 + $0x20] sm:$0xff]
    %v87 = vld [vmem:[#allocation2 + $0x28] sm:$0xff]
    %v88 = vld [vmem:[#allocation2 + $0x30] sm:$0xff]
    %v89 = vld [vmem:[#allocation2 + $0x38] sm:$0xff]
    %v90 = vld [vmem:[#allocation2 + $0x40] sm:$0xff]
    %v91 = vld [vmem:[#allocation2 + $0x48] sm:$0xff]
    %v92 = vld [vmem:[#allocation2 + $0x50] sm:$0xff]
    %v93 = vld [vmem:[#allocation2 + $0x58] sm:$0xff]
    %v94 = vld [vmem:[#allocation2 + $0x60] sm:$0xff]
    %v95 = vld [vmem:[#allocation2 + $0x68] sm:$0xff]
    %v96 = vld [vmem:[#allocation2 + $0x70] sm:$0xff]
    %v97 = vld [vmem:[#allocation2 + $0x78] sm:$0xff]
    %v98 = vld [vmem:[#allocation2 + $0x80] sm:$0xff]
    %v99 = vld [vmem:[#allocation2 + $0x88] sm:$0xff]
    %v100 = vld [vmem:[#allocation2 + $0x90] sm:$0xff]
    %v101 = vld [vmem:[#allocation2 + $0x98] sm:$0xff]
    %v102 = vld [vmem:[#allocation2 + $0xa0] sm:$0xff]
    %v103 = vld [vmem:[#allocation2 + $0xa8] sm:$0xff]
    %v104 = vld [vmem:[#allocation2 + $0xb0] sm:$0xff]
    %v105 = vld [vmem:[#allocation2 + $0xb8] sm:$0xff]
    %v106 = vld [vmem:[#allocation2 + $0xc0] sm:$0xff]
    %v107 = vld [vmem:[#allocation2 + $0xc8] sm:$0xff]
    %v108 = vld [vmem:[#allocation2 + $0xd0] sm:$0xff]
    %v109 = vld [vmem:[#allocation2 + $0xd8] sm:$0xff]
    %v110 = vld [vmem:[#allocation2 + $0xe0] sm:$0xff]
    %v111 = vld [vmem:[#allocation2 + $0xe8] sm:$0xff]
    %v112 = vld [vmem:[#allocation2 + $0xf0] sm:$0xff]
    %v113 = vld [vmem:[#allocation2 + $0xf8] sm:$0xff]
    %v114 = vld [vmem:[#allocation2 + $0x100] sm:$0xff]
    %v115 = vld [vmem:[#allocation2 + $0x108] sm:$0xff]
    %v116 = vld [vmem:[#allocation2 + $0x110] sm:$0xff]
    %v117 = vld [vmem:[#allocation2 + $0x118] sm:$0xff]
    %v118 = vld [vmem:[#allocation2 + $0x120] sm:$0xff]
    %v119 = vld [vmem:[#allocation2 + $0x128] sm:$0xff]
    %v120 = vld [vmem:[#allocation2 + $0x130] sm:$0xff]
    %v121 = vld [vmem:[#allocation2 + $0x138] sm:$0xff]
    %v122 = vld [vmem:[#allocation2 + $0x140] sm:$0xff]
    %v123 = vld [vmem:[#allocation2 + $0x148] sm:$0xff]
    %v124 = vld [vmem:[#allocation2 + $0x150] sm:$0xff]
    %v125 = vld [vmem:[#allocation2 + $0x158] sm:$0xff]
    %v126 = vld [vmem:[#allocation2 + $0x160] sm:$0xff]
    %v127 = vld [vmem:[#allocation2 + $0x168] sm:$0xff]
    %v128 = vld [vmem:[#allocation2 + $0x170] sm:$0xff]
    %v129 = vld [vmem:[#allocation2 + $0x178] sm:$0xff]
    %v130 = vld [vmem:[#allocation2 + $0x180] sm:$0xff]
    %v131 = vld [vmem:[#allocation2 + $0x188] sm:$0xff]
    %v132 = vld [vmem:[#allocation2 + $0x190] sm:$0xff]
    %v133 = vld [vmem:[#allocation2 + $0x198] sm:$0xff]
    %v134 = vld [vmem:[#allocation2 + $0x1a0] sm:$0xff]
    %v135 = vld [vmem:[#allocation2 + $0x1a8] sm:$0xff]
    %v136 = vld [vmem:[#allocation2 + $0x1b0] sm:$0xff]
    %v137 = vld [vmem:[#allocation2 + $0x1b8] sm:$0xff]
    %v138 = vld [vmem:[#allocation2 + $0x1c0] sm:$0xff]
    %v139 = vld [vmem:[#allocation2 + $0x1c8] sm:$0xff]
    %v140 = vld [vmem:[#allocation2 + $0x1d0] sm:$0xff]
    %v141 = vld [vmem:[#allocation2 + $0x1d8] sm:$0xff]
    %v142 = vld [vmem:[#allocation2 + $0x1e0] sm:$0xff]
    %v143 = vld [vmem:[#allocation2 + $0x1e8] sm:$0xff]
    %v144 = vld [vmem:[#allocation2 + $0x1f0] sm:$0xff]
    %v145 = vld [vmem:[#allocation2 + $0x1f8] sm:$0xff]
    %v146 = vld [vmem:[#allocation2 + $0x200] sm:$0xff]
    %v147 = vld [vmem:[#allocation2 + $0x208] sm:$0xff]
    %v148 = vld [vmem:[#allocation2 + $0x210] sm:$0xff]
    %v149 = vld [vmem:[#allocation2 + $0x218] sm:$0xff]
    %v150 = vld [vmem:[#allocation2 + $0x220] sm:$0xff]
    %v151 = vld [vmem:[#allocation2 + $0x228] sm:$0xff]
    %v152 = vld [vmem:[#allocation2 + $0x230] sm:$0xff]
    %v153 = vld [vmem:[#allocation2 + $0x238] sm:$0xff]
    %v154 = vld [vmem:[#allocation2 + $0x240] sm:$0xff]
    %v155 = vld [vmem:[#allocation2 + $0x248] sm:$0xff]
    %v156 = vld [vmem:[#allocation2 + $0x250] sm:$0xff]
    %v157 = vld [vmem:[#allocation2 + $0x258] sm:$0xff]
    %v158 = vld [vmem:[#allocation2 + $0x260] sm:$0xff]
    %v159 = vld [vmem:[#allocation2 + $0x268] sm:$0xff]
    %v160 = vld [vmem:[#allocation2 + $0x270] sm:$0xff]
    %v161 = vld [vmem:[#allocation2 + $0x278] sm:$0xff]
    %v162 = vld [vmem:[#allocation2 + $0x280] sm:$0xff]
    %v163 = vld [vmem:[#allocation2 + $0x288] sm:$0xff]
    %v164 = vld [vmem:[#allocation2 + $0x290] sm:$0xff]
    %v165 = vld [vmem:[#allocation2 + $0x298] sm:$0xff]
    %v166 = vld [vmem:[#allocation2 + $0x2a0] sm:$0xff]
    %v167 = vld [vmem:[#allocation2 + $0x2a8] sm:$0xff]
    %v168 = vld [vmem:[#allocation2 + $0x2b0] sm:$0xff]
    %v169 = vld [vmem:[#allocation2 + $0x2b8] sm:$0xff]
    %v170 = vld [vmem:[#allocation2 + $0x2c0] sm:$0xff]
    %v171 = vld [vmem:[#allocation2 + $0x2c8] sm:$0xff]
    %v172 = vld [vmem:[#allocation2 + $0x2d0] sm:$0xff]
    %v173 = vld [vmem:[#allocation2 + $0x2d8] sm:$0xff]
    %v174 = vld [vmem:[#allocation2 + $0x2e0] sm:$0xff]
    %v175 = vld [vmem:[#allocation2 + $0x2e8] sm:$0xff]
    %v176 = vld [vmem:[#allocation2 + $0x2f0] sm:$0xff]
    %v177 = vld [vmem:[#allocation2 + $0x2f8] sm:$0xff]
    %v178 = vld [vmem:[#allocation2 + $0x300] sm:$0xff]
    %v179 = vld [vmem:[#allocation2 + $0x308] sm:$0xff]
    %v180 = vld [vmem:[#allocation2 + $0x310] sm:$0xff]
    %v181 = vld [vmem:[#allocation2 + $0x318] sm:$0xff]
    %v182 = vld [vmem:[#allocation2 + $0x320] sm:$0xff]
    %v183 = vld [vmem:[#allocation2 + $0x328] sm:$0xff]
    %v184 = vld [vmem:[#allocation2 + $0x330] sm:$0xff]
    %v185 = vld [vmem:[#allocation2 + $0x338] sm:$0xff]
    %v186 = vld [vmem:[#allocation2 + $0x340] sm:$0xff]
    %v187 = vld [vmem:[#allocation2 + $0x348] sm:$0xff]
    %v188 = vld [vmem:[#allocation2 + $0x350] sm:$0xff]
    %v189 = vld [vmem:[#allocation2 + $0x358] sm:$0xff]
    %v190 = vld [vmem:[#allocation2 + $0x360] sm:$0xff]
    %v191 = vld [vmem:[#allocation2 + $0x368] sm:$0xff]
    %v192 = vld [vmem:[#allocation2 + $0x370] sm:$0xff]
    %v193 = vld [vmem:[#allocation2 + $0x378] sm:$0xff]
    %v194 = vld [vmem:[#allocation2 + $0x380] sm:$0xff]
    %v195 = vld [vmem:[#allocation2 + $0x388] sm:$0xff]
    %v196 = vld [vmem:[#allocation2 + $0x390] sm:$0xff]
    %v197 = vld [vmem:[#allocation2 + $0x398] sm:$0xff]
    %v198 = vld [vmem:[#allocation2 + $0x3a0] sm:$0xff]
    %v199 = vld [vmem:[#allocation2 + $0x3a8] sm:$0xff]
    %v200 = vld [vmem:[#allocation2 + $0x3b0] sm:$0xff]
    %v201 = vld [vmem:[#allocation2 + $0x3b8] sm:$0xff]
    %v202 = vld [vmem:[#allocation2 + $0x3c0] sm:$0xff]
    %v203 = vld [vmem:[#allocation2 + $0x3c8] sm:$0xff]
    %v204 = vld [vmem:[#allocation2 + $0x3d0] sm:$0xff]
    %v205 = vld [vmem:[#allocation2 + $0x3d8] sm:$0xff]
    %v206 = vld [vmem:[#allocation2 + $0x3e0] sm:$0xff]
    %v207 = vld [vmem:[#allocation2 + $0x3e8] sm:$0xff]
    %v208 = vld [vmem:[#allocation2 + $0x3f0] sm:$0xff]
    %v209 = vld [vmem:[#allocation2 + $0x3f8] sm:$0xff]
    %v210 = vld [vmem:[%s2] sm:$0xff]
    %v212 = vlaneseq
    %v213 = vshrl.u32 %v212, 7
    %v214 = vsub.s32 0, %v213
    %v215 = vrot.slane %v210, %v214
    %v216 = vlaneseq
    %v217 = vshrl.u32 %v216, 7
    %v218 = vsub.s32 1, %v217
    %v219 = vrot.slane %v210, %v218
    %v220 = vlaneseq
    %v221 = vshrl.u32 %v220, 7
    %v222 = vsub.s32 2, %v221
    %v223 = vrot.slane %v210, %v222
    %v224 = vlaneseq
    %v225 = vshrl.u32 %v224, 7
    %v226 = vsub.s32 3, %v225
    %v227 = vrot.slane %v210, %v226
    %v228 = vlaneseq
    %v229 = vshrl.u32 %v228, 7
    %v230 = vsub.s32 4, %v229
    %v231 = vrot.slane %v210, %v230
    %v232 = vlaneseq
    %v233 = vshrl.u32 %v232, 7
    %v234 = vsub.s32 5, %v233
    %v235 = vrot.slane %v210, %v234
    %v236 = vlaneseq
    %v237 = vshrl.u32 %v236, 7
    %v238 = vsub.s32 6, %v237
    %v239 = vrot.slane %v210, %v238
    %v240 = vlaneseq
    %v241 = vshrl.u32 %v240, 7
    %v242 = vsub.s32 7, %v241
    %v243 = vrot.slane %v210, %v242
    %v253 = vunpack.c.l.b16 %v81
    %v254 = vunpack.c.h.b16 %v81
    %v255 = vpack.c.b16 %v253, %v253
    %v256 = vpack.c.b16 %v254, %v254
    %v387 = vunpack.c.l.b16 %v82
    %v388 = vunpack.c.h.b16 %v82
    %v389 = vunpack.c.l.b16 %v83
    %v390 = vunpack.c.h.b16 %v83
    %v391 = vunpack.c.l.b16 %v84
    %v392 = vunpack.c.h.b16 %v84
    %v393 = vunpack.c.l.b16 %v85
    %v394 = vunpack.c.h.b16 %v85
    %v395 = vunpack.c.l.b16 %v86
    %v396 = vunpack.c.h.b16 %v86
    %v397 = vunpack.c.l.b16 %v87
    %v398 = vunpack.c.h.b16 %v87
    %v399 = vunpack.c.l.b16 %v88
    %v400 = vunpack.c.h.b16 %v88
    %v401 = vunpack.c.l.b16 %v89
    %v402 = vunpack.c.h.b16 %v89
    %v403 = vunpack.c.l.b16 %v90
    %v404 = vunpack.c.h.b16 %v90
    %v405 = vunpack.c.l.b16 %v91
    %v406 = vunpack.c.h.b16 %v91
    %v407 = vunpack.c.l.b16 %v92
    %v408 = vunpack.c.h.b16 %v92
    %v409 = vunpack.c.l.b16 %v93
    %v410 = vunpack.c.h.b16 %v93
    %v411 = vunpack.c.l.b16 %v94
    %v412 = vunpack.c.h.b16 %v94
    %v413 = vunpack.c.l.b16 %v95
    %v414 = vunpack.c.h.b16 %v95
    %v415 = vunpack.c.l.b16 %v96
    %v416 = vunpack.c.h.b16 %v96
    %v417 = vunpack.c.l.b16 %v97
    %v418 = vunpack.c.h.b16 %v97
    %v419 = vunpack.c.l.b16 %v98
    %v420 = vunpack.c.h.b16 %v98
    %v421 = vunpack.c.l.b16 %v99
    %v422 = vunpack.c.h.b16 %v99
    %v423 = vunpack.c.l.b16 %v100
    %v424 = vunpack.c.h.b16 %v100
    %v425 = vunpack.c.l.b16 %v101
    %v426 = vunpack.c.h.b16 %v101
    %v427 = vunpack.c.l.b16 %v102
    %v428 = vunpack.c.h.b16 %v102
    %v429 = vunpack.c.l.b16 %v103
    %v430 = vunpack.c.h.b16 %v103
    %v431 = vunpack.c.l.b16 %v104
    %v432 = vunpack.c.h.b16 %v104
    %v433 = vunpack.c.l.b16 %v105
    %v434 = vunpack.c.h.b16 %v105
    %v435 = vunpack.c.l.b16 %v106
    %v436 = vunpack.c.h.b16 %v106
    %v437 = vunpack.c.l.b16 %v107
    %v438 = vunpack.c.h.b16 %v107
    %v439 = vunpack.c.l.b16 %v108
    %v440 = vunpack.c.h.b16 %v108
    %v441 = vunpack.c.l.b16 %v109
    %v442 = vunpack.c.h.b16 %v109
    %v443 = vunpack.c.l.b16 %v110
    %v444 = vunpack.c.h.b16 %v110
    %v445 = vunpack.c.l.b16 %v111
    %v446 = vunpack.c.h.b16 %v111
    %v447 = vunpack.c.l.b16 %v112
    %v448 = vunpack.c.h.b16 %v112
    %v449 = vunpack.c.l.b16 %v113
    %v450 = vunpack.c.h.b16 %v113
    %v451 = vunpack.c.l.b16 %v114
    %v452 = vunpack.c.h.b16 %v114
    %v453 = vunpack.c.l.b16 %v115
    %v454 = vunpack.c.h.b16 %v115
    %v455 = vunpack.c.l.b16 %v116
    %v456 = vunpack.c.h.b16 %v116
    %v457 = vunpack.c.l.b16 %v117
    %v458 = vunpack.c.h.b16 %v117
    %v459 = vunpack.c.l.b16 %v118
    %v460 = vunpack.c.h.b16 %v118
    %v461 = vunpack.c.l.b16 %v119
    %v462 = vunpack.c.h.b16 %v119
    %v463 = vunpack.c.l.b16 %v120
    %v464 = vunpack.c.h.b16 %v120
    %v465 = vunpack.c.l.b16 %v121
    %v466 = vunpack.c.h.b16 %v121
    %v467 = vunpack.c.l.b16 %v122
    %v468 = vunpack.c.h.b16 %v122
    %v469 = vunpack.c.l.b16 %v123
    %v470 = vunpack.c.h.b16 %v123
    %v471 = vunpack.c.l.b16 %v124
    %v472 = vunpack.c.h.b16 %v124
    %v473 = vunpack.c.l.b16 %v125
    %v474 = vunpack.c.h.b16 %v125
    %v475 = vunpack.c.l.b16 %v126
    %v476 = vunpack.c.h.b16 %v126
    %v477 = vunpack.c.l.b16 %v127
    %v478 = vunpack.c.h.b16 %v127
    %v479 = vunpack.c.l.b16 %v128
    %v480 = vunpack.c.h.b16 %v128
    %v481 = vunpack.c.l.b16 %v129
    %v482 = vunpack.c.h.b16 %v129
    %v483 = vunpack.c.l.b16 %v130
    %v484 = vunpack.c.h.b16 %v130
    %v485 = vunpack.c.l.b16 %v131
    %v486 = vunpack.c.h.b16 %v131
    %v487 = vunpack.c.l.b16 %v132
    %v488 = vunpack.c.h.b16 %v132
    %v489 = vunpack.c.l.b16 %v133
    %v490 = vunpack.c.h.b16 %v133
    %v491 = vunpack.c.l.b16 %v134
    %v492 = vunpack.c.h.b16 %v134
    %v493 = vunpack.c.l.b16 %v135
    %v494 = vunpack.c.h.b16 %v135
    %v495 = vunpack.c.l.b16 %v136
    %v496 = vunpack.c.h.b16 %v136
    %v497 = vunpack.c.l.b16 %v137
    %v498 = vunpack.c.h.b16 %v137
    %v499 = vunpack.c.l.b16 %v138
    %v500 = vunpack.c.h.b16 %v138
    %v501 = vunpack.c.l.b16 %v139
    %v502 = vunpack.c.h.b16 %v139
    %v503 = vunpack.c.l.b16 %v140
    %v504 = vunpack.c.h.b16 %v140
    %v505 = vunpack.c.l.b16 %v141
    %v506 = vunpack.c.h.b16 %v141
    %v507 = vunpack.c.l.b16 %v142
    %v508 = vunpack.c.h.b16 %v142
    %v509 = vunpack.c.l.b16 %v143
    %v510 = vunpack.c.h.b16 %v143
    %v511 = vunpack.c.l.b16 %v144
    %v512 = vunpack.c.h.b16 %v144
    %v513 = vunpack.c.l.b16 %v145
    %v514 = vunpack.c.h.b16 %v145
    %v515 = vunpack.c.l.b16 %v146
    %v516 = vunpack.c.h.b16 %v146
    %v517 = vunpack.c.l.b16 %v147
    %v518 = vunpack.c.h.b16 %v147
    %v519 = vunpack.c.l.b16 %v148
    %v520 = vunpack.c.h.b16 %v148
    %v521 = vunpack.c.l.b16 %v149
    %v522 = vunpack.c.h.b16 %v149
    %v523 = vunpack.c.l.b16 %v150
    %v524 = vunpack.c.h.b16 %v150
    %v525 = vunpack.c.l.b16 %v151
    %v526 = vunpack.c.h.b16 %v151
    %v527 = vunpack.c.l.b16 %v152
    %v528 = vunpack.c.h.b16 %v152
    %v529 = vunpack.c.l.b16 %v153
    %v530 = vunpack.c.h.b16 %v153
    %v531 = vunpack.c.l.b16 %v154
    %v532 = vunpack.c.h.b16 %v154
    %v533 = vunpack.c.l.b16 %v155
    %v534 = vunpack.c.h.b16 %v155
    %v535 = vunpack.c.l.b16 %v156
    %v536 = vunpack.c.h.b16 %v156
    %v537 = vunpack.c.l.b16 %v157
    %v538 = vunpack.c.h.b16 %v157
    %v539 = vunpack.c.l.b16 %v158
    %v540 = vunpack.c.h.b16 %v158
    %v541 = vunpack.c.l.b16 %v159
    %v542 = vunpack.c.h.b16 %v159
    %v543 = vunpack.c.l.b16 %v160
    %v544 = vunpack.c.h.b16 %v160
    %v545 = vunpack.c.l.b16 %v161
    %v546 = vunpack.c.h.b16 %v161
    %v547 = vunpack.c.l.b16 %v162
    %v548 = vunpack.c.h.b16 %v162
    %v549 = vunpack.c.l.b16 %v163
    %v550 = vunpack.c.h.b16 %v163
    %v551 = vunpack.c.l.b16 %v164
    %v552 = vunpack.c.h.b16 %v164
    %v553 = vunpack.c.l.b16 %v165
    %v554 = vunpack.c.h.b16 %v165
    %v555 = vunpack.c.l.b16 %v166
    %v556 = vunpack.c.h.b16 %v166
    %v557 = vunpack.c.l.b16 %v167
    %v558 = vunpack.c.h.b16 %v167
    %v559 = vunpack.c.l.b16 %v168
    %v560 = vunpack.c.h.b16 %v168
    %v561 = vunpack.c.l.b16 %v169
    %v562 = vunpack.c.h.b16 %v169
    %v563 = vunpack.c.l.b16 %v170
    %v564 = vunpack.c.h.b16 %v170
    %v565 = vunpack.c.l.b16 %v171
    %v566 = vunpack.c.h.b16 %v171
    %v567 = vunpack.c.l.b16 %v172
    %v568 = vunpack.c.h.b16 %v172
    %v569 = vunpack.c.l.b16 %v173
    %v570 = vunpack.c.h.b16 %v173
    %v571 = vunpack.c.l.b16 %v174
    %v572 = vunpack.c.h.b16 %v174
    %v573 = vunpack.c.l.b16 %v175
    %v574 = vunpack.c.h.b16 %v175
    %v575 = vunpack.c.l.b16 %v176
    %v576 = vunpack.c.h.b16 %v176
    %v577 = vunpack.c.l.b16 %v177
    %v578 = vunpack.c.h.b16 %v177
    %v579 = vunpack.c.l.b16 %v178
    %v580 = vunpack.c.h.b16 %v178
    %v581 = vunpack.c.l.b16 %v179
    %v582 = vunpack.c.h.b16 %v179
    %v583 = vunpack.c.l.b16 %v180
    %v584 = vunpack.c.h.b16 %v180
    %v585 = vunpack.c.l.b16 %v181
    %v586 = vunpack.c.h.b16 %v181
    %v587 = vunpack.c.l.b16 %v182
    %v588 = vunpack.c.h.b16 %v182
    %v589 = vunpack.c.l.b16 %v183
    %v590 = vunpack.c.h.b16 %v183
    %v591 = vunpack.c.l.b16 %v184
    %v592 = vunpack.c.h.b16 %v184
    %v593 = vunpack.c.l.b16 %v185
    %v594 = vunpack.c.h.b16 %v185
    %v595 = vunpack.c.l.b16 %v186
    %v596 = vunpack.c.h.b16 %v186
    %v597 = vunpack.c.l.b16 %v187
    %v598 = vunpack.c.h.b16 %v187
    %v599 = vunpack.c.l.b16 %v188
    %v600 = vunpack.c.h.b16 %v188
    %v601 = vunpack.c.l.b16 %v189
    %v602 = vunpack.c.h.b16 %v189
    %v603 = vunpack.c.l.b16 %v190
    %v604 = vunpack.c.h.b16 %v190
    %v605 = vunpack.c.l.b16 %v191
    %v606 = vunpack.c.h.b16 %v191
    %v607 = vunpack.c.l.b16 %v192
    %v608 = vunpack.c.h.b16 %v192
    %v609 = vunpack.c.l.b16 %v193
    %v610 = vunpack.c.h.b16 %v193
    %v611 = vunpack.c.l.b16 %v194
    %v612 = vunpack.c.h.b16 %v194
    %v613 = vunpack.c.l.b16 %v195
    %v614 = vunpack.c.h.b16 %v195
    %v615 = vunpack.c.l.b16 %v196
    %v616 = vunpack.c.h.b16 %v196
    %v617 = vunpack.c.l.b16 %v197
    %v618 = vunpack.c.h.b16 %v197
    %v619 = vunpack.c.l.b16 %v198
    %v620 = vunpack.c.h.b16 %v198
    %v621 = vunpack.c.l.b16 %v199
    %v622 = vunpack.c.h.b16 %v199
    %v623 = vunpack.c.l.b16 %v200
    %v624 = vunpack.c.h.b16 %v200
    %v625 = vunpack.c.l.b16 %v201
    %v626 = vunpack.c.h.b16 %v201
    %v627 = vunpack.c.l.b16 %v202
    %v628 = vunpack.c.h.b16 %v202
    %v629 = vunpack.c.l.b16 %v203
    %v630 = vunpack.c.h.b16 %v203
    %v631 = vunpack.c.l.b16 %v204
    %v632 = vunpack.c.h.b16 %v204
    %v633 = vunpack.c.l.b16 %v205
    %v634 = vunpack.c.h.b16 %v205
    %v635 = vunpack.c.l.b16 %v206
    %v636 = vunpack.c.h.b16 %v206
    %v637 = vunpack.c.l.b16 %v207
    %v638 = vunpack.c.h.b16 %v207
    %v639 = vunpack.c.l.b16 %v208
    %v640 = vunpack.c.h.b16 %v208
    %v641 = vunpack.c.l.b16 %v209
    %v642 = vunpack.c.h.b16 %v209
    %v643 = vpack.c.b16 %v395, %v387
    %v644 = vpack.c.b16 %v396, %v388
    %v645 = vpack.c.b16 %v397, %v389
    %v646 = vpack.c.b16 %v398, %v390
    %v647 = vpack.c.b16 %v399, %v391
    %v648 = vpack.c.b16 %v400, %v392
    %v649 = vpack.c.b16 %v401, %v393
    %v650 = vpack.c.b16 %v402, %v394
    %v651 = vpack.c.b16 %v411, %v403
    %v652 = vpack.c.b16 %v412, %v404
    %v653 = vpack.c.b16 %v413, %v405
    %v654 = vpack.c.b16 %v414, %v406
    %v655 = vpack.c.b16 %v415, %v407
    %v656 = vpack.c.b16 %v416, %v408
    %v657 = vpack.c.b16 %v417, %v409
    %v658 = vpack.c.b16 %v418, %v410
    %v659 = vpack.c.b16 %v427, %v419
    %v660 = vpack.c.b16 %v428, %v420
    %v661 = vpack.c.b16 %v429, %v421
    %v662 = vpack.c.b16 %v430, %v422
    %v663 = vpack.c.b16 %v431, %v423
    %v664 = vpack.c.b16 %v432, %v424
    %v665 = vpack.c.b16 %v433, %v425
    %v666 = vpack.c.b16 %v434, %v426
    %v667 = vpack.c.b16 %v443, %v435
    %v668 = vpack.c.b16 %v444, %v436
    %v669 = vpack.c.b16 %v445, %v437
    %v670 = vpack.c.b16 %v446, %v438
    %v671 = vpack.c.b16 %v447, %v439
    %v672 = vpack.c.b16 %v448, %v440
    %v673 = vpack.c.b16 %v449, %v441
    %v674 = vpack.c.b16 %v450, %v442
    %v675 = vpack.c.b16 %v459, %v451
    %v676 = vpack.c.b16 %v460, %v452
    %v677 = vpack.c.b16 %v461, %v453
    %v678 = vpack.c.b16 %v462, %v454
    %v679 = vpack.c.b16 %v463, %v455
    %v680 = vpack.c.b16 %v464, %v456
    %v681 = vpack.c.b16 %v465, %v457
    %v682 = vpack.c.b16 %v466, %v458
    %v683 = vpack.c.b16 %v475, %v467
    %v684 = vpack.c.b16 %v476, %v468
    %v685 = vpack.c.b16 %v477, %v469
    %v686 = vpack.c.b16 %v478, %v470
    %v687 = vpack.c.b16 %v479, %v471
    %v688 = vpack.c.b16 %v480, %v472
    %v689 = vpack.c.b16 %v481, %v473
    %v690 = vpack.c.b16 %v482, %v474
    %v691 = vpack.c.b16 %v491, %v483
    %v692 = vpack.c.b16 %v492, %v484
    %v693 = vpack.c.b16 %v493, %v485
    %v694 = vpack.c.b16 %v494, %v486
    %v695 = vpack.c.b16 %v495, %v487
    %v696 = vpack.c.b16 %v496, %v488
    %v697 = vpack.c.b16 %v497, %v489
    %v698 = vpack.c.b16 %v498, %v490
    %v699 = vpack.c.b16 %v507, %v499
    %v700 = vpack.c.b16 %v508, %v500
    %v701 = vpack.c.b16 %v509, %v501
    %v702 = vpack.c.b16 %v510, %v502
    %v703 = vpack.c.b16 %v511, %v503
    %v704 = vpack.c.b16 %v512, %v504
    %v705 = vpack.c.b16 %v513, %v505
    %v706 = vpack.c.b16 %v514, %v506
    %v707 = vpack.c.b16 %v523, %v515
    %v708 = vpack.c.b16 %v524, %v516
    %v709 = vpack.c.b16 %v525, %v517
    %v710 = vpack.c.b16 %v526, %v518
    %v711 = vpack.c.b16 %v527, %v519
    %v712 = vpack.c.b16 %v528, %v520
    %v713 = vpack.c.b16 %v529, %v521
    %v714 = vpack.c.b16 %v530, %v522
    %v715 = vpack.c.b16 %v539, %v531
    %v716 = vpack.c.b16 %v540, %v532
    %v717 = vpack.c.b16 %v541, %v533
    %v718 = vpack.c.b16 %v542, %v534
    %v719 = vpack.c.b16 %v543, %v535
    %v720 = vpack.c.b16 %v544, %v536
    %v721 = vpack.c.b16 %v545, %v537
    %v722 = vpack.c.b16 %v546, %v538
    %v723 = vpack.c.b16 %v555, %v547
    %v724 = vpack.c.b16 %v556, %v548
    %v725 = vpack.c.b16 %v557, %v549
    %v726 = vpack.c.b16 %v558, %v550
    %v727 = vpack.c.b16 %v559, %v551
    %v728 = vpack.c.b16 %v560, %v552
    %v729 = vpack.c.b16 %v561, %v553
    %v730 = vpack.c.b16 %v562, %v554
    %v731 = vpack.c.b16 %v571, %v563
    %v732 = vpack.c.b16 %v572, %v564
    %v733 = vpack.c.b16 %v573, %v565
    %v734 = vpack.c.b16 %v574, %v566
    %v735 = vpack.c.b16 %v575, %v567
    %v736 = vpack.c.b16 %v576, %v568
    %v737 = vpack.c.b16 %v577, %v569
    %v738 = vpack.c.b16 %v578, %v570
    %v739 = vpack.c.b16 %v587, %v579
    %v740 = vpack.c.b16 %v588, %v580
    %v741 = vpack.c.b16 %v589, %v581
    %v742 = vpack.c.b16 %v590, %v582
    %v743 = vpack.c.b16 %v591, %v583
    %v744 = vpack.c.b16 %v592, %v584
    %v745 = vpack.c.b16 %v593, %v585
    %v746 = vpack.c.b16 %v594, %v586
    %v747 = vpack.c.b16 %v603, %v595
    %v748 = vpack.c.b16 %v604, %v596
    %v749 = vpack.c.b16 %v605, %v597
    %v750 = vpack.c.b16 %v606, %v598
    %v751 = vpack.c.b16 %v607, %v599
    %v752 = vpack.c.b16 %v608, %v600
    %v753 = vpack.c.b16 %v609, %v601
    %v754 = vpack.c.b16 %v610, %v602
    %v755 = vpack.c.b16 %v619, %v611
    %v756 = vpack.c.b16 %v620, %v612
    %v757 = vpack.c.b16 %v621, %v613
    %v758 = vpack.c.b16 %v622, %v614
    %v759 = vpack.c.b16 %v623, %v615
    %v760 = vpack.c.b16 %v624, %v616
    %v761 = vpack.c.b16 %v625, %v617
    %v762 = vpack.c.b16 %v626, %v618
    %v763 = vpack.c.b16 %v635, %v627
    %v764 = vpack.c.b16 %v636, %v628
    %v765 = vpack.c.b16 %v637, %v629
    %v766 = vpack.c.b16 %v638, %v630
    %v767 = vpack.c.b16 %v639, %v631
    %v768 = vpack.c.b16 %v640, %v632
    %v769 = vpack.c.b16 %v641, %v633
    %v770 = vpack.c.b16 %v642, %v634
    %899 = vmatprep.subr.bf16.mxu0 %v644
    %900 = vmatpush1.bf16.msra.mxu0 %v643
    %901 = vmatprep.subr.bf16.mxu0 %v652
    %902 = vmatpush1.bf16.msra.mxu0 %v651
    %903 = vmatprep.subr.bf16.mxu0 %v660
    %904 = vmatpush1.bf16.msra.mxu0 %v659
    %905 = vmatprep.subr.bf16.mxu0 %v668
    %906 = vmatpush1.bf16.msra.mxu0 %v667
    %907 = vmatprep.subr.bf16.mxu0 %v676
    %908 = vmatpush1.bf16.msra.mxu0 %v675
    %909 = vmatprep.subr.bf16.mxu0 %v684
    %910 = vmatpush1.bf16.msra.mxu0 %v683
    %911 = vmatprep.subr.bf16.mxu0 %v692
    %912 = vmatpush1.bf16.msra.mxu0 %v691
    %913 = vmatprep.subr.bf16.mxu0 %v700
    %914 = vmatpush1.bf16.msra.mxu0 %v699
    %915 = vmatprep.subr.bf16.mxu0 %v708
    %916 = vmatpush1.bf16.msra.mxu0 %v707
    %917 = vmatprep.subr.bf16.mxu0 %v716
    %918 = vmatpush1.bf16.msra.mxu0 %v715
    %919 = vmatprep.subr.bf16.mxu0 %v724
    %920 = vmatpush1.bf16.msra.mxu0 %v723
    %921 = vmatprep.subr.bf16.mxu0 %v732
    %922 = vmatpush1.bf16.msra.mxu0 %v731
    %923 = vmatprep.subr.bf16.mxu0 %v740
    %924 = vmatpush1.bf16.msra.mxu0 %v739
    %925 = vmatprep.subr.bf16.mxu0 %v748
    %926 = vmatpush1.bf16.msra.mxu0 %v747
    %927 = vmatprep.subr.bf16.mxu0 %v756
    %928 = vmatpush1.bf16.msra.mxu0 %v755
    %929 = vmatprep.subr.bf16.mxu0 %v764
    %930 = vmatpush1.bf16.msra.mxu0 %v763
    %931 = vmatprep.mubr.bf16.mxu0 %v256
    %932 = vmatmul.mubr.bf16.gmra.mrb[0].mxu0 %v255
    %v933 = vpop.f32.mrb[0].mxu0
    %v934 = vadd.f32 %v215, %v933
    %v935 = vpop.f32.mrb[0].mxu0
    %v936 = vadd.f32 %v219, %v935
    %v937 = vpop.f32.mrb[0].mxu0
    %v938 = vpop.f32.mrb[0].mxu0
    %939 = vdwg.mxu0
    %940 = vmatprep.subr.bf16.mxu0 %v646
    %941 = vmatpush1.bf16.msra.mxu0 %v645
    %942 = vmatprep.subr.bf16.mxu0 %v654
    %943 = vmatpush1.bf16.msra.mxu0 %v653
    %944 = vmatprep.subr.bf16.mxu0 %v662
    %945 = vmatpush1.bf16.msra.mxu0 %v661
    %946 = vmatprep.subr.bf16.mxu0 %v670
    %947 = vmatpush1.bf16.msra.mxu0 %v669
    %948 = vmatprep.subr.bf16.mxu0 %v678
    %949 = vmatpush1.bf16.msra.mxu0 %v677
    %950 = vmatprep.subr.bf16.mxu0 %v686
    %951 = vmatpush1.bf16.msra.mxu0 %v685
    %952 = vmatprep.subr.bf16.mxu0 %v694
    %953 = vmatpush1.bf16.msra.mxu0 %v693
    %954 = vmatprep.subr.bf16.mxu0 %v702
    %955 = vmatpush1.bf16.msra.mxu0 %v701
    %956 = vmatprep.subr.bf16.mxu0 %v710
    %957 = vmatpush1.bf16.msra.mxu0 %v709
    %958 = vmatprep.subr.bf16.mxu0 %v718
    %959 = vmatpush1.bf16.msra.mxu0 %v717
    %960 = vmatprep.subr.bf16.mxu0 %v726
    %961 = vmatpush1.bf16.msra.mxu0 %v725
    %962 = vmatprep.subr.bf16.mxu0 %v734
    %963 = vmatpush1.bf16.msra.mxu0 %v733
    %964 = vmatprep.subr.bf16.mxu0 %v742
    %965 = vmatpush1.bf16.msra.mxu0 %v741
    %966 = vmatprep.subr.bf16.mxu0 %v750
    %967 = vmatpush1.bf16.msra.mxu0 %v749
    %968 = vmatprep.subr.bf16.mxu0 %v758
    %969 = vmatpush1.bf16.msra.mxu0 %v757
    %970 = vmatprep.subr.bf16.mxu0 %v766
    %971 = vmatpush1.bf16.msra.mxu0 %v765
    %972 = vmatprep.mubr.bf16.mxu0 %v256
    %973 = vmatmul.mubr.bf16.gmra.mrb[0].mxu0 %v255
    %v974 = vpop.f32.mrb[0].mxu0
    %v975 = vadd.f32 %v223, %v974
    %v976 = vpop.f32.mrb[0].mxu0
    %v977 = vadd.f32 %v227, %v976
    %v978 = vpop.f32.mrb[0].mxu0
    %v979 = vpop.f32.mrb[0].mxu0
    %980 = vdwg.mxu0
    %981 = vmatprep.subr.bf16.mxu0 %v648
    %982 = vmatpush1.bf16.msra.mxu0 %v647
    %983 = vmatprep.subr.bf16.mxu0 %v656
    %984 = vmatpush1.bf16.msra.mxu0 %v655
    %985 = vmatprep.subr.bf16.mxu0 %v664
    %986 = vmatpush1.bf16.msra.mxu0 %v663
    %987 = vmatprep.subr.bf16.mxu0 %v672
    %988 = vmatpush1.bf16.msra.mxu0 %v671
    %989 = vmatprep.subr.bf16.mxu0 %v680
    %990 = vmatpush1.bf16.msra.mxu0 %v679
    %991 = vmatprep.subr.bf16.mxu0 %v688
    %992 = vmatpush1.bf16.msra.mxu0 %v687
    %993 = vmatprep.subr.bf16.mxu0 %v696
    %994 = vmatpush1.bf16.msra.mxu0 %v695
    %995 = vmatprep.subr.bf16.mxu0 %v704
    %996 = vmatpush1.bf16.msra.mxu0 %v703
    %997 = vmatprep.subr.bf16.mxu0 %v712
    %998 = vmatpush1.bf16.msra.mxu0 %v711
    %999 = vmatprep.subr.bf16.mxu0 %v720
    %1000 = vmatpush1.bf16.msra.mxu0 %v719
    %1001 = vmatprep.subr.bf16.mxu0 %v728
    %1002 = vmatpush1.bf16.msra.mxu0 %v727
    %1003 = vmatprep.subr.bf16.mxu0 %v736
    %1004 = vmatpush1.bf16.msra.mxu0 %v735
    %1005 = vmatprep.subr.bf16.mxu0 %v744
    %1006 = vmatpush1.bf16.msra.mxu0 %v743
    %1007 = vmatprep.subr.bf16.mxu0 %v752
    %1008 = vmatpush1.bf16.msra.mxu0 %v751
    %1009 = vmatprep.subr.bf16.mxu0 %v760
    %1010 = vmatpush1.bf16.msra.mxu0 %v759
    %1011 = vmatprep.subr.bf16.mxu0 %v768
    %1012 = vmatpush1.bf16.msra.mxu0 %v767
    %1013 = vmatprep.mubr.bf16.mxu0 %v256
    %1014 = vmatmul.mubr.bf16.gmra.mrb[0].mxu0 %v255
    %v1015 = vpop.f32.mrb[0].mxu0
    %v1016 = vadd.f32 %v231, %v1015
    %v1017 = vpop.f32.mrb[0].mxu0
    %v1018 = vadd.f32 %v235, %v1017
    %v1019 = vpop.f32.mrb[0].mxu0
    %v1020 = vpop.f32.mrb[0].mxu0
    %1021 = vdwg.mxu0
    %1022 = vmatprep.subr.bf16.mxu0 %v650
    %1023 = vmatpush1.bf16.msra.mxu0 %v649
    %1024 = vmatprep.subr.bf16.mxu0 %v658
    %1025 = vmatpush1.bf16.msra.mxu0 %v657
    %1026 = vmatprep.subr.bf16.mxu0 %v666
    %1027 = vmatpush1.bf16.msra.mxu0 %v665
    %1028 = vmatprep.subr.bf16.mxu0 %v674
    %1029 = vmatpush1.bf16.msra.mxu0 %v673
    %1030 = vmatprep.subr.bf16.mxu0 %v682
    %1031 = vmatpush1.bf16.msra.mxu0 %v681
    %1032 = vmatprep.subr.bf16.mxu0 %v690
    %1033 = vmatpush1.bf16.msra.mxu0 %v689
    %1034 = vmatprep.subr.bf16.mxu0 %v698
    %1035 = vmatpush1.bf16.msra.mxu0 %v697
    %1036 = vmatprep.subr.bf16.mxu0 %v706
    %1037 = vmatpush1.bf16.msra.mxu0 %v705
    %1038 = vmatprep.subr.bf16.mxu0 %v714
    %1039 = vmatpush1.bf16.msra.mxu0 %v713
    %1040 = vmatprep.subr.bf16.mxu0 %v722
    %1041 = vmatpush1.bf16.msra.mxu0 %v721
    %1042 = vmatprep.subr.bf16.mxu0 %v730
    %1043 = vmatpush1.bf16.msra.mxu0 %v729
    %1044 = vmatprep.subr.bf16.mxu0 %v738
    %1045 = vmatpush1.bf16.msra.mxu0 %v737
    %1046 = vmatprep.subr.bf16.mxu0 %v746
    %1047 = vmatpush1.bf16.msra.mxu0 %v745
    %1048 = vmatprep.subr.bf16.mxu0 %v754
    %1049 = vmatpush1.bf16.msra.mxu0 %v753
    %1050 = vmatprep.subr.bf16.mxu0 %v762
    %1051 = vmatpush1.bf16.msra.mxu0 %v761
    %1052 = vmatprep.subr.bf16.mxu0 %v770
    %1053 = vmatpush1.bf16.msra.mxu0 %v769
    %1054 = vmatprep.mubr.bf16.mxu0 %v256
    %1055 = vmatmul.mubr.bf16.gmra.mrb[0].mxu0 %v255
    %v1056 = vpop.f32.mrb[0].mxu0
    %v1057 = vadd.f32 %v239, %v1056
    %v1058 = vpop.f32.mrb[0].mxu0
    %v1059 = vadd.f32 %v243, %v1058
    %v1060 = vpop.f32.mrb[0].mxu0
    %v1061 = vpop.f32.mrb[0].mxu0
    %1062 = vdwg.mxu0
    %v1063 = vmax.f32 %v934, 0.0
    %v1064 = vmax.f32 %v936, 0.0
    %v1065 = vmax.f32 %v975, 0.0
    %v1066 = vmax.f32 %v977, 0.0
    %v1067 = vmax.f32 %v1016, 0.0
    %v1068 = vmax.f32 %v1018, 0.0
    %v1069 = vmax.f32 %v1057, 0.0
    %v1070 = vmax.f32 %v1059, 0.0
    %v1071 = vpack.c.bf16 %v1063, %v1063
    %v1072 = vpack.c.bf16 %v1064, %v1064
    %v1073 = vpack.c.bf16 %v1065, %v1065
    %v1074 = vpack.c.bf16 %v1066, %v1066
    %v1075 = vpack.c.bf16 %v1067, %v1067
    %v1076 = vpack.c.bf16 %v1068, %v1068
    %v1077 = vpack.c.bf16 %v1069, %v1069
    %v1078 = vpack.c.bf16 %v1070, %v1070
    %v1079 = vld [vmem:[#allocation5] sm:$0xff]
    %v1080 = vld [vmem:[#allocation5 + $0x8] sm:$0xff]
    %v1081 = vld [vmem:[#allocation5 + $0x10] sm:$0xff]
    %v1082 = vld [vmem:[#allocation5 + $0x18] sm:$0xff]
    %v1083 = vld [vmem:[#allocation5 + $0x20] sm:$0xff]
    %v1084 = vld [vmem:[#allocation5 + $0x28] sm:$0xff]
    %v1085 = vld [vmem:[#allocation5 + $0x30] sm:$0xff]
    %v1086 = vld [vmem:[#allocation5 + $0x38] sm:$0xff]
    %v1087 = vld [vmem:[#allocation5 + $0x40] sm:$0xff]
    %v1088 = vld [vmem:[#allocation5 + $0x48] sm:$0xff]
    %v1089 = vld [vmem:[#allocation5 + $0x50] sm:$0xff]
    %v1090 = vld [vmem:[#allocation5 + $0x58] sm:$0xff]
    %v1091 = vld [vmem:[#allocation5 + $0x60] sm:$0xff]
    %v1092 = vld [vmem:[#allocation5 + $0x68] sm:$0xff]
    %v1093 = vld [vmem:[#allocation5 + $0x70] sm:$0xff]
    %v1094 = vld [vmem:[#allocation5 + $0x78] sm:$0xff]
    %v1095 = vld [vmem:[#allocation5 + $0x80] sm:$0xff]
    %v1096 = vld [vmem:[#allocation5 + $0x88] sm:$0xff]
    %v1097 = vld [vmem:[#allocation5 + $0x90] sm:$0xff]
    %v1098 = vld [vmem:[#allocation5 + $0x98] sm:$0xff]
    %v1099 = vld [vmem:[#allocation5 + $0xa0] sm:$0xff]
    %v1100 = vld [vmem:[#allocation5 + $0xa8] sm:$0xff]
    %v1101 = vld [vmem:[#allocation5 + $0xb0] sm:$0xff]
    %v1102 = vld [vmem:[#allocation5 + $0xb8] sm:$0xff]
    %v1103 = vld [vmem:[#allocation5 + $0xc0] sm:$0xff]
    %v1104 = vld [vmem:[#allocation5 + $0xc8] sm:$0xff]
    %v1105 = vld [vmem:[#allocation5 + $0xd0] sm:$0xff]
    %v1106 = vld [vmem:[#allocation5 + $0xd8] sm:$0xff]
    %v1107 = vld [vmem:[#allocation5 + $0xe0] sm:$0xff]
    %v1108 = vld [vmem:[#allocation5 + $0xe8] sm:$0xff]
    %v1109 = vld [vmem:[#allocation5 + $0xf0] sm:$0xff]
    %v1110 = vld [vmem:[#allocation5 + $0xf8] sm:$0xff]
    %v1111 = vld [vmem:[#allocation5 + $0x100] sm:$0xff]
    %v1112 = vld [vmem:[#allocation5 + $0x108] sm:$0xff]
    %v1113 = vld [vmem:[#allocation5 + $0x110] sm:$0xff]
    %v1114 = vld [vmem:[#allocation5 + $0x118] sm:$0xff]
    %v1115 = vld [vmem:[#allocation5 + $0x120] sm:$0xff]
    %v1116 = vld [vmem:[#allocation5 + $0x128] sm:$0xff]
    %v1117 = vld [vmem:[#allocation5 + $0x130] sm:$0xff]
    %v1118 = vld [vmem:[#allocation5 + $0x138] sm:$0xff]
    %v1119 = vld [vmem:[#allocation5 + $0x140] sm:$0xff]
    %v1120 = vld [vmem:[#allocation5 + $0x148] sm:$0xff]
    %v1121 = vld [vmem:[#allocation5 + $0x150] sm:$0xff]
    %v1122 = vld [vmem:[#allocation5 + $0x158] sm:$0xff]
    %v1123 = vld [vmem:[#allocation5 + $0x160] sm:$0xff]
    %v1124 = vld [vmem:[#allocation5 + $0x168] sm:$0xff]
    %v1125 = vld [vmem:[#allocation5 + $0x170] sm:$0xff]
    %v1126 = vld [vmem:[#allocation5 + $0x178] sm:$0xff]
    %v1127 = vld [vmem:[#allocation5 + $0x180] sm:$0xff]
    %v1128 = vld [vmem:[#allocation5 + $0x188] sm:$0xff]
    %v1129 = vld [vmem:[#allocation5 + $0x190] sm:$0xff]
    %v1130 = vld [vmem:[#allocation5 + $0x198] sm:$0xff]
    %v1131 = vld [vmem:[#allocation5 + $0x1a0] sm:$0xff]
    %v1132 = vld [vmem:[#allocation5 + $0x1a8] sm:$0xff]
    %v1133 = vld [vmem:[#allocation5 + $0x1b0] sm:$0xff]
    %v1134 = vld [vmem:[#allocation5 + $0x1b8] sm:$0xff]
    %v1135 = vld [vmem:[#allocation5 + $0x1c0] sm:$0xff]
    %v1136 = vld [vmem:[#allocation5 + $0x1c8] sm:$0xff]
    %v1137 = vld [vmem:[#allocation5 + $0x1d0] sm:$0xff]
    %v1138 = vld [vmem:[#allocation5 + $0x1d8] sm:$0xff]
    %v1139 = vld [vmem:[#allocation5 + $0x1e0] sm:$0xff]
    %v1140 = vld [vmem:[#allocation5 + $0x1e8] sm:$0xff]
    %v1141 = vld [vmem:[#allocation5 + $0x1f0] sm:$0xff]
    %v1142 = vld [vmem:[#allocation5 + $0x1f8] sm:$0xff]
    %v1143 = vld [vmem:[#allocation5 + $0x200] sm:$0xff]
    %v1144 = vld [vmem:[#allocation5 + $0x208] sm:$0xff]
    %v1145 = vld [vmem:[#allocation5 + $0x210] sm:$0xff]
    %v1146 = vld [vmem:[#allocation5 + $0x218] sm:$0xff]
    %v1147 = vld [vmem:[#allocation5 + $0x220] sm:$0xff]
    %v1148 = vld [vmem:[#allocation5 + $0x228] sm:$0xff]
    %v1149 = vld [vmem:[#allocation5 + $0x230] sm:$0xff]
    %v1150 = vld [vmem:[#allocation5 + $0x238] sm:$0xff]
    %v1151 = vld [vmem:[#allocation5 + $0x240] sm:$0xff]
    %v1152 = vld [vmem:[#allocation5 + $0x248] sm:$0xff]
    %v1153 = vld [vmem:[#allocation5 + $0x250] sm:$0xff]
    %v1154 = vld [vmem:[#allocation5 + $0x258] sm:$0xff]
    %v1155 = vld [vmem:[#allocation5 + $0x260] sm:$0xff]
    %v1156 = vld [vmem:[#allocation5 + $0x268] sm:$0xff]
    %v1157 = vld [vmem:[#allocation5 + $0x270] sm:$0xff]
    %v1158 = vld [vmem:[#allocation5 + $0x278] sm:$0xff]
    %v1159 = vld [vmem:[#allocation5 + $0x280] sm:$0xff]
    %v1160 = vld [vmem:[#allocation5 + $0x288] sm:$0xff]
    %v1161 = vld [vmem:[#allocation5 + $0x290] sm:$0xff]
    %v1162 = vld [vmem:[#allocation5 + $0x298] sm:$0xff]
    %v1163 = vld [vmem:[#allocation5 + $0x2a0] sm:$0xff]
    %v1164 = vld [vmem:[#allocation5 + $0x2a8] sm:$0xff]
    %v1165 = vld [vmem:[#allocation5 + $0x2b0] sm:$0xff]
    %v1166 = vld [vmem:[#allocation5 + $0x2b8] sm:$0xff]
    %v1167 = vld [vmem:[#allocation5 + $0x2c0] sm:$0xff]
    %v1168 = vld [vmem:[#allocation5 + $0x2c8] sm:$0xff]
    %v1169 = vld [vmem:[#allocation5 + $0x2d0] sm:$0xff]
    %v1170 = vld [vmem:[#allocation5 + $0x2d8] sm:$0xff]
    %v1171 = vld [vmem:[#allocation5 + $0x2e0] sm:$0xff]
    %v1172 = vld [vmem:[#allocation5 + $0x2e8] sm:$0xff]
    %v1173 = vld [vmem:[#allocation5 + $0x2f0] sm:$0xff]
    %v1174 = vld [vmem:[#allocation5 + $0x2f8] sm:$0xff]
    %v1175 = vld [vmem:[#allocation5 + $0x300] sm:$0xff]
    %v1176 = vld [vmem:[#allocation5 + $0x308] sm:$0xff]
    %v1177 = vld [vmem:[#allocation5 + $0x310] sm:$0xff]
    %v1178 = vld [vmem:[#allocation5 + $0x318] sm:$0xff]
    %v1179 = vld [vmem:[#allocation5 + $0x320] sm:$0xff]
    %v1180 = vld [vmem:[#allocation5 + $0x328] sm:$0xff]
    %v1181 = vld [vmem:[#allocation5 + $0x330] sm:$0xff]
    %v1182 = vld [vmem:[#allocation5 + $0x338] sm:$0xff]
    %v1183 = vld [vmem:[#allocation5 + $0x340] sm:$0xff]
    %v1184 = vld [vmem:[#allocation5 + $0x348] sm:$0xff]
    %v1185 = vld [vmem:[#allocation5 + $0x350] sm:$0xff]
    %v1186 = vld [vmem:[#allocation5 + $0x358] sm:$0xff]
    %v1187 = vld [vmem:[#allocation5 + $0x360] sm:$0xff]
    %v1188 = vld [vmem:[#allocation5 + $0x368] sm:$0xff]
    %v1189 = vld [vmem:[#allocation5 + $0x370] sm:$0xff]
    %v1190 = vld [vmem:[#allocation5 + $0x378] sm:$0xff]
    %v1191 = vld [vmem:[#allocation5 + $0x380] sm:$0xff]
    %v1192 = vld [vmem:[#allocation5 + $0x388] sm:$0xff]
    %v1193 = vld [vmem:[#allocation5 + $0x390] sm:$0xff]
    %v1194 = vld [vmem:[#allocation5 + $0x398] sm:$0xff]
    %v1195 = vld [vmem:[#allocation5 + $0x3a0] sm:$0xff]
    %v1196 = vld [vmem:[#allocation5 + $0x3a8] sm:$0xff]
    %v1197 = vld [vmem:[#allocation5 + $0x3b0] sm:$0xff]
    %v1198 = vld [vmem:[#allocation5 + $0x3b8] sm:$0xff]
    %v1199 = vld [vmem:[#allocation5 + $0x3c0] sm:$0xff]
    %v1200 = vld [vmem:[#allocation5 + $0x3c8] sm:$0xff]
    %v1201 = vld [vmem:[#allocation5 + $0x3d0] sm:$0xff]
    %v1202 = vld [vmem:[#allocation5 + $0x3d8] sm:$0xff]
    %v1203 = vld [vmem:[#allocation5 + $0x3e0] sm:$0xff]
    %v1204 = vld [vmem:[#allocation5 + $0x3e8] sm:$0xff]
    %v1205 = vld [vmem:[#allocation5 + $0x3f0] sm:$0xff]
    %v1206 = vld [vmem:[#allocation5 + $0x3f8] sm:$0xff]
    %v1207 = vld [vmem:[#allocation5 + $0x400] sm:$0xff]
    %v1208 = vld [vmem:[#allocation5 + $0x408] sm:$0xff]
    %v1209 = vld [vmem:[#allocation5 + $0x410] sm:$0xff]
    %v1210 = vld [vmem:[#allocation5 + $0x418] sm:$0xff]
    %v1211 = vld [vmem:[#allocation5 + $0x420] sm:$0xff]
    %v1212 = vld [vmem:[#allocation5 + $0x428] sm:$0xff]
    %v1213 = vld [vmem:[#allocation5 + $0x430] sm:$0xff]
    %v1214 = vld [vmem:[#allocation5 + $0x438] sm:$0xff]
    %v1215 = vld [vmem:[#allocation5 + $0x440] sm:$0xff]
    %v1216 = vld [vmem:[#allocation5 + $0x448] sm:$0xff]
    %v1217 = vld [vmem:[#allocation5 + $0x450] sm:$0xff]
    %v1218 = vld [vmem:[#allocation5 + $0x458] sm:$0xff]
    %v1219 = vld [vmem:[#allocation5 + $0x460] sm:$0xff]
    %v1220 = vld [vmem:[#allocation5 + $0x468] sm:$0xff]
    %v1221 = vld [vmem:[#allocation5 + $0x470] sm:$0xff]
    %v1222 = vld [vmem:[#allocation5 + $0x478] sm:$0xff]
    %v1223 = vld [vmem:[#allocation5 + $0x480] sm:$0xff]
    %v1224 = vld [vmem:[#allocation5 + $0x488] sm:$0xff]
    %v1225 = vld [vmem:[#allocation5 + $0x490] sm:$0xff]
    %v1226 = vld [vmem:[#allocation5 + $0x498] sm:$0xff]
    %v1227 = vld [vmem:[#allocation5 + $0x4a0] sm:$0xff]
    %v1228 = vld [vmem:[#allocation5 + $0x4a8] sm:$0xff]
    %v1229 = vld [vmem:[#allocation5 + $0x4b0] sm:$0xff]
    %v1230 = vld [vmem:[#allocation5 + $0x4b8] sm:$0xff]
    %v1231 = vld [vmem:[#allocation5 + $0x4c0] sm:$0xff]
    %v1232 = vld [vmem:[#allocation5 + $0x4c8] sm:$0xff]
    %v1233 = vld [vmem:[#allocation5 + $0x4d0] sm:$0xff]
    %v1234 = vld [vmem:[#allocation5 + $0x4d8] sm:$0xff]
    %v1235 = vld [vmem:[#allocation5 + $0x4e0] sm:$0xff]
    %v1236 = vld [vmem:[#allocation5 + $0x4e8] sm:$0xff]
    %v1237 = vld [vmem:[#allocation5 + $0x4f0] sm:$0xff]
    %v1238 = vld [vmem:[#allocation5 + $0x4f8] sm:$0xff]
    %v1239 = vld [vmem:[#allocation5 + $0x500] sm:$0xff]
    %v1240 = vld [vmem:[#allocation5 + $0x508] sm:$0xff]
    %v1241 = vld [vmem:[#allocation5 + $0x510] sm:$0xff]
    %v1242 = vld [vmem:[#allocation5 + $0x518] sm:$0xff]
    %v1243 = vld [vmem:[#allocation5 + $0x520] sm:$0xff]
    %v1244 = vld [vmem:[#allocation5 + $0x528] sm:$0xff]
    %v1245 = vld [vmem:[#allocation5 + $0x530] sm:$0xff]
    %v1246 = vld [vmem:[#allocation5 + $0x538] sm:$0xff]
    %v1247 = vld [vmem:[#allocation5 + $0x540] sm:$0xff]
    %v1248 = vld [vmem:[#allocation5 + $0x548] sm:$0xff]
    %v1249 = vld [vmem:[#allocation5 + $0x550] sm:$0xff]
    %v1250 = vld [vmem:[#allocation5 + $0x558] sm:$0xff]
    %v1251 = vld [vmem:[#allocation5 + $0x560] sm:$0xff]
    %v1252 = vld [vmem:[#allocation5 + $0x568] sm:$0xff]
    %v1253 = vld [vmem:[#allocation5 + $0x570] sm:$0xff]
    %v1254 = vld [vmem:[#allocation5 + $0x578] sm:$0xff]
    %v1255 = vld [vmem:[#allocation5 + $0x580] sm:$0xff]
    %v1256 = vld [vmem:[#allocation5 + $0x588] sm:$0xff]
    %v1257 = vld [vmem:[#allocation5 + $0x590] sm:$0xff]
    %v1258 = vld [vmem:[#allocation5 + $0x598] sm:$0xff]
    %v1259 = vld [vmem:[#allocation5 + $0x5a0] sm:$0xff]
    %v1260 = vld [vmem:[#allocation5 + $0x5a8] sm:$0xff]
    %v1261 = vld [vmem:[#allocation5 + $0x5b0] sm:$0xff]
    %v1262 = vld [vmem:[#allocation5 + $0x5b8] sm:$0xff]
    %v1263 = vld [vmem:[#allocation5 + $0x5c0] sm:$0xff]
    %v1264 = vld [vmem:[#allocation5 + $0x5c8] sm:$0xff]
    %v1265 = vld [vmem:[#allocation5 + $0x5d0] sm:$0xff]
    %v1266 = vld [vmem:[#allocation5 + $0x5d8] sm:$0xff]
    %v1267 = vld [vmem:[#allocation5 + $0x5e0] sm:$0xff]
    %v1268 = vld [vmem:[#allocation5 + $0x5e8] sm:$0xff]
    %v1269 = vld [vmem:[#allocation5 + $0x5f0] sm:$0xff]
    %v1270 = vld [vmem:[#allocation5 + $0x5f8] sm:$0xff]
    %v1271 = vld [vmem:[#allocation5 + $0x600] sm:$0xff]
    %v1272 = vld [vmem:[#allocation5 + $0x608] sm:$0xff]
    %v1273 = vld [vmem:[#allocation5 + $0x610] sm:$0xff]
    %v1274 = vld [vmem:[#allocation5 + $0x618] sm:$0xff]
    %v1275 = vld [vmem:[#allocation5 + $0x620] sm:$0xff]
    %v1276 = vld [vmem:[#allocation5 + $0x628] sm:$0xff]
    %v1277 = vld [vmem:[#allocation5 + $0x630] sm:$0xff]
    %v1278 = vld [vmem:[#allocation5 + $0x638] sm:$0xff]
    %v1279 = vld [vmem:[#allocation5 + $0x640] sm:$0xff]
    %v1280 = vld [vmem:[#allocation5 + $0x648] sm:$0xff]
    %v1281 = vld [vmem:[#allocation5 + $0x650] sm:$0xff]
    %v1282 = vld [vmem:[#allocation5 + $0x658] sm:$0xff]
    %v1283 = vld [vmem:[#allocation5 + $0x660] sm:$0xff]
    %v1284 = vld [vmem:[#allocation5 + $0x668] sm:$0xff]
    %v1285 = vld [vmem:[#allocation5 + $0x670] sm:$0xff]
    %v1286 = vld [vmem:[#allocation5 + $0x678] sm:$0xff]
    %v1287 = vld [vmem:[#allocation5 + $0x680] sm:$0xff]
    %v1288 = vld [vmem:[#allocation5 + $0x688] sm:$0xff]
    %v1289 = vld [vmem:[#allocation5 + $0x690] sm:$0xff]
    %v1290 = vld [vmem:[#allocation5 + $0x698] sm:$0xff]
    %v1291 = vld [vmem:[#allocation5 + $0x6a0] sm:$0xff]
    %v1292 = vld [vmem:[#allocation5 + $0x6a8] sm:$0xff]
    %v1293 = vld [vmem:[#allocation5 + $0x6b0] sm:$0xff]
    %v1294 = vld [vmem:[#allocation5 + $0x6b8] sm:$0xff]
    %v1295 = vld [vmem:[#allocation5 + $0x6c0] sm:$0xff]
    %v1296 = vld [vmem:[#allocation5 + $0x6c8] sm:$0xff]
    %v1297 = vld [vmem:[#allocation5 + $0x6d0] sm:$0xff]
    %v1298 = vld [vmem:[#allocation5 + $0x6d8] sm:$0xff]
    %v1299 = vld [vmem:[#allocation5 + $0x6e0] sm:$0xff]
    %v1300 = vld [vmem:[#allocation5 + $0x6e8] sm:$0xff]
    %v1301 = vld [vmem:[#allocation5 + $0x6f0] sm:$0xff]
    %v1302 = vld [vmem:[#allocation5 + $0x6f8] sm:$0xff]
    %v1303 = vld [vmem:[#allocation5 + $0x700] sm:$0xff]
    %v1304 = vld [vmem:[#allocation5 + $0x708] sm:$0xff]
    %v1305 = vld [vmem:[#allocation5 + $0x710] sm:$0xff]
    %v1306 = vld [vmem:[#allocation5 + $0x718] sm:$0xff]
    %v1307 = vld [vmem:[#allocation5 + $0x720] sm:$0xff]
    %v1308 = vld [vmem:[#allocation5 + $0x728] sm:$0xff]
    %v1309 = vld [vmem:[#allocation5 + $0x730] sm:$0xff]
    %v1310 = vld [vmem:[#allocation5 + $0x738] sm:$0xff]
    %v1311 = vld [vmem:[#allocation5 + $0x740] sm:$0xff]
    %v1312 = vld [vmem:[#allocation5 + $0x748] sm:$0xff]
    %v1313 = vld [vmem:[#allocation5 + $0x750] sm:$0xff]
    %v1314 = vld [vmem:[#allocation5 + $0x758] sm:$0xff]
    %v1315 = vld [vmem:[#allocation5 + $0x760] sm:$0xff]
    %v1316 = vld [vmem:[#allocation5 + $0x768] sm:$0xff]
    %v1317 = vld [vmem:[#allocation5 + $0x770] sm:$0xff]
    %v1318 = vld [vmem:[#allocation5 + $0x778] sm:$0xff]
    %v1319 = vld [vmem:[#allocation5 + $0x780] sm:$0xff]
    %v1320 = vld [vmem:[#allocation5 + $0x788] sm:$0xff]
    %v1321 = vld [vmem:[#allocation5 + $0x790] sm:$0xff]
    %v1322 = vld [vmem:[#allocation5 + $0x798] sm:$0xff]
    %v1323 = vld [vmem:[#allocation5 + $0x7a0] sm:$0xff]
    %v1324 = vld [vmem:[#allocation5 + $0x7a8] sm:$0xff]
    %v1325 = vld [vmem:[#allocation5 + $0x7b0] sm:$0xff]
    %v1326 = vld [vmem:[#allocation5 + $0x7b8] sm:$0xff]
    %v1327 = vld [vmem:[#allocation5 + $0x7c0] sm:$0xff]
    %v1328 = vld [vmem:[#allocation5 + $0x7c8] sm:$0xff]
    %v1329 = vld [vmem:[#allocation5 + $0x7d0] sm:$0xff]
    %v1330 = vld [vmem:[#allocation5 + $0x7d8] sm:$0xff]
    %v1331 = vld [vmem:[#allocation5 + $0x7e0] sm:$0xff]
    %v1332 = vld [vmem:[#allocation5 + $0x7e8] sm:$0xff]
    %v1333 = vld [vmem:[#allocation5 + $0x7f0] sm:$0xff]
    %v1334 = vld [vmem:[#allocation5 + $0x7f8] sm:$0xff]
    %v1335 = vld [vmem:[%s4] sm:$0xf]
    %v1337 = vlaneseq
    %v1338 = vshrl.u32 %v1337, 7
    %v1339 = vsub.s32 0, %v1338
    %v1340 = vrot.slane %v1335, %v1339
    %v1341 = vlaneseq
    %v1342 = vshrl.u32 %v1341, 7
    %v1343 = vsub.s32 1, %v1342
    %v1344 = vrot.slane %v1335, %v1343
    %v1345 = vlaneseq
    %v1346 = vshrl.u32 %v1345, 7
    %v1347 = vsub.s32 2, %v1346
    %v1348 = vrot.slane %v1335, %v1347
    %v1349 = vlaneseq
    %v1350 = vshrl.u32 %v1349, 7
    %v1351 = vsub.s32 3, %v1350
    %v1352 = vrot.slane %v1335, %v1351
    %v1613 = vunpack.c.l.b16 %v1079
    %v1614 = vunpack.c.h.b16 %v1079
    %v1615 = vunpack.c.l.b16 %v1080
    %v1616 = vunpack.c.h.b16 %v1080
    %v1617 = vunpack.c.l.b16 %v1081
    %v1618 = vunpack.c.h.b16 %v1081
    %v1619 = vunpack.c.l.b16 %v1082
    %v1620 = vunpack.c.h.b16 %v1082
    %v1621 = vunpack.c.l.b16 %v1083
    %v1622 = vunpack.c.h.b16 %v1083
    %v1623 = vunpack.c.l.b16 %v1084
    %v1624 = vunpack.c.h.b16 %v1084
    %v1625 = vunpack.c.l.b16 %v1085
    %v1626 = vunpack.c.h.b16 %v1085
    %v1627 = vunpack.c.l.b16 %v1086
    %v1628 = vunpack.c.h.b16 %v1086
    %v1629 = vunpack.c.l.b16 %v1087
    %v1630 = vunpack.c.h.b16 %v1087
    %v1631 = vunpack.c.l.b16 %v1088
    %v1632 = vunpack.c.h.b16 %v1088
    %v1633 = vunpack.c.l.b16 %v1089
    %v1634 = vunpack.c.h.b16 %v1089
    %v1635 = vunpack.c.l.b16 %v1090
    %v1636 = vunpack.c.h.b16 %v1090
    %v1637 = vunpack.c.l.b16 %v1091
    %v1638 = vunpack.c.h.b16 %v1091
    %v1639 = vunpack.c.l.b16 %v1092
    %v1640 = vunpack.c.h.b16 %v1092
    %v1641 = vunpack.c.l.b16 %v1093
    %v1642 = vunpack.c.h.b16 %v1093
    %v1643 = vunpack.c.l.b16 %v1094
    %v1644 = vunpack.c.h.b16 %v1094
    %v1645 = vunpack.c.l.b16 %v1095
    %v1646 = vunpack.c.h.b16 %v1095
    %v1647 = vunpack.c.l.b16 %v1096
    %v1648 = vunpack.c.h.b16 %v1096
    %v1649 = vunpack.c.l.b16 %v1097
    %v1650 = vunpack.c.h.b16 %v1097
    %v1651 = vunpack.c.l.b16 %v1098
    %v1652 = vunpack.c.h.b16 %v1098
    %v1653 = vunpack.c.l.b16 %v1099
    %v1654 = vunpack.c.h.b16 %v1099
    %v1655 = vunpack.c.l.b16 %v1100
    %v1656 = vunpack.c.h.b16 %v1100
    %v1657 = vunpack.c.l.b16 %v1101
    %v1658 = vunpack.c.h.b16 %v1101
    %v1659 = vunpack.c.l.b16 %v1102
    %v1660 = vunpack.c.h.b16 %v1102
    %v1661 = vunpack.c.l.b16 %v1103
    %v1662 = vunpack.c.h.b16 %v1103
    %v1663 = vunpack.c.l.b16 %v1104
    %v1664 = vunpack.c.h.b16 %v1104
    %v1665 = vunpack.c.l.b16 %v1105
    %v1666 = vunpack.c.h.b16 %v1105
    %v1667 = vunpack.c.l.b16 %v1106
    %v1668 = vunpack.c.h.b16 %v1106
    %v1669 = vunpack.c.l.b16 %v1107
    %v1670 = vunpack.c.h.b16 %v1107
    %v1671 = vunpack.c.l.b16 %v1108
    %v1672 = vunpack.c.h.b16 %v1108
    %v1673 = vunpack.c.l.b16 %v1109
    %v1674 = vunpack.c.h.b16 %v1109
    %v1675 = vunpack.c.l.b16 %v1110
    %v1676 = vunpack.c.h.b16 %v1110
    %v1677 = vunpack.c.l.b16 %v1111
    %v1678 = vunpack.c.h.b16 %v1111
    %v1679 = vunpack.c.l.b16 %v1112
    %v1680 = vunpack.c.h.b16 %v1112
    %v1681 = vunpack.c.l.b16 %v1113
    %v1682 = vunpack.c.h.b16 %v1113
    %v1683 = vunpack.c.l.b16 %v1114
    %v1684 = vunpack.c.h.b16 %v1114
    %v1685 = vunpack.c.l.b16 %v1115
    %v1686 = vunpack.c.h.b16 %v1115
    %v1687 = vunpack.c.l.b16 %v1116
    %v1688 = vunpack.c.h.b16 %v1116
    %v1689 = vunpack.c.l.b16 %v1117
    %v1690 = vunpack.c.h.b16 %v1117
    %v1691 = vunpack.c.l.b16 %v1118
    %v1692 = vunpack.c.h.b16 %v1118
    %v1693 = vunpack.c.l.b16 %v1119
    %v1694 = vunpack.c.h.b16 %v1119
    %v1695 = vunpack.c.l.b16 %v1120
    %v1696 = vunpack.c.h.b16 %v1120
    %v1697 = vunpack.c.l.b16 %v1121
    %v1698 = vunpack.c.h.b16 %v1121
    %v1699 = vunpack.c.l.b16 %v1122
    %v1700 = vunpack.c.h.b16 %v1122
    %v1701 = vunpack.c.l.b16 %v1123
    %v1702 = vunpack.c.h.b16 %v1123
    %v1703 = vunpack.c.l.b16 %v1124
    %v1704 = vunpack.c.h.b16 %v1124
    %v1705 = vunpack.c.l.b16 %v1125
    %v1706 = vunpack.c.h.b16 %v1125
    %v1707 = vunpack.c.l.b16 %v1126
    %v1708 = vunpack.c.h.b16 %v1126
    %v1709 = vunpack.c.l.b16 %v1127
    %v1710 = vunpack.c.h.b16 %v1127
    %v1711 = vunpack.c.l.b16 %v1128
    %v1712 = vunpack.c.h.b16 %v1128
    %v1713 = vunpack.c.l.b16 %v1129
    %v1714 = vunpack.c.h.b16 %v1129
    %v1715 = vunpack.c.l.b16 %v1130
    %v1716 = vunpack.c.h.b16 %v1130
    %v1717 = vunpack.c.l.b16 %v1131
    %v1718 = vunpack.c.h.b16 %v1131
    %v1719 = vunpack.c.l.b16 %v1132
    %v1720 = vunpack.c.h.b16 %v1132
    %v1721 = vunpack.c.l.b16 %v1133
    %v1722 = vunpack.c.h.b16 %v1133
    %v1723 = vunpack.c.l.b16 %v1134
    %v1724 = vunpack.c.h.b16 %v1134
    %v1725 = vunpack.c.l.b16 %v1135
    %v1726 = vunpack.c.h.b16 %v1135
    %v1727 = vunpack.c.l.b16 %v1136
    %v1728 = vunpack.c.h.b16 %v1136
    %v1729 = vunpack.c.l.b16 %v1137
    %v1730 = vunpack.c.h.b16 %v1137
    %v1731 = vunpack.c.l.b16 %v1138
    %v1732 = vunpack.c.h.b16 %v1138
    %v1733 = vunpack.c.l.b16 %v1139
    %v1734 = vunpack.c.h.b16 %v1139
    %v1735 = vunpack.c.l.b16 %v1140
    %v1736 = vunpack.c.h.b16 %v1140
    %v1737 = vunpack.c.l.b16 %v1141
    %v1738 = vunpack.c.h.b16 %v1141
    %v1739 = vunpack.c.l.b16 %v1142
    %v1740 = vunpack.c.h.b16 %v1142
    %v1741 = vunpack.c.l.b16 %v1143
    %v1742 = vunpack.c.h.b16 %v1143
    %v1743 = vunpack.c.l.b16 %v1144
    %v1744 = vunpack.c.h.b16 %v1144
    %v1745 = vunpack.c.l.b16 %v1145
    %v1746 = vunpack.c.h.b16 %v1145
    %v1747 = vunpack.c.l.b16 %v1146
    %v1748 = vunpack.c.h.b16 %v1146
    %v1749 = vunpack.c.l.b16 %v1147
    %v1750 = vunpack.c.h.b16 %v1147
    %v1751 = vunpack.c.l.b16 %v1148
    %v1752 = vunpack.c.h.b16 %v1148
    %v1753 = vunpack.c.l.b16 %v1149
    %v1754 = vunpack.c.h.b16 %v1149
    %v1755 = vunpack.c.l.b16 %v1150
    %v1756 = vunpack.c.h.b16 %v1150
    %v1757 = vunpack.c.l.b16 %v1151
    %v1758 = vunpack.c.h.b16 %v1151
    %v1759 = vunpack.c.l.b16 %v1152
    %v1760 = vunpack.c.h.b16 %v1152
    %v1761 = vunpack.c.l.b16 %v1153
    %v1762 = vunpack.c.h.b16 %v1153
    %v1763 = vunpack.c.l.b16 %v1154
    %v1764 = vunpack.c.h.b16 %v1154
    %v1765 = vunpack.c.l.b16 %v1155
    %v1766 = vunpack.c.h.b16 %v1155
    %v1767 = vunpack.c.l.b16 %v1156
    %v1768 = vunpack.c.h.b16 %v1156
    %v1769 = vunpack.c.l.b16 %v1157
    %v1770 = vunpack.c.h.b16 %v1157
    %v1771 = vunpack.c.l.b16 %v1158
    %v1772 = vunpack.c.h.b16 %v1158
    %v1773 = vunpack.c.l.b16 %v1159
    %v1774 = vunpack.c.h.b16 %v1159
    %v1775 = vunpack.c.l.b16 %v1160
    %v1776 = vunpack.c.h.b16 %v1160
    %v1777 = vunpack.c.l.b16 %v1161
    %v1778 = vunpack.c.h.b16 %v1161
    %v1779 = vunpack.c.l.b16 %v1162
    %v1780 = vunpack.c.h.b16 %v1162
    %v1781 = vunpack.c.l.b16 %v1163
    %v1782 = vunpack.c.h.b16 %v1163
    %v1783 = vunpack.c.l.b16 %v1164
    %v1784 = vunpack.c.h.b16 %v1164
    %v1785 = vunpack.c.l.b16 %v1165
    %v1786 = vunpack.c.h.b16 %v1165
    %v1787 = vunpack.c.l.b16 %v1166
    %v1788 = vunpack.c.h.b16 %v1166
    %v1789 = vunpack.c.l.b16 %v1167
    %v1790 = vunpack.c.h.b16 %v1167
    %v1791 = vunpack.c.l.b16 %v1168
    %v1792 = vunpack.c.h.b16 %v1168
    %v1793 = vunpack.c.l.b16 %v1169
    %v1794 = vunpack.c.h.b16 %v1169
    %v1795 = vunpack.c.l.b16 %v1170
    %v1796 = vunpack.c.h.b16 %v1170
    %v1797 = vunpack.c.l.b16 %v1171
    %v1798 = vunpack.c.h.b16 %v1171
    %v1799 = vunpack.c.l.b16 %v1172
    %v1800 = vunpack.c.h.b16 %v1172
    %v1801 = vunpack.c.l.b16 %v1173
    %v1802 = vunpack.c.h.b16 %v1173
    %v1803 = vunpack.c.l.b16 %v1174
    %v1804 = vunpack.c.h.b16 %v1174
    %v1805 = vunpack.c.l.b16 %v1175
    %v1806 = vunpack.c.h.b16 %v1175
    %v1807 = vunpack.c.l.b16 %v1176
    %v1808 = vunpack.c.h.b16 %v1176
    %v1809 = vunpack.c.l.b16 %v1177
    %v1810 = vunpack.c.h.b16 %v1177
    %v1811 = vunpack.c.l.b16 %v1178
    %v1812 = vunpack.c.h.b16 %v1178
    %v1813 = vunpack.c.l.b16 %v1179
    %v1814 = vunpack.c.h.b16 %v1179
    %v1815 = vunpack.c.l.b16 %v1180
    %v1816 = vunpack.c.h.b16 %v1180
    %v1817 = vunpack.c.l.b16 %v1181
    %v1818 = vunpack.c.h.b16 %v1181
    %v1819 = vunpack.c.l.b16 %v1182
    %v1820 = vunpack.c.h.b16 %v1182
    %v1821 = vunpack.c.l.b16 %v1183
    %v1822 = vunpack.c.h.b16 %v1183
    %v1823 = vunpack.c.l.b16 %v1184
    %v1824 = vunpack.c.h.b16 %v1184
    %v1825 = vunpack.c.l.b16 %v1185
    %v1826 = vunpack.c.h.b16 %v1185
    %v1827 = vunpack.c.l.b16 %v1186
    %v1828 = vunpack.c.h.b16 %v1186
    %v1829 = vunpack.c.l.b16 %v1187
    %v1830 = vunpack.c.h.b16 %v1187
    %v1831 = vunpack.c.l.b16 %v1188
    %v1832 = vunpack.c.h.b16 %v1188
    %v1833 = vunpack.c.l.b16 %v1189
    %v1834 = vunpack.c.h.b16 %v1189
    %v1835 = vunpack.c.l.b16 %v1190
    %v1836 = vunpack.c.h.b16 %v1190
    %v1837 = vunpack.c.l.b16 %v1191
    %v1838 = vunpack.c.h.b16 %v1191
    %v1839 = vunpack.c.l.b16 %v1192
    %v1840 = vunpack.c.h.b16 %v1192
    %v1841 = vunpack.c.l.b16 %v1193
    %v1842 = vunpack.c.h.b16 %v1193
    %v1843 = vunpack.c.l.b16 %v1194
    %v1844 = vunpack.c.h.b16 %v1194
    %v1845 = vunpack.c.l.b16 %v1195
    %v1846 = vunpack.c.h.b16 %v1195
    %v1847 = vunpack.c.l.b16 %v1196
    %v1848 = vunpack.c.h.b16 %v1196
    %v1849 = vunpack.c.l.b16 %v1197
    %v1850 = vunpack.c.h.b16 %v1197
    %v1851 = vunpack.c.l.b16 %v1198
    %v1852 = vunpack.c.h.b16 %v1198
    %v1853 = vunpack.c.l.b16 %v1199
    %v1854 = vunpack.c.h.b16 %v1199
    %v1855 = vunpack.c.l.b16 %v1200
    %v1856 = vunpack.c.h.b16 %v1200
    %v1857 = vunpack.c.l.b16 %v1201
    %v1858 = vunpack.c.h.b16 %v1201
    %v1859 = vunpack.c.l.b16 %v1202
    %v1860 = vunpack.c.h.b16 %v1202
    %v1861 = vunpack.c.l.b16 %v1203
    %v1862 = vunpack.c.h.b16 %v1203
    %v1863 = vunpack.c.l.b16 %v1204
    %v1864 = vunpack.c.h.b16 %v1204
    %v1865 = vunpack.c.l.b16 %v1205
    %v1866 = vunpack.c.h.b16 %v1205
    %v1867 = vunpack.c.l.b16 %v1206
    %v1868 = vunpack.c.h.b16 %v1206
    %v1869 = vunpack.c.l.b16 %v1207
    %v1870 = vunpack.c.h.b16 %v1207
    %v1871 = vunpack.c.l.b16 %v1208
    %v1872 = vunpack.c.h.b16 %v1208
    %v1873 = vunpack.c.l.b16 %v1209
    %v1874 = vunpack.c.h.b16 %v1209
    %v1875 = vunpack.c.l.b16 %v1210
    %v1876 = vunpack.c.h.b16 %v1210
    %v1877 = vunpack.c.l.b16 %v1211
    %v1878 = vunpack.c.h.b16 %v1211
    %v1879 = vunpack.c.l.b16 %v1212
    %v1880 = vunpack.c.h.b16 %v1212
    %v1881 = vunpack.c.l.b16 %v1213
    %v1882 = vunpack.c.h.b16 %v1213
    %v1883 = vunpack.c.l.b16 %v1214
    %v1884 = vunpack.c.h.b16 %v1214
    %v1885 = vunpack.c.l.b16 %v1215
    %v1886 = vunpack.c.h.b16 %v1215
    %v1887 = vunpack.c.l.b16 %v1216
    %v1888 = vunpack.c.h.b16 %v1216
    %v1889 = vunpack.c.l.b16 %v1217
    %v1890 = vunpack.c.h.b16 %v1217
    %v1891 = vunpack.c.l.b16 %v1218
    %v1892 = vunpack.c.h.b16 %v1218
    %v1893 = vunpack.c.l.b16 %v1219
    %v1894 = vunpack.c.h.b16 %v1219
    %v1895 = vunpack.c.l.b16 %v1220
    %v1896 = vunpack.c.h.b16 %v1220
    %v1897 = vunpack.c.l.b16 %v1221
    %v1898 = vunpack.c.h.b16 %v1221
    %v1899 = vunpack.c.l.b16 %v1222
    %v1900 = vunpack.c.h.b16 %v1222
    %v1901 = vunpack.c.l.b16 %v1223
    %v1902 = vunpack.c.h.b16 %v1223
    %v1903 = vunpack.c.l.b16 %v1224
    %v1904 = vunpack.c.h.b16 %v1224
    %v1905 = vunpack.c.l.b16 %v1225
    %v1906 = vunpack.c.h.b16 %v1225
    %v1907 = vunpack.c.l.b16 %v1226
    %v1908 = vunpack.c.h.b16 %v1226
    %v1909 = vunpack.c.l.b16 %v1227
    %v1910 = vunpack.c.h.b16 %v1227
    %v1911 = vunpack.c.l.b16 %v1228
    %v1912 = vunpack.c.h.b16 %v1228
    %v1913 = vunpack.c.l.b16 %v1229
    %v1914 = vunpack.c.h.b16 %v1229
    %v1915 = vunpack.c.l.b16 %v1230
    %v1916 = vunpack.c.h.b16 %v1230
    %v1917 = vunpack.c.l.b16 %v1231
    %v1918 = vunpack.c.h.b16 %v1231
    %v1919 = vunpack.c.l.b16 %v1232
    %v1920 = vunpack.c.h.b16 %v1232
    %v1921 = vunpack.c.l.b16 %v1233
    %v1922 = vunpack.c.h.b16 %v1233
    %v1923 = vunpack.c.l.b16 %v1234
    %v1924 = vunpack.c.h.b16 %v1234
    %v1925 = vunpack.c.l.b16 %v1235
    %v1926 = vunpack.c.h.b16 %v1235
    %v1927 = vunpack.c.l.b16 %v1236
    %v1928 = vunpack.c.h.b16 %v1236
    %v1929 = vunpack.c.l.b16 %v1237
    %v1930 = vunpack.c.h.b16 %v1237
    %v1931 = vunpack.c.l.b16 %v1238
    %v1932 = vunpack.c.h.b16 %v1238
    %v1933 = vunpack.c.l.b16 %v1239
    %v1934 = vunpack.c.h.b16 %v1239
    %v1935 = vunpack.c.l.b16 %v1240
    %v1936 = vunpack.c.h.b16 %v1240
    %v1937 = vunpack.c.l.b16 %v1241
    %v1938 = vunpack.c.h.b16 %v1241
    %v1939 = vunpack.c.l.b16 %v1242
    %v1940 = vunpack.c.h.b16 %v1242
    %v1941 = vunpack.c.l.b16 %v1243
    %v1942 = vunpack.c.h.b16 %v1243
    %v1943 = vunpack.c.l.b16 %v1244
    %v1944 = vunpack.c.h.b16 %v1244
    %v1945 = vunpack.c.l.b16 %v1245
    %v1946 = vunpack.c.h.b16 %v1245
    %v1947 = vunpack.c.l.b16 %v1246
    %v1948 = vunpack.c.h.b16 %v1246
    %v1949 = vunpack.c.l.b16 %v1247
    %v1950 = vunpack.c.h.b16 %v1247
    %v1951 = vunpack.c.l.b16 %v1248
    %v1952 = vunpack.c.h.b16 %v1248
    %v1953 = vunpack.c.l.b16 %v1249
    %v1954 = vunpack.c.h.b16 %v1249
    %v1955 = vunpack.c.l.b16 %v1250
    %v1956 = vunpack.c.h.b16 %v1250
    %v1957 = vunpack.c.l.b16 %v1251
    %v1958 = vunpack.c.h.b16 %v1251
    %v1959 = vunpack.c.l.b16 %v1252
    %v1960 = vunpack.c.h.b16 %v1252
    %v1961 = vunpack.c.l.b16 %v1253
    %v1962 = vunpack.c.h.b16 %v1253
    %v1963 = vunpack.c.l.b16 %v1254
    %v1964 = vunpack.c.h.b16 %v1254
    %v1965 = vunpack.c.l.b16 %v1255
    %v1966 = vunpack.c.h.b16 %v1255
    %v1967 = vunpack.c.l.b16 %v1256
    %v1968 = vunpack.c.h.b16 %v1256
    %v1969 = vunpack.c.l.b16 %v1257
    %v1970 = vunpack.c.h.b16 %v1257
    %v1971 = vunpack.c.l.b16 %v1258
    %v1972 = vunpack.c.h.b16 %v1258
    %v1973 = vunpack.c.l.b16 %v1259
    %v1974 = vunpack.c.h.b16 %v1259
    %v1975 = vunpack.c.l.b16 %v1260
    %v1976 = vunpack.c.h.b16 %v1260
    %v1977 = vunpack.c.l.b16 %v1261
    %v1978 = vunpack.c.h.b16 %v1261
    %v1979 = vunpack.c.l.b16 %v1262
    %v1980 = vunpack.c.h.b16 %v1262
    %v1981 = vunpack.c.l.b16 %v1263
    %v1982 = vunpack.c.h.b16 %v1263
    %v1983 = vunpack.c.l.b16 %v1264
    %v1984 = vunpack.c.h.b16 %v1264
    %v1985 = vunpack.c.l.b16 %v1265
    %v1986 = vunpack.c.h.b16 %v1265
    %v1987 = vunpack.c.l.b16 %v1266
    %v1988 = vunpack.c.h.b16 %v1266
    %v1989 = vunpack.c.l.b16 %v1267
    %v1990 = vunpack.c.h.b16 %v1267
    %v1991 = vunpack.c.l.b16 %v1268
    %v1992 = vunpack.c.h.b16 %v1268
    %v1993 = vunpack.c.l.b16 %v1269
    %v1994 = vunpack.c.h.b16 %v1269
    %v1995 = vunpack.c.l.b16 %v1270
    %v1996 = vunpack.c.h.b16 %v1270
    %v1997 = vunpack.c.l.b16 %v1271
    %v1998 = vunpack.c.h.b16 %v1271
    %v1999 = vunpack.c.l.b16 %v1272
    %v2000 = vunpack.c.h.b16 %v1272
    %v2001 = vunpack.c.l.b16 %v1273
    %v2002 = vunpack.c.h.b16 %v1273
    %v2003 = vunpack.c.l.b16 %v1274
    %v2004 = vunpack.c.h.b16 %v1274
    %v2005 = vunpack.c.l.b16 %v1275
    %v2006 = vunpack.c.h.b16 %v1275
    %v2007 = vunpack.c.l.b16 %v1276
    %v2008 = vunpack.c.h.b16 %v1276
    %v2009 = vunpack.c.l.b16 %v1277
    %v2010 = vunpack.c.h.b16 %v1277
    %v2011 = vunpack.c.l.b16 %v1278
    %v2012 = vunpack.c.h.b16 %v1278
    %v2013 = vunpack.c.l.b16 %v1279
    %v2014 = vunpack.c.h.b16 %v1279
    %v2015 = vunpack.c.l.b16 %v1280
    %v2016 = vunpack.c.h.b16 %v1280
    %v2017 = vunpack.c.l.b16 %v1281
    %v2018 = vunpack.c.h.b16 %v1281
    %v2019 = vunpack.c.l.b16 %v1282
    %v2020 = vunpack.c.h.b16 %v1282
    %v2021 = vunpack.c.l.b16 %v1283
    %v2022 = vunpack.c.h.b16 %v1283
    %v2023 = vunpack.c.l.b16 %v1284
    %v2024 = vunpack.c.h.b16 %v1284
    %v2025 = vunpack.c.l.b16 %v1285
    %v2026 = vunpack.c.h.b16 %v1285
    %v2027 = vunpack.c.l.b16 %v1286
    %v2028 = vunpack.c.h.b16 %v1286
    %v2029 = vunpack.c.l.b16 %v1287
    %v2030 = vunpack.c.h.b16 %v1287
    %v2031 = vunpack.c.l.b16 %v1288
    %v2032 = vunpack.c.h.b16 %v1288
    %v2033 = vunpack.c.l.b16 %v1289
    %v2034 = vunpack.c.h.b16 %v1289
    %v2035 = vunpack.c.l.b16 %v1290
    %v2036 = vunpack.c.h.b16 %v1290
    %v2037 = vunpack.c.l.b16 %v1291
    %v2038 = vunpack.c.h.b16 %v1291
    %v2039 = vunpack.c.l.b16 %v1292
    %v2040 = vunpack.c.h.b16 %v1292
    %v2041 = vunpack.c.l.b16 %v1293
    %v2042 = vunpack.c.h.b16 %v1293
    %v2043 = vunpack.c.l.b16 %v1294
    %v2044 = vunpack.c.h.b16 %v1294
    %v2045 = vunpack.c.l.b16 %v1295
    %v2046 = vunpack.c.h.b16 %v1295
    %v2047 = vunpack.c.l.b16 %v1296
    %v2048 = vunpack.c.h.b16 %v1296
    %v2049 = vunpack.c.l.b16 %v1297
    %v2050 = vunpack.c.h.b16 %v1297
    %v2051 = vunpack.c.l.b16 %v1298
    %v2052 = vunpack.c.h.b16 %v1298
    %v2053 = vunpack.c.l.b16 %v1299
    %v2054 = vunpack.c.h.b16 %v1299
    %v2055 = vunpack.c.l.b16 %v1300
    %v2056 = vunpack.c.h.b16 %v1300
    %v2057 = vunpack.c.l.b16 %v1301
    %v2058 = vunpack.c.h.b16 %v1301
    %v2059 = vunpack.c.l.b16 %v1302
    %v2060 = vunpack.c.h.b16 %v1302
    %v2061 = vunpack.c.l.b16 %v1303
    %v2062 = vunpack.c.h.b16 %v1303
    %v2063 = vunpack.c.l.b16 %v1304
    %v2064 = vunpack.c.h.b16 %v1304
    %v2065 = vunpack.c.l.b16 %v1305
    %v2066 = vunpack.c.h.b16 %v1305
    %v2067 = vunpack.c.l.b16 %v1306
    %v2068 = vunpack.c.h.b16 %v1306
    %v2069 = vunpack.c.l.b16 %v1307
    %v2070 = vunpack.c.h.b16 %v1307
    %v2071 = vunpack.c.l.b16 %v1308
    %v2072 = vunpack.c.h.b16 %v1308
    %v2073 = vunpack.c.l.b16 %v1309
    %v2074 = vunpack.c.h.b16 %v1309
    %v2075 = vunpack.c.l.b16 %v1310
    %v2076 = vunpack.c.h.b16 %v1310
    %v2077 = vunpack.c.l.b16 %v1311
    %v2078 = vunpack.c.h.b16 %v1311
    %v2079 = vunpack.c.l.b16 %v1312
    %v2080 = vunpack.c.h.b16 %v1312
    %v2081 = vunpack.c.l.b16 %v1313
    %v2082 = vunpack.c.h.b16 %v1313
    %v2083 = vunpack.c.l.b16 %v1314
    %v2084 = vunpack.c.h.b16 %v1314
    %v2085 = vunpack.c.l.b16 %v1315
    %v2086 = vunpack.c.h.b16 %v1315
    %v2087 = vunpack.c.l.b16 %v1316
    %v2088 = vunpack.c.h.b16 %v1316
    %v2089 = vunpack.c.l.b16 %v1317
    %v2090 = vunpack.c.h.b16 %v1317
    %v2091 = vunpack.c.l.b16 %v1318
    %v2092 = vunpack.c.h.b16 %v1318
    %v2093 = vunpack.c.l.b16 %v1319
    %v2094 = vunpack.c.h.b16 %v1319
    %v2095 = vunpack.c.l.b16 %v1320
    %v2096 = vunpack.c.h.b16 %v1320
    %v2097 = vunpack.c.l.b16 %v1321
    %v2098 = vunpack.c.h.b16 %v1321
    %v2099 = vunpack.c.l.b16 %v1322
    %v2100 = vunpack.c.h.b16 %v1322
    %v2101 = vunpack.c.l.b16 %v1323
    %v2102 = vunpack.c.h.b16 %v1323
    %v2103 = vunpack.c.l.b16 %v1324
    %v2104 = vunpack.c.h.b16 %v1324
    %v2105 = vunpack.c.l.b16 %v1325
    %v2106 = vunpack.c.h.b16 %v1325
    %v2107 = vunpack.c.l.b16 %v1326
    %v2108 = vunpack.c.h.b16 %v1326
    %v2109 = vunpack.c.l.b16 %v1327
    %v2110 = vunpack.c.h.b16 %v1327
    %v2111 = vunpack.c.l.b16 %v1328
    %v2112 = vunpack.c.h.b16 %v1328
    %v2113 = vunpack.c.l.b16 %v1329
    %v2114 = vunpack.c.h.b16 %v1329
    %v2115 = vunpack.c.l.b16 %v1330
    %v2116 = vunpack.c.h.b16 %v1330
    %v2117 = vunpack.c.l.b16 %v1331
    %v2118 = vunpack.c.h.b16 %v1331
    %v2119 = vunpack.c.l.b16 %v1332
    %v2120 = vunpack.c.h.b16 %v1332
    %v2121 = vunpack.c.l.b16 %v1333
    %v2122 = vunpack.c.h.b16 %v1333
    %v2123 = vunpack.c.l.b16 %v1334
    %v2124 = vunpack.c.h.b16 %v1334
    %v2125 = vpack.c.b16 %v1617, %v1613
    %v2126 = vpack.c.b16 %v1618, %v1614
    %v2127 = vpack.c.b16 %v1619, %v1615
    %v2128 = vpack.c.b16 %v1620, %v1616
    %v2129 = vpack.c.b16 %v1625, %v1621
    %v2130 = vpack.c.b16 %v1626, %v1622
    %v2131 = vpack.c.b16 %v1627, %v1623
    %v2132 = vpack.c.b16 %v1628, %v1624
    %v2133 = vpack.c.b16 %v1633, %v1629
    %v2134 = vpack.c.b16 %v1634, %v1630
    %v2135 = vpack.c.b16 %v1635, %v1631
    %v2136 = vpack.c.b16 %v1636, %v1632
    %v2137 = vpack.c.b16 %v1641, %v1637
    %v2138 = vpack.c.b16 %v1642, %v1638
    %v2139 = vpack.c.b16 %v1643, %v1639
    %v2140 = vpack.c.b16 %v1644, %v1640
    %v2141 = vpack.c.b16 %v1649, %v1645
    %v2142 = vpack.c.b16 %v1650, %v1646
    %v2143 = vpack.c.b16 %v1651, %v1647
    %v2144 = vpack.c.b16 %v1652, %v1648
    %v2145 = vpack.c.b16 %v1657, %v1653
    %v2146 = vpack.c.b16 %v1658, %v1654
    %v2147 = vpack.c.b16 %v1659, %v1655
    %v2148 = vpack.c.b16 %v1660, %v1656
    %v2149 = vpack.c.b16 %v1665, %v1661
    %v2150 = vpack.c.b16 %v1666, %v1662
    %v2151 = vpack.c.b16 %v1667, %v1663
    %v2152 = vpack.c.b16 %v1668, %v1664
    %v2153 = vpack.c.b16 %v1673, %v1669
    %v2154 = vpack.c.b16 %v1674, %v1670
    %v2155 = vpack.c.b16 %v1675, %v1671
    %v2156 = vpack.c.b16 %v1676, %v1672
    %v2157 = vpack.c.b16 %v1681, %v1677
    %v2158 = vpack.c.b16 %v1682, %v1678
    %v2159 = vpack.c.b16 %v1683, %v1679
    %v2160 = vpack.c.b16 %v1684, %v1680
    %v2161 = vpack.c.b16 %v1689, %v1685
    %v2162 = vpack.c.b16 %v1690, %v1686
    %v2163 = vpack.c.b16 %v1691, %v1687
    %v2164 = vpack.c.b16 %v1692, %v1688
    %v2165 = vpack.c.b16 %v1697, %v1693
    %v2166 = vpack.c.b16 %v1698, %v1694
    %v2167 = vpack.c.b16 %v1699, %v1695
    %v2168 = vpack.c.b16 %v1700, %v1696
    %v2169 = vpack.c.b16 %v1705, %v1701
    %v2170 = vpack.c.b16 %v1706, %v1702
    %v2171 = vpack.c.b16 %v1707, %v1703
    %v2172 = vpack.c.b16 %v1708, %v1704
    %v2173 = vpack.c.b16 %v1713, %v1709
    %v2174 = vpack.c.b16 %v1714, %v1710
    %v2175 = vpack.c.b16 %v1715, %v1711
    %v2176 = vpack.c.b16 %v1716, %v1712
    %v2177 = vpack.c.b16 %v1721, %v1717
    %v2178 = vpack.c.b16 %v1722, %v1718
    %v2179 = vpack.c.b16 %v1723, %v1719
    %v2180 = vpack.c.b16 %v1724, %v1720
    %v2181 = vpack.c.b16 %v1729, %v1725
    %v2182 = vpack.c.b16 %v1730, %v1726
    %v2183 = vpack.c.b16 %v1731, %v1727
    %v2184 = vpack.c.b16 %v1732, %v1728
    %v2185 = vpack.c.b16 %v1737, %v1733
    %v2186 = vpack.c.b16 %v1738, %v1734
    %v2187 = vpack.c.b16 %v1739, %v1735
    %v2188 = vpack.c.b16 %v1740, %v1736
    %v2189 = vpack.c.b16 %v1745, %v1741
    %v2190 = vpack.c.b16 %v1746, %v1742
    %v2191 = vpack.c.b16 %v1747, %v1743
    %v2192 = vpack.c.b16 %v1748, %v1744
    %v2193 = vpack.c.b16 %v1753, %v1749
    %v2194 = vpack.c.b16 %v1754, %v1750
    %v2195 = vpack.c.b16 %v1755, %v1751
    %v2196 = vpack.c.b16 %v1756, %v1752
    %v2197 = vpack.c.b16 %v1761, %v1757
    %v2198 = vpack.c.b16 %v1762, %v1758
    %v2199 = vpack.c.b16 %v1763, %v1759
    %v2200 = vpack.c.b16 %v1764, %v1760
    %v2201 = vpack.c.b16 %v1769, %v1765
    %v2202 = vpack.c.b16 %v1770, %v1766
    %v2203 = vpack.c.b16 %v1771, %v1767
    %v2204 = vpack.c.b16 %v1772, %v1768
    %v2205 = vpack.c.b16 %v1777, %v1773
    %v2206 = vpack.c.b16 %v1778, %v1774
    %v2207 = vpack.c.b16 %v1779, %v1775
    %v2208 = vpack.c.b16 %v1780, %v1776
    %v2209 = vpack.c.b16 %v1785, %v1781
    %v2210 = vpack.c.b16 %v1786, %v1782
    %v2211 = vpack.c.b16 %v1787, %v1783
    %v2212 = vpack.c.b16 %v1788, %v1784
    %v2213 = vpack.c.b16 %v1793, %v1789
    %v2214 = vpack.c.b16 %v1794, %v1790
    %v2215 = vpack.c.b16 %v1795, %v1791
    %v2216 = vpack.c.b16 %v1796, %v1792
    %v2217 = vpack.c.b16 %v1801, %v1797
    %v2218 = vpack.c.b16 %v1802, %v1798
    %v2219 = vpack.c.b16 %v1803, %v1799
    %v2220 = vpack.c.b16 %v1804, %v1800
    %v2221 = vpack.c.b16 %v1809, %v1805
    %v2222 = vpack.c.b16 %v1810, %v1806
    %v2223 = vpack.c.b16 %v1811, %v1807
    %v2224 = vpack.c.b16 %v1812, %v1808
    %v2225 = vpack.c.b16 %v1817, %v1813
    %v2226 = vpack.c.b16 %v1818, %v1814
    %v2227 = vpack.c.b16 %v1819, %v1815
    %v2228 = vpack.c.b16 %v1820, %v1816
    %v2229 = vpack.c.b16 %v1825, %v1821
    %v2230 = vpack.c.b16 %v1826, %v1822
    %v2231 = vpack.c.b16 %v1827, %v1823
    %v2232 = vpack.c.b16 %v1828, %v1824
    %v2233 = vpack.c.b16 %v1833, %v1829
    %v2234 = vpack.c.b16 %v1834, %v1830
    %v2235 = vpack.c.b16 %v1835, %v1831
    %v2236 = vpack.c.b16 %v1836, %v1832
    %v2237 = vpack.c.b16 %v1841, %v1837
    %v2238 = vpack.c.b16 %v1842, %v1838
    %v2239 = vpack.c.b16 %v1843, %v1839
    %v2240 = vpack.c.b16 %v1844, %v1840
    %v2241 = vpack.c.b16 %v1849, %v1845
    %v2242 = vpack.c.b16 %v1850, %v1846
    %v2243 = vpack.c.b16 %v1851, %v1847
    %v2244 = vpack.c.b16 %v1852, %v1848
    %v2245 = vpack.c.b16 %v1857, %v1853
    %v2246 = vpack.c.b16 %v1858, %v1854
    %v2247 = vpack.c.b16 %v1859, %v1855
    %v2248 = vpack.c.b16 %v1860, %v1856
    %v2249 = vpack.c.b16 %v1865, %v1861
    %v2250 = vpack.c.b16 %v1866, %v1862
    %v2251 = vpack.c.b16 %v1867, %v1863
    %v2252 = vpack.c.b16 %v1868, %v1864
    %v2253 = vpack.c.b16 %v1873, %v1869
    %v2254 = vpack.c.b16 %v1874, %v1870
    %v2255 = vpack.c.b16 %v1875, %v1871
    %v2256 = vpack.c.b16 %v1876, %v1872
    %v2257 = vpack.c.b16 %v1881, %v1877
    %v2258 = vpack.c.b16 %v1882, %v1878
    %v2259 = vpack.c.b16 %v1883, %v1879
    %v2260 = vpack.c.b16 %v1884, %v1880
    %v2261 = vpack.c.b16 %v1889, %v1885
    %v2262 = vpack.c.b16 %v1890, %v1886
    %v2263 = vpack.c.b16 %v1891, %v1887
    %v2264 = vpack.c.b16 %v1892, %v1888
    %v2265 = vpack.c.b16 %v1897, %v1893
    %v2266 = vpack.c.b16 %v1898, %v1894
    %v2267 = vpack.c.b16 %v1899, %v1895
    %v2268 = vpack.c.b16 %v1900, %v1896
    %v2269 = vpack.c.b16 %v1905, %v1901
    %v2270 = vpack.c.b16 %v1906, %v1902
    %v2271 = vpack.c.b16 %v1907, %v1903
    %v2272 = vpack.c.b16 %v1908, %v1904
    %v2273 = vpack.c.b16 %v1913, %v1909
    %v2274 = vpack.c.b16 %v1914, %v1910
    %v2275 = vpack.c.b16 %v1915, %v1911
    %v2276 = vpack.c.b16 %v1916, %v1912
    %v2277 = vpack.c.b16 %v1921, %v1917
    %v2278 = vpack.c.b16 %v1922, %v1918
    %v2279 = vpack.c.b16 %v1923, %v1919
    %v2280 = vpack.c.b16 %v1924, %v1920
    %v2281 = vpack.c.b16 %v1929, %v1925
    %v2282 = vpack.c.b16 %v1930, %v1926
    %v2283 = vpack.c.b16 %v1931, %v1927
    %v2284 = vpack.c.b16 %v1932, %v1928
    %v2285 = vpack.c.b16 %v1937, %v1933
    %v2286 = vpack.c.b16 %v1938, %v1934
    %v2287 = vpack.c.b16 %v1939, %v1935
    %v2288 = vpack.c.b16 %v1940, %v1936
    %v2289 = vpack.c.b16 %v1945, %v1941
    %v2290 = vpack.c.b16 %v1946, %v1942
    %v2291 = vpack.c.b16 %v1947, %v1943
    %v2292 = vpack.c.b16 %v1948, %v1944
    %v2293 = vpack.c.b16 %v1953, %v1949
    %v2294 = vpack.c.b16 %v1954, %v1950
    %v2295 = vpack.c.b16 %v1955, %v1951
    %v2296 = vpack.c.b16 %v1956, %v1952
    %v2297 = vpack.c.b16 %v1961, %v1957
    %v2298 = vpack.c.b16 %v1962, %v1958
    %v2299 = vpack.c.b16 %v1963, %v1959
    %v2300 = vpack.c.b16 %v1964, %v1960
    %v2301 = vpack.c.b16 %v1969, %v1965
    %v2302 = vpack.c.b16 %v1970, %v1966
    %v2303 = vpack.c.b16 %v1971, %v1967
    %v2304 = vpack.c.b16 %v1972, %v1968
    %v2305 = vpack.c.b16 %v1977, %v1973
    %v2306 = vpack.c.b16 %v1978, %v1974
    %v2307 = vpack.c.b16 %v1979, %v1975
    %v2308 = vpack.c.b16 %v1980, %v1976
    %v2309 = vpack.c.b16 %v1985, %v1981
    %v2310 = vpack.c.b16 %v1986, %v1982
    %v2311 = vpack.c.b16 %v1987, %v1983
    %v2312 = vpack.c.b16 %v1988, %v1984
    %v2313 = vpack.c.b16 %v1993, %v1989
    %v2314 = vpack.c.b16 %v1994, %v1990
    %v2315 = vpack.c.b16 %v1995, %v1991
    %v2316 = vpack.c.b16 %v1996, %v1992
    %v2317 = vpack.c.b16 %v2001, %v1997
    %v2318 = vpack.c.b16 %v2002, %v1998
    %v2319 = vpack.c.b16 %v2003, %v1999
    %v2320 = vpack.c.b16 %v2004, %v2000
    %v2321 = vpack.c.b16 %v2009, %v2005
    %v2322 = vpack.c.b16 %v2010, %v2006
    %v2323 = vpack.c.b16 %v2011, %v2007
    %v2324 = vpack.c.b16 %v2012, %v2008
    %v2325 = vpack.c.b16 %v2017, %v2013
    %v2326 = vpack.c.b16 %v2018, %v2014
    %v2327 = vpack.c.b16 %v2019, %v2015
    %v2328 = vpack.c.b16 %v2020, %v2016
    %v2329 = vpack.c.b16 %v2025, %v2021
    %v2330 = vpack.c.b16 %v2026, %v2022
    %v2331 = vpack.c.b16 %v2027, %v2023
    %v2332 = vpack.c.b16 %v2028, %v2024
    %v2333 = vpack.c.b16 %v2033, %v2029
    %v2334 = vpack.c.b16 %v2034, %v2030
    %v2335 = vpack.c.b16 %v2035, %v2031
    %v2336 = vpack.c.b16 %v2036, %v2032
    %v2337 = vpack.c.b16 %v2041, %v2037
    %v2338 = vpack.c.b16 %v2042, %v2038
    %v2339 = vpack.c.b16 %v2043, %v2039
    %v2340 = vpack.c.b16 %v2044, %v2040
    %v2341 = vpack.c.b16 %v2049, %v2045
    %v2342 = vpack.c.b16 %v2050, %v2046
    %v2343 = vpack.c.b16 %v2051, %v2047
    %v2344 = vpack.c.b16 %v2052, %v2048
    %v2345 = vpack.c.b16 %v2057, %v2053
    %v2346 = vpack.c.b16 %v2058, %v2054
    %v2347 = vpack.c.b16 %v2059, %v2055
    %v2348 = vpack.c.b16 %v2060, %v2056
    %v2349 = vpack.c.b16 %v2065, %v2061
    %v2350 = vpack.c.b16 %v2066, %v2062
    %v2351 = vpack.c.b16 %v2067, %v2063
    %v2352 = vpack.c.b16 %v2068, %v2064
    %v2353 = vpack.c.b16 %v2073, %v2069
    %v2354 = vpack.c.b16 %v2074, %v2070
    %v2355 = vpack.c.b16 %v2075, %v2071
    %v2356 = vpack.c.b16 %v2076, %v2072
    %v2357 = vpack.c.b16 %v2081, %v2077
    %v2358 = vpack.c.b16 %v2082, %v2078
    %v2359 = vpack.c.b16 %v2083, %v2079
    %v2360 = vpack.c.b16 %v2084, %v2080
    %v2361 = vpack.c.b16 %v2089, %v2085
    %v2362 = vpack.c.b16 %v2090, %v2086
    %v2363 = vpack.c.b16 %v2091, %v2087
    %v2364 = vpack.c.b16 %v2092, %v2088
    %v2365 = vpack.c.b16 %v2097, %v2093
    %v2366 = vpack.c.b16 %v2098, %v2094
    %v2367 = vpack.c.b16 %v2099, %v2095
    %v2368 = vpack.c.b16 %v2100, %v2096
    %v2369 = vpack.c.b16 %v2105, %v2101
    %v2370 = vpack.c.b16 %v2106, %v2102
    %v2371 = vpack.c.b16 %v2107, %v2103
    %v2372 = vpack.c.b16 %v2108, %v2104
    %v2373 = vpack.c.b16 %v2113, %v2109
    %v2374 = vpack.c.b16 %v2114, %v2110
    %v2375 = vpack.c.b16 %v2115, %v2111
    %v2376 = vpack.c.b16 %v2116, %v2112
    %v2377 = vpack.c.b16 %v2121, %v2117
    %v2378 = vpack.c.b16 %v2122, %v2118
    %v2379 = vpack.c.b16 %v2123, %v2119
    %v2380 = vpack.c.b16 %v2124, %v2120
    %2637 = vmatprep.subr.bf16.mxu0 %v2126
    %2638 = vmatpush1.bf16.msra.mxu0 %v2125
    %2639 = vmatprep.subr.bf16.mxu0 %v2130
    %2640 = vmatpush1.bf16.msra.mxu0 %v2129
    %2641 = vmatprep.subr.bf16.mxu0 %v2134
    %2642 = vmatpush1.bf16.msra.mxu0 %v2133
    %2643 = vmatprep.subr.bf16.mxu0 %v2138
    %2644 = vmatpush1.bf16.msra.mxu0 %v2137
    %2645 = vmatprep.subr.bf16.mxu0 %v2142
    %2646 = vmatpush1.bf16.msra.mxu0 %v2141
    %2647 = vmatprep.subr.bf16.mxu0 %v2146
    %2648 = vmatpush1.bf16.msra.mxu0 %v2145
    %2649 = vmatprep.subr.bf16.mxu0 %v2150
    %2650 = vmatpush1.bf16.msra.mxu0 %v2149
    %2651 = vmatprep.subr.bf16.mxu0 %v2154
    %2652 = vmatpush1.bf16.msra.mxu0 %v2153
    %2653 = vmatprep.subr.bf16.mxu0 %v2158
    %2654 = vmatpush1.bf16.msra.mxu0 %v2157
    %2655 = vmatprep.subr.bf16.mxu0 %v2162
    %2656 = vmatpush1.bf16.msra.mxu0 %v2161
    %2657 = vmatprep.subr.bf16.mxu0 %v2166
    %2658 = vmatpush1.bf16.msra.mxu0 %v2165
    %2659 = vmatprep.subr.bf16.mxu0 %v2170
    %2660 = vmatpush1.bf16.msra.mxu0 %v2169
    %2661 = vmatprep.subr.bf16.mxu0 %v2174
    %2662 = vmatpush1.bf16.msra.mxu0 %v2173
    %2663 = vmatprep.subr.bf16.mxu0 %v2178
    %2664 = vmatpush1.bf16.msra.mxu0 %v2177
    %2665 = vmatprep.subr.bf16.mxu0 %v2182
    %2666 = vmatpush1.bf16.msra.mxu0 %v2181
    %2667 = vmatprep.subr.bf16.mxu0 %v2186
    %2668 = vmatpush1.bf16.msra.mxu0 %v2185
    %2669 = vmatprep.mubr.bf16.mxu0 %v1072
    %2670 = vmatmul.mubr.bf16.gmra.mrb[0].mxu0 %v1071
    %v2671 = vpop.f32.mrb[0].mxu0
    %v2672 = vadd.f32 %v1340, %v2671
    %v2673 = vpop.f32.mrb[0].mxu0
    %v2674 = vadd.f32 %v1344, %v2673
    %v2675 = vpop.f32.mrb[0].mxu0
    %v2676 = vpop.f32.mrb[0].mxu0
    %2677 = vdwg.mxu0
    %2678 = vmatprep.subr.bf16.mxu0 %v2190
    %2679 = vmatpush1.bf16.msra.mxu0 %v2189
    %2680 = vmatprep.subr.bf16.mxu0 %v2194
    %2681 = vmatpush1.bf16.msra.mxu0 %v2193
    %2682 = vmatprep.subr.bf16.mxu0 %v2198
    %2683 = vmatpush1.bf16.msra.mxu0 %v2197
    %2684 = vmatprep.subr.bf16.mxu0 %v2202
    %2685 = vmatpush1.bf16.msra.mxu0 %v2201
    %2686 = vmatprep.subr.bf16.mxu0 %v2206
    %2687 = vmatpush1.bf16.msra.mxu0 %v2205
    %2688 = vmatprep.subr.bf16.mxu0 %v2210
    %2689 = vmatpush1.bf16.msra.mxu0 %v2209
    %2690 = vmatprep.subr.bf16.mxu0 %v2214
    %2691 = vmatpush1.bf16.msra.mxu0 %v2213
    %2692 = vmatprep.subr.bf16.mxu0 %v2218
    %2693 = vmatpush1.bf16.msra.mxu0 %v2217
    %2694 = vmatprep.subr.bf16.mxu0 %v2222
    %2695 = vmatpush1.bf16.msra.mxu0 %v2221
    %2696 = vmatprep.subr.bf16.mxu0 %v2226
    %2697 = vmatpush1.bf16.msra.mxu0 %v2225
    %2698 = vmatprep.subr.bf16.mxu0 %v2230
    %2699 = vmatpush1.bf16.msra.mxu0 %v2229
    %2700 = vmatprep.subr.bf16.mxu0 %v2234
    %2701 = vmatpush1.bf16.msra.mxu0 %v2233
    %2702 = vmatprep.subr.bf16.mxu0 %v2238
    %2703 = vmatpush1.bf16.msra.mxu0 %v2237
    %2704 = vmatprep.subr.bf16.mxu0 %v2242
    %2705 = vmatpush1.bf16.msra.mxu0 %v2241
    %2706 = vmatprep.subr.bf16.mxu0 %v2246
    %2707 = vmatpush1.bf16.msra.mxu0 %v2245
    %2708 = vmatprep.subr.bf16.mxu0 %v2250
    %2709 = vmatpush1.bf16.msra.mxu0 %v2249
    %2710 = vmatprep.mubr.bf16.mxu0 %v1074
    %2711 = vmatmul.mubr.bf16.gmra.mrb[0].mxu0 %v1073
    %v2712 = vpop.f32.mrb[0].mxu0
    %v2713 = vadd.f32 %v2672, %v2712
    %v2714 = vpop.f32.mrb[0].mxu0
    %v2715 = vadd.f32 %v2674, %v2714
    %v2716 = vpop.f32.mrb[0].mxu0
    %v2717 = vpop.f32.mrb[0].mxu0
    %2718 = vdwg.mxu0
    %2719 = vmatprep.subr.bf16.mxu0 %v2254
    %2720 = vmatpush1.bf16.msra.mxu0 %v2253
    %2721 = vmatprep.subr.bf16.mxu0 %v2258
    %2722 = vmatpush1.bf16.msra.mxu0 %v2257
    %2723 = vmatprep.subr.bf16.mxu0 %v2262
    %2724 = vmatpush1.bf16.msra.mxu0 %v2261
    %2725 = vmatprep.subr.bf16.mxu0 %v2266
    %2726 = vmatpush1.bf16.msra.mxu0 %v2265
    %2727 = vmatprep.subr.bf16.mxu0 %v2270
    %2728 = vmatpush1.bf16.msra.mxu0 %v2269
    %2729 = vmatprep.subr.bf16.mxu0 %v2274
    %2730 = vmatpush1.bf16.msra.mxu0 %v2273
    %2731 = vmatprep.subr.bf16.mxu0 %v2278
    %2732 = vmatpush1.bf16.msra.mxu0 %v2277
    %2733 = vmatprep.subr.bf16.mxu0 %v2282
    %2734 = vmatpush1.bf16.msra.mxu0 %v2281
    %2735 = vmatprep.subr.bf16.mxu0 %v2286
    %2736 = vmatpush1.bf16.msra.mxu0 %v2285
    %2737 = vmatprep.subr.bf16.mxu0 %v2290
    %2738 = vmatpush1.bf16.msra.mxu0 %v2289
    %2739 = vmatprep.subr.bf16.mxu0 %v2294
    %2740 = vmatpush1.bf16.msra.mxu0 %v2293
    %2741 = vmatprep.subr.bf16.mxu0 %v2298
    %2742 = vmatpush1.bf16.msra.mxu0 %v2297
    %2743 = vmatprep.subr.bf16.mxu0 %v2302
    %2744 = vmatpush1.bf16.msra.mxu0 %v2301
    %2745 = vmatprep.subr.bf16.mxu0 %v2306
    %2746 = vmatpush1.bf16.msra.mxu0 %v2305
    %2747 = vmatprep.subr.bf16.mxu0 %v2310
    %2748 = vmatpush1.bf16.msra.mxu0 %v2309
    %2749 = vmatprep.subr.bf16.mxu0 %v2314
    %2750 = vmatpush1.bf16.msra.mxu0 %v2313
    %2751 = vmatprep.mubr.bf16.mxu0 %v1076
    %2752 = vmatmul.mubr.bf16.gmra.mrb[0].mxu0 %v1075
    %v2753 = vpop.f32.mrb[0].mxu0
    %v2754 = vadd.f32 %v2713, %v2753
    %v2755 = vpop.f32.mrb[0].mxu0
    %v2756 = vadd.f32 %v2715, %v2755
    %v2757 = vpop.f32.mrb[0].mxu0
    %v2758 = vpop.f32.mrb[0].mxu0
    %2759 = vdwg.mxu0
    %2760 = vmatprep.subr.bf16.mxu0 %v2318
    %2761 = vmatpush1.bf16.msra.mxu0 %v2317
    %2762 = vmatprep.subr.bf16.mxu0 %v2322
    %2763 = vmatpush1.bf16.msra.mxu0 %v2321
    %2764 = vmatprep.subr.bf16.mxu0 %v2326
    %2765 = vmatpush1.bf16.msra.mxu0 %v2325
    %2766 = vmatprep.subr.bf16.mxu0 %v2330
    %2767 = vmatpush1.bf16.msra.mxu0 %v2329
    %2768 = vmatprep.subr.bf16.mxu0 %v2334
    %2769 = vmatpush1.bf16.msra.mxu0 %v2333
    %2770 = vmatprep.subr.bf16.mxu0 %v2338
    %2771 = vmatpush1.bf16.msra.mxu0 %v2337
    %2772 = vmatprep.subr.bf16.mxu0 %v2342
    %2773 = vmatpush1.bf16.msra.mxu0 %v2341
    %2774 = vmatprep.subr.bf16.mxu0 %v2346
    %2775 = vmatpush1.bf16.msra.mxu0 %v2345
    %2776 = vmatprep.subr.bf16.mxu0 %v2350
    %2777 = vmatpush1.bf16.msra.mxu0 %v2349
    %2778 = vmatprep.subr.bf16.mxu0 %v2354
    %2779 = vmatpush1.bf16.msra.mxu0 %v2353
    %2780 = vmatprep.subr.bf16.mxu0 %v2358
    %2781 = vmatpush1.bf16.msra.mxu0 %v2357
    %2782 = vmatprep.subr.bf16.mxu0 %v2362
    %2783 = vmatpush1.bf16.msra.mxu0 %v2361
    %2784 = vmatprep.subr.bf16.mxu0 %v2366
    %2785 = vmatpush1.bf16.msra.mxu0 %v2365
    %2786 = vmatprep.subr.bf16.mxu0 %v2370
    %2787 = vmatpush1.bf16.msra.mxu0 %v2369
    %2788 = vmatprep.subr.bf16.mxu0 %v2374
    %2789 = vmatpush1.bf16.msra.mxu0 %v2373
    %2790 = vmatprep.subr.bf16.mxu0 %v2378
    %2791 = vmatpush1.bf16.msra.mxu0 %v2377
    %2792 = vmatprep.mubr.bf16.mxu0 %v1078
    %2793 = vmatmul.mubr.bf16.gmra.mrb[0].mxu0 %v1077
    %v2794 = vpop.f32.mrb[0].mxu0
    %v2795 = vadd.f32 %v2754, %v2794
    %v2796 = vpop.f32.mrb[0].mxu0
    %v2797 = vadd.f32 %v2756, %v2796
    %v2798 = vpop.f32.mrb[0].mxu0
    %v2799 = vpop.f32.mrb[0].mxu0
    %2800 = vdwg.mxu0
    %2801 = vmatprep.subr.bf16.mxu0 %v2128
    %2802 = vmatpush1.bf16.msra.mxu0 %v2127
    %2803 = vmatprep.subr.bf16.mxu0 %v2132
    %2804 = vmatpush1.bf16.msra.mxu0 %v2131
    %2805 = vmatprep.subr.bf16.mxu0 %v2136
    %2806 = vmatpush1.bf16.msra.mxu0 %v2135
    %2807 = vmatprep.subr.bf16.mxu0 %v2140
    %2808 = vmatpush1.bf16.msra.mxu0 %v2139
    %2809 = vmatprep.subr.bf16.mxu0 %v2144
    %2810 = vmatpush1.bf16.msra.mxu0 %v2143
    %2811 = vmatprep.subr.bf16.mxu0 %v2148
    %2812 = vmatpush1.bf16.msra.mxu0 %v2147
    %2813 = vmatprep.subr.bf16.mxu0 %v2152
    %2814 = vmatpush1.bf16.msra.mxu0 %v2151
    %2815 = vmatprep.subr.bf16.mxu0 %v2156
    %2816 = vmatpush1.bf16.msra.mxu0 %v2155
    %2817 = vmatprep.subr.bf16.mxu0 %v2160
    %2818 = vmatpush1.bf16.msra.mxu0 %v2159
    %2819 = vmatprep.subr.bf16.mxu0 %v2164
    %2820 = vmatpush1.bf16.msra.mxu0 %v2163
    %2821 = vmatprep.subr.bf16.mxu0 %v2168
    %2822 = vmatpush1.bf16.msra.mxu0 %v2167
    %2823 = vmatprep.subr.bf16.mxu0 %v2172
    %2824 = vmatpush1.bf16.msra.mxu0 %v2171
    %2825 = vmatprep.subr.bf16.mxu0 %v2176
    %2826 = vmatpush1.bf16.msra.mxu0 %v2175
    %2827 = vmatprep.subr.bf16.mxu0 %v2180
    %2828 = vmatpush1.bf16.msra.mxu0 %v2179
    %2829 = vmatprep.subr.bf16.mxu0 %v2184
    %2830 = vmatpush1.bf16.msra.mxu0 %v2183
    %2831 = vmatprep.subr.bf16.mxu0 %v2188
    %2832 = vmatpush1.bf16.msra.mxu0 %v2187
    %2833 = vmatprep.mubr.bf16.mxu0 %v1072
    %2834 = vmatmul.mubr.bf16.gmra.mrb[0].mxu0 %v1071
    %v2835 = vpop.f32.mrb[0].mxu0
    %v2836 = vadd.f32 %v1348, %v2835
    %v2837 = vpop.f32.mrb[0].mxu0
    %v2838 = vadd.f32 %v1352, %v2837
    %v2839 = vpop.f32.mrb[0].mxu0
    %v2840 = vpop.f32.mrb[0].mxu0
    %2841 = vdwg.mxu0
    %2842 = vmatprep.subr.bf16.mxu0 %v2192
    %2843 = vmatpush1.bf16.msra.mxu0 %v2191
    %2844 = vmatprep.subr.bf16.mxu0 %v2196
    %2845 = vmatpush1.bf16.msra.mxu0 %v2195
    %2846 = vmatprep.subr.bf16.mxu0 %v2200
    %2847 = vmatpush1.bf16.msra.mxu0 %v2199
    %2848 = vmatprep.subr.bf16.mxu0 %v2204
    %2849 = vmatpush1.bf16.msra.mxu0 %v2203
    %2850 = vmatprep.subr.bf16.mxu0 %v2208
    %2851 = vmatpush1.bf16.msra.mxu0 %v2207
    %2852 = vmatprep.subr.bf16.mxu0 %v2212
    %2853 = vmatpush1.bf16.msra.mxu0 %v2211
    %2854 = vmatprep.subr.bf16.mxu0 %v2216
    %2855 = vmatpush1.bf16.msra.mxu0 %v2215
    %2856 = vmatprep.subr.bf16.mxu0 %v2220
    %2857 = vmatpush1.bf16.msra.mxu0 %v2219
    %2858 = vmatprep.subr.bf16.mxu0 %v2224
    %2859 = vmatpush1.bf16.msra.mxu0 %v2223
    %2860 = vmatprep.subr.bf16.mxu0 %v2228
    %2861 = vmatpush1.bf16.msra.mxu0 %v2227
    %2862 = vmatprep.subr.bf16.mxu0 %v2232
    %2863 = vmatpush1.bf16.msra.mxu0 %v2231
    %2864 = vmatprep.subr.bf16.mxu0 %v2236
    %2865 = vmatpush1.bf16.msra.mxu0 %v2235
    %2866 = vmatprep.subr.bf16.mxu0 %v2240
    %2867 = vmatpush1.bf16.msra.mxu0 %v2239
    %2868 = vmatprep.subr.bf16.mxu0 %v2244
    %2869 = vmatpush1.bf16.msra.mxu0 %v2243
    %2870 = vmatprep.subr.bf16.mxu0 %v2248
    %2871 = vmatpush1.bf16.msra.mxu0 %v2247
    %2872 = vmatprep.subr.bf16.mxu0 %v2252
    %2873 = vmatpush1.bf16.msra.mxu0 %v2251
    %2874 = vmatprep.mubr.bf16.mxu0 %v1074
    %2875 = vmatmul.mubr.bf16.gmra.mrb[0].mxu0 %v1073
    %v2876 = vpop.f32.mrb[0].mxu0
    %v2877 = vadd.f32 %v2836, %v2876
    %v2878 = vpop.f32.mrb[0].mxu0
    %v2879 = vadd.f32 %v2838, %v2878
    %v2880 = vpop.f32.mrb[0].mxu0
    %v2881 = vpop.f32.mrb[0].mxu0
    %2882 = vdwg.mxu0
    %2883 = vmatprep.subr.bf16.mxu0 %v2256
    %2884 = vmatpush1.bf16.msra.mxu0 %v2255
    %2885 = vmatprep.subr.bf16.mxu0 %v2260
    %2886 = vmatpush1.bf16.msra.mxu0 %v2259
    %2887 = vmatprep.subr.bf16.mxu0 %v2264
    %2888 = vmatpush1.bf16.msra.mxu0 %v2263
    %2889 = vmatprep.subr.bf16.mxu0 %v2268
    %2890 = vmatpush1.bf16.msra.mxu0 %v2267
    %2891 = vmatprep.subr.bf16.mxu0 %v2272
    %2892 = vmatpush1.bf16.msra.mxu0 %v2271
    %2893 = vmatprep.subr.bf16.mxu0 %v2276
    %2894 = vmatpush1.bf16.msra.mxu0 %v2275
    %2895 = vmatprep.subr.bf16.mxu0 %v2280
    %2896 = vmatpush1.bf16.msra.mxu0 %v2279
    %2897 = vmatprep.subr.bf16.mxu0 %v2284
    %2898 = vmatpush1.bf16.msra.mxu0 %v2283
    %2899 = vmatprep.subr.bf16.mxu0 %v2288
    %2900 = vmatpush1.bf16.msra.mxu0 %v2287
    %2901 = vmatprep.subr.bf16.mxu0 %v2292
    %2902 = vmatpush1.bf16.msra.mxu0 %v2291
    %2903 = vmatprep.subr.bf16.mxu0 %v2296
    %2904 = vmatpush1.bf16.msra.mxu0 %v2295
    %2905 = vmatprep.subr.bf16.mxu0 %v2300
    %2906 = vmatpush1.bf16.msra.mxu0 %v2299
    %2907 = vmatprep.subr.bf16.mxu0 %v2304
    %2908 = vmatpush1.bf16.msra.mxu0 %v2303
    %2909 = vmatprep.subr.bf16.mxu0 %v2308
    %2910 = vmatpush1.bf16.msra.mxu0 %v2307
    %2911 = vmatprep.subr.bf16.mxu0 %v2312
    %2912 = vmatpush1.bf16.msra.mxu0 %v2311
    %2913 = vmatprep.subr.bf16.mxu0 %v2316
    %2914 = vmatpush1.bf16.msra.mxu0 %v2315
    %2915 = vmatprep.mubr.bf16.mxu0 %v1076
    %2916 = vmatmul.mubr.bf16.gmra.mrb[0].mxu0 %v1075
    %v2917 = vpop.f32.mrb[0].mxu0
    %v2918 = vadd.f32 %v2877, %v2917
    %v2919 = vpop.f32.mrb[0].mxu0
    %v2920 = vadd.f32 %v2879, %v2919
    %v2921 = vpop.f32.mrb[0].mxu0
    %v2922 = vpop.f32.mrb[0].mxu0
    %2923 = vdwg.mxu0
    %2924 = vmatprep.subr.bf16.mxu0 %v2320
    %2925 = vmatpush1.bf16.msra.mxu0 %v2319
    %2926 = vmatprep.subr.bf16.mxu0 %v2324
    %2927 = vmatpush1.bf16.msra.mxu0 %v2323
    %2928 = vmatprep.subr.bf16.mxu0 %v2328
    %2929 = vmatpush1.bf16.msra.mxu0 %v2327
    %2930 = vmatprep.subr.bf16.mxu0 %v2332
    %2931 = vmatpush1.bf16.msra.mxu0 %v2331
    %2932 = vmatprep.subr.bf16.mxu0 %v2336
    %2933 = vmatpush1.bf16.msra.mxu0 %v2335
    %2934 = vmatprep.subr.bf16.mxu0 %v2340
    %2935 = vmatpush1.bf16.msra.mxu0 %v2339
    %2936 = vmatprep.subr.bf16.mxu0 %v2344
    %2937 = vmatpush1.bf16.msra.mxu0 %v2343
    %2938 = vmatprep.subr.bf16.mxu0 %v2348
    %2939 = vmatpush1.bf16.msra.mxu0 %v2347
    %2940 = vmatprep.subr.bf16.mxu0 %v2352
    %2941 = vmatpush1.bf16.msra.mxu0 %v2351
    %2942 = vmatprep.subr.bf16.mxu0 %v2356
    %2943 = vmatpush1.bf16.msra.mxu0 %v2355
    %2944 = vmatprep.subr.bf16.mxu0 %v2360
    %2945 = vmatpush1.bf16.msra.mxu0 %v2359
    %2946 = vmatprep.subr.bf16.mxu0 %v2364
    %2947 = vmatpush1.bf16.msra.mxu0 %v2363
    %2948 = vmatprep.subr.bf16.mxu0 %v2368
    %2949 = vmatpush1.bf16.msra.mxu0 %v2367
    %2950 = vmatprep.subr.bf16.mxu0 %v2372
    %2951 = vmatpush1.bf16.msra.mxu0 %v2371
    %2952 = vmatprep.subr.bf16.mxu0 %v2376
    %2953 = vmatpush1.bf16.msra.mxu0 %v2375
    %2954 = vmatprep.subr.bf16.mxu0 %v2380
    %2955 = vmatpush1.bf16.msra.mxu0 %v2379
    %2956 = vmatprep.mubr.bf16.mxu0 %v1078
    %2957 = vmatmul.mubr.bf16.gmra.mrb[0].mxu0 %v1077
    %v2958 = vpop.f32.mrb[0].mxu0
    %v2959 = vadd.f32 %v2918, %v2958
    %v2960 = vpop.f32.mrb[0].mxu0
    %v2961 = vadd.f32 %v2920, %v2960
    %v2962 = vpop.f32.mrb[0].mxu0
    %v2963 = vpop.f32.mrb[0].mxu0
    %2964 = vdwg.mxu0
    %v2965 = vmax.f32 %v2795, 0.0
    %v2966 = vmax.f32 %v2797, 0.0
    %v2967 = vmax.f32 %v2959, 0.0
    %v2968 = vmax.f32 %v2961, 0.0
    %v2969 = vpack.c.bf16 %v2965, %v2965
    %v2970 = vpack.c.bf16 %v2966, %v2966
    %v2971 = vpack.c.bf16 %v2967, %v2967
    %v2972 = vpack.c.bf16 %v2968, %v2968
    %v2973 = vld [vmem:[#allocation7] sm:$0xff]
    %v2974 = vld [vmem:[#allocation7 + $0x8] sm:$0xff]
    %v2975 = vld [vmem:[#allocation7 + $0x10] sm:$0xff]
    %v2976 = vld [vmem:[#allocation7 + $0x18] sm:$0xff]
    %v2977 = vld [vmem:[#allocation7 + $0x20] sm:$0xff]
    %v2978 = vld [vmem:[#allocation7 + $0x28] sm:$0xff]
    %v2979 = vld [vmem:[#allocation7 + $0x30] sm:$0xff]
    %v2980 = vld [vmem:[#allocation7 + $0x38] sm:$0xff]
    %v2981 = vld [vmem:[#allocation7 + $0x40] sm:$0xff]
    %v2982 = vld [vmem:[#allocation7 + $0x48] sm:$0xff]
    %v2983 = vld [vmem:[#allocation7 + $0x50] sm:$0xff]
    %v2984 = vld [vmem:[#allocation7 + $0x58] sm:$0xff]
    %v2985 = vld [vmem:[#allocation7 + $0x60] sm:$0xff]
    %v2986 = vld [vmem:[#allocation7 + $0x68] sm:$0xff]
    %v2987 = vld [vmem:[#allocation7 + $0x70] sm:$0xff]
    %v2988 = vld [vmem:[#allocation7 + $0x78] sm:$0xff]
    %v2989 = vld [vmem:[#allocation7 + $0x80] sm:$0xff]
    %v2990 = vld [vmem:[#allocation7 + $0x88] sm:$0xff]
    %v2991 = vld [vmem:[#allocation7 + $0x90] sm:$0xff]
    %v2992 = vld [vmem:[#allocation7 + $0x98] sm:$0xff]
    %v2993 = vld [vmem:[#allocation7 + $0xa0] sm:$0xff]
    %v2994 = vld [vmem:[#allocation7 + $0xa8] sm:$0xff]
    %v2995 = vld [vmem:[#allocation7 + $0xb0] sm:$0xff]
    %v2996 = vld [vmem:[#allocation7 + $0xb8] sm:$0xff]
    %v2997 = vld [vmem:[#allocation7 + $0xc0] sm:$0xff]
    %v2998 = vld [vmem:[#allocation7 + $0xc8] sm:$0xff]
    %v2999 = vld [vmem:[#allocation7 + $0xd0] sm:$0xff]
    %v3000 = vld [vmem:[#allocation7 + $0xd8] sm:$0xff]
    %v3001 = vld [vmem:[#allocation7 + $0xe0] sm:$0xff]
    %v3002 = vld [vmem:[#allocation7 + $0xe8] sm:$0xff]
    %v3003 = vld [vmem:[#allocation7 + $0xf0] sm:$0xff]
    %v3004 = vld [vmem:[#allocation7 + $0xf8] sm:$0xff]
    %v3005 = vld [vmem:[#allocation7 + $0x100] sm:$0xff]
    %v3006 = vld [vmem:[#allocation7 + $0x108] sm:$0xff]
    %v3007 = vld [vmem:[#allocation7 + $0x110] sm:$0xff]
    %v3008 = vld [vmem:[#allocation7 + $0x118] sm:$0xff]
    %v3009 = vld [vmem:[#allocation7 + $0x120] sm:$0xff]
    %v3010 = vld [vmem:[#allocation7 + $0x128] sm:$0xff]
    %v3011 = vld [vmem:[#allocation7 + $0x130] sm:$0xff]
    %v3012 = vld [vmem:[#allocation7 + $0x138] sm:$0xff]
    %v3013 = vld [vmem:[#allocation7 + $0x140] sm:$0xff]
    %v3014 = vld [vmem:[#allocation7 + $0x148] sm:$0xff]
    %v3015 = vld [vmem:[#allocation7 + $0x150] sm:$0xff]
    %v3016 = vld [vmem:[#allocation7 + $0x158] sm:$0xff]
    %v3017 = vld [vmem:[#allocation7 + $0x160] sm:$0xff]
    %v3018 = vld [vmem:[#allocation7 + $0x168] sm:$0xff]
    %v3019 = vld [vmem:[#allocation7 + $0x170] sm:$0xff]
    %v3020 = vld [vmem:[#allocation7 + $0x178] sm:$0xff]
    %v3021 = vld [vmem:[#allocation7 + $0x180] sm:$0xff]
    %v3022 = vld [vmem:[#allocation7 + $0x188] sm:$0xff]
    %v3023 = vld [vmem:[#allocation7 + $0x190] sm:$0xff]
    %v3024 = vld [vmem:[#allocation7 + $0x198] sm:$0xff]
    %v3025 = vld [vmem:[#allocation7 + $0x1a0] sm:$0xff]
    %v3026 = vld [vmem:[#allocation7 + $0x1a8] sm:$0xff]
    %v3027 = vld [vmem:[#allocation7 + $0x1b0] sm:$0xff]
    %v3028 = vld [vmem:[#allocation7 + $0x1b8] sm:$0xff]
    %v3029 = vld [vmem:[#allocation7 + $0x1c0] sm:$0xff]
    %v3030 = vld [vmem:[#allocation7 + $0x1c8] sm:$0xff]
    %v3031 = vld [vmem:[#allocation7 + $0x1d0] sm:$0xff]
    %v3032 = vld [vmem:[#allocation7 + $0x1d8] sm:$0xff]
    %v3033 = vld [vmem:[#allocation7 + $0x1e0] sm:$0xff]
    %v3034 = vld [vmem:[#allocation7 + $0x1e8] sm:$0xff]
    %v3035 = vld [vmem:[#allocation7 + $0x1f0] sm:$0xff]
    %v3036 = vld [vmem:[#allocation7 + $0x1f8] sm:$0xff]
    %v3037 = vld [vmem:[%s6] sm:$0x3]
    %v3039 = vlaneseq
    %v3040 = vshrl.u32 %v3039, 7
    %v3041 = vsub.s32 0, %v3040
    %v3042 = vrot.slane %v3037, %v3041
    %v3043 = vlaneseq
    %v3044 = vshrl.u32 %v3043, 7
    %v3045 = vsub.s32 1, %v3044
    %v3046 = vrot.slane %v3037, %v3045
    %v3113 = vunpack.c.l.b16 %v2973
    %v3114 = vunpack.c.h.b16 %v2973
    %v3115 = vunpack.c.l.b16 %v2974
    %v3116 = vunpack.c.h.b16 %v2974
    %v3117 = vunpack.c.l.b16 %v2975
    %v3118 = vunpack.c.h.b16 %v2975
    %v3119 = vunpack.c.l.b16 %v2976
    %v3120 = vunpack.c.h.b16 %v2976
    %v3121 = vunpack.c.l.b16 %v2977
    %v3122 = vunpack.c.h.b16 %v2977
    %v3123 = vunpack.c.l.b16 %v2978
    %v3124 = vunpack.c.h.b16 %v2978
    %v3125 = vunpack.c.l.b16 %v2979
    %v3126 = vunpack.c.h.b16 %v2979
    %v3127 = vunpack.c.l.b16 %v2980
    %v3128 = vunpack.c.h.b16 %v2980
    %v3129 = vunpack.c.l.b16 %v2981
    %v3130 = vunpack.c.h.b16 %v2981
    %v3131 = vunpack.c.l.b16 %v2982
    %v3132 = vunpack.c.h.b16 %v2982
    %v3133 = vunpack.c.l.b16 %v2983
    %v3134 = vunpack.c.h.b16 %v2983
    %v3135 = vunpack.c.l.b16 %v2984
    %v3136 = vunpack.c.h.b16 %v2984
    %v3137 = vunpack.c.l.b16 %v2985
    %v3138 = vunpack.c.h.b16 %v2985
    %v3139 = vunpack.c.l.b16 %v2986
    %v3140 = vunpack.c.h.b16 %v2986
    %v3141 = vunpack.c.l.b16 %v2987
    %v3142 = vunpack.c.h.b16 %v2987
    %v3143 = vunpack.c.l.b16 %v2988
    %v3144 = vunpack.c.h.b16 %v2988
    %v3145 = vunpack.c.l.b16 %v2989
    %v3146 = vunpack.c.h.b16 %v2989
    %v3147 = vunpack.c.l.b16 %v2990
    %v3148 = vunpack.c.h.b16 %v2990
    %v3149 = vunpack.c.l.b16 %v2991
    %v3150 = vunpack.c.h.b16 %v2991
    %v3151 = vunpack.c.l.b16 %v2992
    %v3152 = vunpack.c.h.b16 %v2992
    %v3153 = vunpack.c.l.b16 %v2993
    %v3154 = vunpack.c.h.b16 %v2993
    %v3155 = vunpack.c.l.b16 %v2994
    %v3156 = vunpack.c.h.b16 %v2994
    %v3157 = vunpack.c.l.b16 %v2995
    %v3158 = vunpack.c.h.b16 %v2995
    %v3159 = vunpack.c.l.b16 %v2996
    %v3160 = vunpack.c.h.b16 %v2996
    %v3161 = vunpack.c.l.b16 %v2997
    %v3162 = vunpack.c.h.b16 %v2997
    %v3163 = vunpack.c.l.b16 %v2998
    %v3164 = vunpack.c.h.b16 %v2998
    %v3165 = vunpack.c.l.b16 %v2999
    %v3166 = vunpack.c.h.b16 %v2999
    %v3167 = vunpack.c.l.b16 %v3000
    %v3168 = vunpack.c.h.b16 %v3000
    %v3169 = vunpack.c.l.b16 %v3001
    %v3170 = vunpack.c.h.b16 %v3001
    %v3171 = vunpack.c.l.b16 %v3002
    %v3172 = vunpack.c.h.b16 %v3002
    %v3173 = vunpack.c.l.b16 %v3003
    %v3174 = vunpack.c.h.b16 %v3003
    %v3175 = vunpack.c.l.b16 %v3004
    %v3176 = vunpack.c.h.b16 %v3004
    %v3177 = vunpack.c.l.b16 %v3005
    %v3178 = vunpack.c.h.b16 %v3005
    %v3179 = vunpack.c.l.b16 %v3006
    %v3180 = vunpack.c.h.b16 %v3006
    %v3181 = vunpack.c.l.b16 %v3007
    %v3182 = vunpack.c.h.b16 %v3007
    %v3183 = vunpack.c.l.b16 %v3008
    %v3184 = vunpack.c.h.b16 %v3008
    %v3185 = vunpack.c.l.b16 %v3009
    %v3186 = vunpack.c.h.b16 %v3009
    %v3187 = vunpack.c.l.b16 %v3010
    %v3188 = vunpack.c.h.b16 %v3010
    %v3189 = vunpack.c.l.b16 %v3011
    %v3190 = vunpack.c.h.b16 %v3011
    %v3191 = vunpack.c.l.b16 %v3012
    %v3192 = vunpack.c.h.b16 %v3012
    %v3193 = vunpack.c.l.b16 %v3013
    %v3194 = vunpack.c.h.b16 %v3013
    %v3195 = vunpack.c.l.b16 %v3014
    %v3196 = vunpack.c.h.b16 %v3014
    %v3197 = vunpack.c.l.b16 %v3015
    %v3198 = vunpack.c.h.b16 %v3015
    %v3199 = vunpack.c.l.b16 %v3016
    %v3200 = vunpack.c.h.b16 %v3016
    %v3201 = vunpack.c.l.b16 %v3017
    %v3202 = vunpack.c.h.b16 %v3017
    %v3203 = vunpack.c.l.b16 %v3018
    %v3204 = vunpack.c.h.b16 %v3018
    %v3205 = vunpack.c.l.b16 %v3019
    %v3206 = vunpack.c.h.b16 %v3019
    %v3207 = vunpack.c.l.b16 %v3020
    %v3208 = vunpack.c.h.b16 %v3020
    %v3209 = vunpack.c.l.b16 %v3021
    %v3210 = vunpack.c.h.b16 %v3021
    %v3211 = vunpack.c.l.b16 %v3022
    %v3212 = vunpack.c.h.b16 %v3022
    %v3213 = vunpack.c.l.b16 %v3023
    %v3214 = vunpack.c.h.b16 %v3023
    %v3215 = vunpack.c.l.b16 %v3024
    %v3216 = vunpack.c.h.b16 %v3024
    %v3217 = vunpack.c.l.b16 %v3025
    %v3218 = vunpack.c.h.b16 %v3025
    %v3219 = vunpack.c.l.b16 %v3026
    %v3220 = vunpack.c.h.b16 %v3026
    %v3221 = vunpack.c.l.b16 %v3027
    %v3222 = vunpack.c.h.b16 %v3027
    %v3223 = vunpack.c.l.b16 %v3028
    %v3224 = vunpack.c.h.b16 %v3028
    %v3225 = vunpack.c.l.b16 %v3029
    %v3226 = vunpack.c.h.b16 %v3029
    %v3227 = vunpack.c.l.b16 %v3030
    %v3228 = vunpack.c.h.b16 %v3030
    %v3229 = vunpack.c.l.b16 %v3031
    %v3230 = vunpack.c.h.b16 %v3031
    %v3231 = vunpack.c.l.b16 %v3032
    %v3232 = vunpack.c.h.b16 %v3032
    %v3233 = vunpack.c.l.b16 %v3033
    %v3234 = vunpack.c.h.b16 %v3033
    %v3235 = vunpack.c.l.b16 %v3034
    %v3236 = vunpack.c.h.b16 %v3034
    %v3237 = vunpack.c.l.b16 %v3035
    %v3238 = vunpack.c.h.b16 %v3035
    %v3239 = vunpack.c.l.b16 %v3036
    %v3240 = vunpack.c.h.b16 %v3036
    %v3241 = vpack.c.b16 %v3115, %v3113
    %v3242 = vpack.c.b16 %v3116, %v3114
    %v3243 = vpack.c.b16 %v3119, %v3117
    %v3244 = vpack.c.b16 %v3120, %v3118
    %v3245 = vpack.c.b16 %v3123, %v3121
    %v3246 = vpack.c.b16 %v3124, %v3122
    %v3247 = vpack.c.b16 %v3127, %v3125
    %v3248 = vpack.c.b16 %v3128, %v3126
    %v3249 = vpack.c.b16 %v3131, %v3129
    %v3250 = vpack.c.b16 %v3132, %v3130
    %v3251 = vpack.c.b16 %v3135, %v3133
    %v3252 = vpack.c.b16 %v3136, %v3134
    %v3253 = vpack.c.b16 %v3139, %v3137
    %v3254 = vpack.c.b16 %v3140, %v3138
    %v3255 = vpack.c.b16 %v3143, %v3141
    %v3256 = vpack.c.b16 %v3144, %v3142
    %v3257 = vpack.c.b16 %v3147, %v3145
    %v3258 = vpack.c.b16 %v3148, %v3146
    %v3259 = vpack.c.b16 %v3151, %v3149
    %v3260 = vpack.c.b16 %v3152, %v3150
    %v3261 = vpack.c.b16 %v3155, %v3153
    %v3262 = vpack.c.b16 %v3156, %v3154
    %v3263 = vpack.c.b16 %v3159, %v3157
    %v3264 = vpack.c.b16 %v3160, %v3158
    %v3265 = vpack.c.b16 %v3163, %v3161
    %v3266 = vpack.c.b16 %v3164, %v3162
    %v3267 = vpack.c.b16 %v3167, %v3165
    %v3268 = vpack.c.b16 %v3168, %v3166
    %v3269 = vpack.c.b16 %v3171, %v3169
    %v3270 = vpack.c.b16 %v3172, %v3170
    %v3271 = vpack.c.b16 %v3175, %v3173
    %v3272 = vpack.c.b16 %v3176, %v3174
    %v3273 = vpack.c.b16 %v3179, %v3177
    %v3274 = vpack.c.b16 %v3180, %v3178
    %v3275 = vpack.c.b16 %v3183, %v3181
    %v3276 = vpack.c.b16 %v3184, %v3182
    %v3277 = vpack.c.b16 %v3187, %v3185
    %v3278 = vpack.c.b16 %v3188, %v3186
    %v3279 = vpack.c.b16 %v3191, %v3189
    %v3280 = vpack.c.b16 %v3192, %v3190
    %v3281 = vpack.c.b16 %v3195, %v3193
    %v3282 = vpack.c.b16 %v3196, %v3194
    %v3283 = vpack.c.b16 %v3199, %v3197
    %v3284 = vpack.c.b16 %v3200, %v3198
    %v3285 = vpack.c.b16 %v3203, %v3201
    %v3286 = vpack.c.b16 %v3204, %v3202
    %v3287 = vpack.c.b16 %v3207, %v3205
    %v3288 = vpack.c.b16 %v3208, %v3206
    %v3289 = vpack.c.b16 %v3211, %v3209
    %v3290 = vpack.c.b16 %v3212, %v3210
    %v3291 = vpack.c.b16 %v3215, %v3213
    %v3292 = vpack.c.b16 %v3216, %v3214
    %v3293 = vpack.c.b16 %v3219, %v3217
    %v3294 = vpack.c.b16 %v3220, %v3218
    %v3295 = vpack.c.b16 %v3223, %v3221
    %v3296 = vpack.c.b16 %v3224, %v3222
    %v3297 = vpack.c.b16 %v3227, %v3225
    %v3298 = vpack.c.b16 %v3228, %v3226
    %v3299 = vpack.c.b16 %v3231, %v3229
    %v3300 = vpack.c.b16 %v3232, %v3230
    %v3301 = vpack.c.b16 %v3235, %v3233
    %v3302 = vpack.c.b16 %v3236, %v3234
    %v3303 = vpack.c.b16 %v3239, %v3237
    %v3304 = vpack.c.b16 %v3240, %v3238
    %3369 = vmatprep.subr.bf16.mxu0 %v3242
    %3370 = vmatpush1.bf16.msra.mxu0 %v3241
    %3371 = vmatprep.subr.bf16.mxu0 %v3244
    %3372 = vmatpush1.bf16.msra.mxu0 %v3243
    %3373 = vmatprep.subr.bf16.mxu0 %v3246
    %3374 = vmatpush1.bf16.msra.mxu0 %v3245
    %3375 = vmatprep.subr.bf16.mxu0 %v3248
    %3376 = vmatpush1.bf16.msra.mxu0 %v3247
    %3377 = vmatprep.subr.bf16.mxu0 %v3250
    %3378 = vmatpush1.bf16.msra.mxu0 %v3249
    %3379 = vmatprep.subr.bf16.mxu0 %v3252
    %3380 = vmatpush1.bf16.msra.mxu0 %v3251
    %3381 = vmatprep.subr.bf16.mxu0 %v3254
    %3382 = vmatpush1.bf16.msra.mxu0 %v3253
    %3383 = vmatprep.subr.bf16.mxu0 %v3256
    %3384 = vmatpush1.bf16.msra.mxu0 %v3255
    %3385 = vmatprep.subr.bf16.mxu0 %v3258
    %3386 = vmatpush1.bf16.msra.mxu0 %v3257
    %3387 = vmatprep.subr.bf16.mxu0 %v3260
    %3388 = vmatpush1.bf16.msra.mxu0 %v3259
    %3389 = vmatprep.subr.bf16.mxu0 %v3262
    %3390 = vmatpush1.bf16.msra.mxu0 %v3261
    %3391 = vmatprep.subr.bf16.mxu0 %v3264
    %3392 = vmatpush1.bf16.msra.mxu0 %v3263
    %3393 = vmatprep.subr.bf16.mxu0 %v3266
    %3394 = vmatpush1.bf16.msra.mxu0 %v3265
    %3395 = vmatprep.subr.bf16.mxu0 %v3268
    %3396 = vmatpush1.bf16.msra.mxu0 %v3267
    %3397 = vmatprep.subr.bf16.mxu0 %v3270
    %3398 = vmatpush1.bf16.msra.mxu0 %v3269
    %3399 = vmatprep.subr.bf16.mxu0 %v3272
    %3400 = vmatpush1.bf16.msra.mxu0 %v3271
    %3401 = vmatprep.mubr.bf16.mxu0 %v2970
    %3402 = vmatmul.mubr.bf16.gmra.mrb[0].mxu0 %v2969
    %v3403 = vpop.f32.mrb[0].mxu0
    %v3404 = vadd.f32 %v3042, %v3403
    %v3405 = vpop.f32.mrb[0].mxu0
    %v3406 = vadd.f32 %v3046, %v3405
    %v3407 = vpop.f32.mrb[0].mxu0
    %v3408 = vpop.f32.mrb[0].mxu0
    %3409 = vdwg.mxu0
    %3410 = vmatprep.subr.bf16.mxu0 %v3274
    %3411 = vmatpush1.bf16.msra.mxu0 %v3273
    %3412 = vmatprep.subr.bf16.mxu0 %v3276
    %3413 = vmatpush1.bf16.msra.mxu0 %v3275
    %3414 = vmatprep.subr.bf16.mxu0 %v3278
    %3415 = vmatpush1.bf16.msra.mxu0 %v3277
    %3416 = vmatprep.subr.bf16.mxu0 %v3280
    %3417 = vmatpush1.bf16.msra.mxu0 %v3279
    %3418 = vmatprep.subr.bf16.mxu0 %v3282
    %3419 = vmatpush1.bf16.msra.mxu0 %v3281
    %3420 = vmatprep.subr.bf16.mxu0 %v3284
    %3421 = vmatpush1.bf16.msra.mxu0 %v3283
    %3422 = vmatprep.subr.bf16.mxu0 %v3286
    %3423 = vmatpush1.bf16.msra.mxu0 %v3285
    %3424 = vmatprep.subr.bf16.mxu0 %v3288
    %3425 = vmatpush1.bf16.msra.mxu0 %v3287
    %3426 = vmatprep.subr.bf16.mxu0 %v3290
    %3427 = vmatpush1.bf16.msra.mxu0 %v3289
    %3428 = vmatprep.subr.bf16.mxu0 %v3292
    %3429 = vmatpush1.bf16.msra.mxu0 %v3291
    %3430 = vmatprep.subr.bf16.mxu0 %v3294
    %3431 = vmatpush1.bf16.msra.mxu0 %v3293
    %3432 = vmatprep.subr.bf16.mxu0 %v3296
    %3433 = vmatpush1.bf16.msra.mxu0 %v3295
    %3434 = vmatprep.subr.bf16.mxu0 %v3298
    %3435 = vmatpush1.bf16.msra.mxu0 %v3297
    %3436 = vmatprep.subr.bf16.mxu0 %v3300
    %3437 = vmatpush1.bf16.msra.mxu0 %v3299
    %3438 = vmatprep.subr.bf16.mxu0 %v3302
    %3439 = vmatpush1.bf16.msra.mxu0 %v3301
    %3440 = vmatprep.subr.bf16.mxu0 %v3304
    %3441 = vmatpush1.bf16.msra.mxu0 %v3303
    %3442 = vmatprep.mubr.bf16.mxu0 %v2972
    %3443 = vmatmul.mubr.bf16.gmra.mrb[0].mxu0 %v2971
    %v3444 = vpop.f32.mrb[0].mxu0
    %v3445 = vadd.f32 %v3404, %v3444
    %v3446 = vpop.f32.mrb[0].mxu0
    %v3447 = vadd.f32 %v3406, %v3446
    %v3448 = vpop.f32.mrb[0].mxu0
    %v3449 = vpop.f32.mrb[0].mxu0
    %3450 = vdwg.mxu0
    %v3451 = vmax.f32 %v3445, 0.0
    %v3452 = vmax.f32 %v3447, 0.0
    %v3453 = vpack.c.bf16 %v3451, %v3451
    %v3454 = vpack.c.bf16 %v3452, %v3452
    %v3455 = vld [vmem:[%s7] sm:$0xf]
    %v3456 = vld [vmem:[%s7 + $0x4] sm:$0xf]
    %v3457 = vld [vmem:[%s7 + $0x8] sm:$0xf]
    %v3458 = vld [vmem:[%s7 + $0xc] sm:$0xf]
    %v3459 = vld [vmem:[%s7 + $0x10] sm:$0xf]
    %v3460 = vld [vmem:[%s7 + $0x14] sm:$0xf]
    %v3461 = vld [vmem:[%s7 + $0x18] sm:$0xf]
    %v3462 = vld [vmem:[%s7 + $0x1c] sm:$0xf]
    %v3463 = vld [vmem:[%s7 + $0x20] sm:$0xf]
    %v3464 = vld [vmem:[%s7 + $0x24] sm:$0xf]
    %v3465 = vld [vmem:[%s7 + $0x28] sm:$0xf]
    %v3466 = vld [vmem:[%s7 + $0x2c] sm:$0xf]
    %v3467 = vld [vmem:[%s7 + $0x30] sm:$0xf]
    %v3468 = vld [vmem:[%s7 + $0x34] sm:$0xf]
    %v3469 = vld [vmem:[%s7 + $0x38] sm:$0xf]
    %v3470 = vld [vmem:[%s7 + $0x3c] sm:$0xf]
    %v3471 = vld [vmem:[%s7 + $0x40] sm:$0xf]
    %v3472 = vld [vmem:[%s7 + $0x44] sm:$0xf]
    %v3473 = vld [vmem:[%s7 + $0x48] sm:$0xf]
    %v3474 = vld [vmem:[%s7 + $0x4c] sm:$0xf]
    %v3475 = vld [vmem:[%s7 + $0x50] sm:$0xf]
    %v3476 = vld [vmem:[%s7 + $0x54] sm:$0xf]
    %v3477 = vld [vmem:[%s7 + $0x58] sm:$0xf]
    %v3478 = vld [vmem:[%s7 + $0x5c] sm:$0xf]
    %v3479 = vld [vmem:[%s7 + $0x60] sm:$0xf]
    %v3480 = vld [vmem:[%s7 + $0x64] sm:$0xf]
    %v3481 = vld [vmem:[%s7 + $0x68] sm:$0xf]
    %v3482 = vld [vmem:[%s7 + $0x6c] sm:$0xf]
    %v3483 = vld [vmem:[%s7 + $0x70] sm:$0xf]
    %v3484 = vld [vmem:[%s7 + $0x74] sm:$0xf]
    %v3485 = vld [vmem:[%s7 + $0x78] sm:$0xf]
    %v3486 = vld [vmem:[%s7 + $0x7c] sm:$0xf]
    %v3487 = vld [vmem:[%s8] sm:$0x1]
    %v3489 = vlaneseq
    %v3490 = vshrl.u32 %v3489, 7
    %v3491 = vsub.s32 0, %v3490
    %v3492 = vrot.slane %v3487, %v3491
    %v3526 = vunpack.c.l.b16 %v3455
    %v3527 = vunpack.c.l.b16 %v3456
    %v3528 = vunpack.c.l.b16 %v3457
    %v3529 = vunpack.c.l.b16 %v3458
    %v3530 = vunpack.c.l.b16 %v3459
    %v3531 = vunpack.c.l.b16 %v3460
    %v3532 = vunpack.c.l.b16 %v3461
    %v3533 = vunpack.c.l.b16 %v3462
    %v3534 = vunpack.c.l.b16 %v3463
    %v3535 = vunpack.c.l.b16 %v3464
    %v3536 = vunpack.c.l.b16 %v3465
    %v3537 = vunpack.c.l.b16 %v3466
    %v3538 = vunpack.c.l.b16 %v3467
    %v3539 = vunpack.c.l.b16 %v3468
    %v3540 = vunpack.c.l.b16 %v3469
    %v3541 = vunpack.c.l.b16 %v3470
    %v3542 = vunpack.c.l.b16 %v3471
    %v3543 = vunpack.c.l.b16 %v3472
    %v3544 = vunpack.c.l.b16 %v3473
    %v3545 = vunpack.c.l.b16 %v3474
    %v3546 = vunpack.c.l.b16 %v3475
    %v3547 = vunpack.c.l.b16 %v3476
    %v3548 = vunpack.c.l.b16 %v3477
    %v3549 = vunpack.c.l.b16 %v3478
    %v3550 = vunpack.c.l.b16 %v3479
    %v3551 = vunpack.c.l.b16 %v3480
    %v3552 = vunpack.c.l.b16 %v3481
    %v3553 = vunpack.c.l.b16 %v3482
    %v3554 = vunpack.c.l.b16 %v3483
    %v3555 = vunpack.c.l.b16 %v3484
    %v3556 = vunpack.c.l.b16 %v3485
    %v3557 = vunpack.c.l.b16 %v3486
    %v3558 = vpack.c.b16 %v3527, %v3526
    %v3559 = vpack.c.b16 %v3529, %v3528
    %v3560 = vpack.c.b16 %v3531, %v3530
    %v3561 = vpack.c.b16 %v3533, %v3532
    %v3562 = vpack.c.b16 %v3535, %v3534
    %v3563 = vpack.c.b16 %v3537, %v3536
    %v3564 = vpack.c.b16 %v3539, %v3538
    %v3565 = vpack.c.b16 %v3541, %v3540
    %v3566 = vpack.c.b16 %v3543, %v3542
    %v3567 = vpack.c.b16 %v3545, %v3544
    %v3568 = vpack.c.b16 %v3547, %v3546
    %v3569 = vpack.c.b16 %v3549, %v3548
    %v3570 = vpack.c.b16 %v3551, %v3550
    %v3571 = vpack.c.b16 %v3553, %v3552
    %v3572 = vpack.c.b16 %v3555, %v3554
    %v3573 = vpack.c.b16 %v3557, %v3556
    %3590 = vmatprep.subr.bf16.mxu0 0
    %3591 = vmatpush1.bf16.msra.mxu0 %v3558
    %3592 = vmatprep.subr.bf16.mxu0 0
    %3593 = vmatpush1.bf16.msra.mxu0 %v3559
    %3594 = vmatprep.subr.bf16.mxu0 0
    %3595 = vmatpush1.bf16.msra.mxu0 %v3560
    %3596 = vmatprep.subr.bf16.mxu0 0
    %3597 = vmatpush1.bf16.msra.mxu0 %v3561
    %3598 = vmatprep.subr.bf16.mxu0 0
    %3599 = vmatpush1.bf16.msra.mxu0 %v3562
    %3600 = vmatprep.subr.bf16.mxu0 0
    %3601 = vmatpush1.bf16.msra.mxu0 %v3563
    %3602 = vmatprep.subr.bf16.mxu0 0
    %3603 = vmatpush1.bf16.msra.mxu0 %v3564
    %3604 = vmatprep.subr.bf16.mxu0 0
    %3605 = vmatpush1.bf16.msra.mxu0 %v3565
    %3606 = vmatprep.subr.bf16.mxu0 0
    %3607 = vmatpush1.bf16.msra.mxu0 %v3566
    %3608 = vmatprep.subr.bf16.mxu0 0
    %3609 = vmatpush1.bf16.msra.mxu0 %v3567
    %3610 = vmatprep.subr.bf16.mxu0 0
    %3611 = vmatpush1.bf16.msra.mxu0 %v3568
    %3612 = vmatprep.subr.bf16.mxu0 0
    %3613 = vmatpush1.bf16.msra.mxu0 %v3569
    %3614 = vmatprep.subr.bf16.mxu0 0
    %3615 = vmatpush1.bf16.msra.mxu0 %v3570
    %3616 = vmatprep.subr.bf16.mxu0 0
    %3617 = vmatpush1.bf16.msra.mxu0 %v3571
    %3618 = vmatprep.subr.bf16.mxu0 0
    %3619 = vmatpush1.bf16.msra.mxu0 %v3572
    %3620 = vmatprep.subr.bf16.mxu0 0
    %3621 = vmatpush1.bf16.msra.mxu0 %v3573
    %3622 = vmatprep.mubr.bf16.mxu0 %v3454
    %3623 = vmatmul.mubr.bf16.gmra.mrb[0].mxu0 %v3453
    %v3624 = vpop.f32.mrb[0].mxu0
    %v3625 = vadd.f32 %v3492, %v3624
    %v3626 = vpop.f32.mrb[0].mxu0
    %v3627 = vpop.f32.mrb[0].mxu0
    %v3628 = vpop.f32.mrb[0].mxu0
    %3629 = vdwg.mxu0
    %v3630 = vmax.f32 %v3625, 0.0
    %v3631 = vpack.c.bf16 %v3630, %v3630
    %v3632 = vld [vmem:[%s9] sm:$0xf]
    %v3633 = vld [vmem:[%s9 + $0x4] sm:$0xf]
    %v3634 = vld [vmem:[%s9 + $0x8] sm:$0xf]
    %v3635 = vld [vmem:[%s9 + $0xc] sm:$0xf]
    %v3636 = vld [vmem:[%s9 + $0x10] sm:$0xf]
    %v3637 = vld [vmem:[%s9 + $0x14] sm:$0xf]
    %v3638 = vld [vmem:[%s9 + $0x18] sm:$0xf]
    %v3639 = vld [vmem:[%s9 + $0x1c] sm:$0xf]
    %v3640 = vld [vmem:[%s9 + $0x20] sm:$0xf]
    %v3641 = vld [vmem:[%s9 + $0x24] sm:$0xf]
    %v3642 = vld [vmem:[%s9 + $0x28] sm:$0xf]
    %v3643 = vld [vmem:[%s9 + $0x2c] sm:$0xf]
    %v3644 = vld [vmem:[%s9 + $0x30] sm:$0xf]
    %v3645 = vld [vmem:[%s9 + $0x34] sm:$0xf]
    %v3646 = vld [vmem:[%s9 + $0x38] sm:$0xf]
    %v3647 = vld [vmem:[%s9 + $0x3c] sm:$0xf]
    %v3648 = vld [vmem:[%s10] sm:$0x1]
    %v3650 = vlaneseq
    %v3651 = vshrl.u32 %v3650, 7
    %v3652 = vsub.s32 0, %v3651
    %v3653 = vrot.slane %v3648, %v3652
    %v3671 = vunpack.c.l.b16 %v3632
    %v3672 = vunpack.c.l.b16 %v3633
    %v3673 = vunpack.c.l.b16 %v3634
    %v3674 = vunpack.c.l.b16 %v3635
    %v3675 = vunpack.c.l.b16 %v3636
    %v3676 = vunpack.c.l.b16 %v3637
    %v3677 = vunpack.c.l.b16 %v3638
    %v3678 = vunpack.c.l.b16 %v3639
    %v3679 = vunpack.c.l.b16 %v3640
    %v3680 = vunpack.c.l.b16 %v3641
    %v3681 = vunpack.c.l.b16 %v3642
    %v3682 = vunpack.c.l.b16 %v3643
    %v3683 = vunpack.c.l.b16 %v3644
    %v3684 = vunpack.c.l.b16 %v3645
    %v3685 = vunpack.c.l.b16 %v3646
    %v3686 = vunpack.c.l.b16 %v3647
    %v3687 = vpack.c.b16 %v3672, %v3671
    %v3688 = vpack.c.b16 %v3674, %v3673
    %v3689 = vpack.c.b16 %v3676, %v3675
    %v3690 = vpack.c.b16 %v3678, %v3677
    %v3691 = vpack.c.b16 %v3680, %v3679
    %v3692 = vpack.c.b16 %v3682, %v3681
    %v3693 = vpack.c.b16 %v3684, %v3683
    %v3694 = vpack.c.b16 %v3686, %v3685
    %3703 = vmatprep.subr.bf16.mxu0 0
    %3704 = vmatpush1.bf16.msra.mxu0 %v3687
    %3705 = vmatprep.subr.bf16.mxu0 0
    %3706 = vmatpush1.bf16.msra.mxu0 %v3688
    %3707 = vmatprep.subr.bf16.mxu0 0
    %3708 = vmatpush1.bf16.msra.mxu0 %v3689
    %3709 = vmatprep.subr.bf16.mxu0 0
    %3710 = vmatpush1.bf16.msra.mxu0 %v3690
    %3711 = vmatprep.subr.bf16.mxu0 0
    %3712 = vmatpush1.bf16.msra.mxu0 %v3691
    %3713 = vmatprep.subr.bf16.mxu0 0
    %3714 = vmatpush1.bf16.msra.mxu0 %v3692
    %3715 = vmatprep.subr.bf16.mxu0 0
    %3716 = vmatpush1.bf16.msra.mxu0 %v3693
    %3717 = vmatprep.subr.bf16.mxu0 0
    %3718 = vmatpush1.bf16.msra.mxu0 %v3694
    %3719 = vmatprep.subr.bf16.mxu0 0
    %3720 = vmatpush1.bf16.msra.mxu0 0
    %3721 = vmatprep.subr.bf16.mxu0 0
    %3722 = vmatpush1.bf16.msra.mxu0 0
    %3723 = vmatprep.subr.bf16.mxu0 0
    %3724 = vmatpush1.bf16.msra.mxu0 0
    %3725 = vmatprep.subr.bf16.mxu0 0
    %3726 = vmatpush1.bf16.msra.mxu0 0
    %3727 = vmatprep.subr.bf16.mxu0 0
    %3728 = vmatpush1.bf16.msra.mxu0 0
    %3729 = vmatprep.subr.bf16.mxu0 0
    %3730 = vmatpush1.bf16.msra.mxu0 0
    %3731 = vmatprep.subr.bf16.mxu0 0
    %3732 = vmatpush1.bf16.msra.mxu0 0
    %3733 = vmatprep.subr.bf16.mxu0 0
    %3734 = vmatpush1.bf16.msra.mxu0 0
    %3735 = vmatprep.mubr.bf16.mxu0 0
    %3736 = vmatmul.mubr.bf16.gmra.mrb[0].mxu0 %v3631
    %v3737 = vpop.f32.mrb[0].mxu0
    %v3738 = vadd.f32 %v3653, %v3737
    %v3739 = vpop.f32.mrb[0].mxu0
    %v3740 = vpop.f32.mrb[0].mxu0
    %v3741 = vpop.f32.mrb[0].mxu0
    %3742 = vdwg.mxu0
    %3743 = vst [vmem:[#allocation8] sm:$0xff] %v3738
    // Predicated region
    $region58: #{classifier_forward.1} parent=1 // pred_check
      _
    $region59: #{classifier_forward.1} parent=1 // pred_check_branch
      %3745 = sbr.rel (0) target = $region61
    $region60: #{classifier_forward.1} parent=1 // pred_region
      %s3747 = ssub.s32 128, 128
      %3748 = vsyncadd [#allocation4], %s3747
      %s3750 = sshll.u32 [#allocation8], 4
      %s3751 = int_to_ptr.vmem [resolvable:$true] %s3750
      %3753 = dma.vmem_to_hbm [thread:$0]  %s3751, 128, %s11, [#allocation4]
    $region61: #{classifier_forward.1} parent=1 // pred_fallthru
      _
    // Predicated region
    $region62: #{classifier_forward.1} parent=1 // pred_check
      _
    $region63: #{classifier_forward.1} parent=1 // pred_check_branch
      %3755 = sbr.rel (0) target = $region65
    $region64: #{classifier_forward.1} parent=1 // pred_region
      %3756 = dma.done [#allocation4], 128
    $region65: #{classifier_forward.1} parent=1 // pred_fallthru
      _
    %3757 = vsyncpa [#allocation3], 1
    %3758 = vsyncpa [#allocation6], 1
    %3759 = vsyncpa [#allocation4], 1

</llo_original>
